<compile_context>
chip_gen: v7x
topology: tpu7x:2x2x1
jax: 0.10.0
libtpu: 0.0.40
codegen_flags: <defaults>
</compile_context>

<pallas_src>
import jax
import jax.numpy as jnp
from jax import lax
from jax.experimental import pallas as pl
from jax.experimental.pallas import tpu as pltpu

# ---- hyper-params (small shapes consistent with CBHG(K, dim_in, dim_hidden, dim_proj)) ----
K = 4
DIM_INPUT = 32
DIM_HIDDEN = 32
DIM_PROJ = (32, 32)          # dim_proj_hiddens ; DIM_PROJ[1] == DIM_INPUT for the residual
BATCH = 2
SEQ = 16
BN_EPS = 1e-3                # nn.BatchNorm1d(..., eps=0.001) in the module
N_HIGHWAY = 4

BANK_OFFSETS = tuple(range(-(K // 2), K - K // 2))   # union of tap offsets of conv k=1..K
PROJ_OFFSETS = (-1, 0, 1)                            # k=3, pad=1

_VMEM = pl.BlockSpec(memory_space=pltpu.MemorySpace.VMEM)


# ============================ single fused kernel ============================

def _build_kernel(B, T, Din, H, P0, P1):
    """Kernel closed over static shapes (no hard-coded SEQ/BATCH mismatch possible)."""
    BT = B * T

    def kernel(x_ref, wbank_ref, w1_ref, w2_ref, wfc_ref, whw_ref, wih_ref,
               whh_ref, vecs_ref, o_ref):
        # ---- unpack the packed small-vector table (static slices of one load) ----
        vecs = vecs_ref[...]
        bbank, gbank, betabank = vecs[0:1, :K * H], vecs[1:2, :K * H], vecs[2:3, :K * H]
        pv = vecs[3:4, :]
        b1, g1, be1 = pv[:, 0:P0], pv[:, P0:2 * P0], pv[:, 2 * P0:3 * P0]
        b2 = pv[:, 3 * P0:3 * P0 + P1]
        g2 = pv[:, 3 * P0 + P1:3 * P0 + 2 * P1]
        be2 = pv[:, 3 * P0 + 2 * P1:3 * P0 + 3 * P1]
        bfc = vecs[4:5, :H]
        bih = vecs[9:10, :6 * H]
        bhh = jnp.concatenate(
            [jnp.broadcast_to(vecs[10:11, :3 * H], (B, 3 * H)),
             jnp.broadcast_to(vecs[11:12, :3 * H], (B, 3 * H))], axis=0)      # (2B, 3H)

        # ---- hoisted per-row time index + boundary masks (built once, reused) ----
        t_col = lax.broadcasted_iota(jnp.int32, (BT, 1), 0) % T
        valid = {d: (t_col < T - d) if d > 0 else (t_col >= -d)
                 for d in set(BANK_OFFSETS + PROJ_OFFSETS) if d != 0}

        def shift(h, d):
            """out[b*T+t] = h[b*T+t+d] if 0<=t+d<T else 0 (circular roll + mask)."""
            if d == 0:
                return h
            rolled = jnp.concatenate([h[d:, :], h[:d, :]], axis=0)
            return jnp.where(valid[d], rolled, 0.0)

        def bn(v, gamma, beta):
            """BatchNorm1d train-mode forward: batch stats, biased variance."""
            mean = jnp.mean(v, axis=0, keepdims=True)
            var = jnp.mean((v - mean) ** 2, axis=0, keepdims=True)
            return (v - mean) * lax.rsqrt(var + BN_EPS) * gamma + beta

        x = x_ref[...]                                                  # (B*T, Din)

        # ---- conv1d bank: K convs fused into ONE matmul over 4-tap patches + ReLU + BN ----
        patches = jnp.concatenate([shift(x, d) for d in BANK_OFFSETS], axis=1)   # (BT, 4*Din)
        y = jnp.dot(patches, wbank_ref[...], preferred_element_type=jnp.float32) + bbank
        y = bn(jnp.maximum(y, 0.0), gbank, betabank)                    # (BT, K*H)

        # ---- MaxPool1d(2,1,1)[:T]: out[t] = max(y[t-1], y[t]), out[0] = y[0] ----
        prev = jnp.concatenate([y[-1:, :], y[:-1, :]], axis=0)
        y = jnp.maximum(y, jnp.where(valid[-1], prev, y))

        # ---- conv1d projection 1 (k=3, pad=1) + ReLU + BN ----
        p = jnp.concatenate([shift(y, d) for d in PROJ_OFFSETS], axis=1)
        y = jnp.dot(p, w1_ref[...], preferred_element_type=jnp.float32) + b1
        y = bn(jnp.maximum(y, 0.0), g1, be1)                            # (BT, P0)

        # ---- conv1d projection 2 (k=3, pad=1) + ReLU + BN ----
        p = jnp.concatenate([shift(y, d) for d in PROJ_OFFSETS], axis=1)
        y = jnp.dot(p, w2_ref[...], preferred_element_type=jnp.float32) + b2
        y = bn(jnp.maximum(y, 0.0), g2, be2)                            # (BT, P1)

        # ---- residual + fc projection ----
        y = y + x
        y = jnp.dot(y, wfc_ref[...], preferred_element_type=jnp.float32) + bfc   # (BT, H)

        # ---- 4 highway layers; H|T linears packed into one (H, 2H) matmul each ----
        for l in range(N_HIGHWAY):
            ht = jnp.dot(y, whw_ref[l], preferred_element_type=jnp.float32) \
                 + vecs[5 + l:6 + l, :2 * H]
            hpart = jnp.maximum(ht[:, :H], 0.0)
            tpart = jax.nn.sigmoid(ht[:, H:])
            y = hpart * tpart + y * (1.0 - tpart)

        # ---- GRU input projections, both directions fused into one (H, 6H) matmul ----
        gi = jnp.dot(y, wih_ref[...], preferred_element_type=jnp.float32) + bih   # (BT, 6H)

        # ---- bidirectional GRU recurrence: wide block-sparse state kept in vregs ----
        rsel = (lax.broadcasted_iota(jnp.int32, (2 * B, 1), 0) < B).astype(jnp.float32)
        sel_f, sel_b = rsel, 1.0 - rsel
        whh = whh_ref[...]                                              # (2H, 3H)

        hw = None
        hn_list = []
        for s in range(T):                                              # fully unrolled, static idx
            # fwd gates at time s ; bwd gates at original time T-1-s (time reversal is index math)
            gi_s = jnp.concatenate(
                [gi[b * T + s:b * T + s + 1, :3 * H] for b in range(B)]
                + [gi[b * T + (T - 1 - s):b * T + (T - 1 - s) + 1, 3 * H:] for b in range(B)],
                axis=0)                                                 # (2B, 3H)
            if s == 0:
                gh = bhh
                h_prev = jnp.zeros((2 * B, H), jnp.float32)
            else:
                gh = jnp.dot(hw, whh, preferred_element_type=jnp.float32) + bhh  # one matmul/step
                h_prev = hw[:, :H] + hw[:, H:]                          # dense (2B, H)
            rz = jax.nn.sigmoid(gi_s[:, :2 * H] + gh[:, :2 * H])        # r|z in one sigmoid
            n = jnp.tanh(gi_s[:, 2 * H:] + rz[:, :H] * gh[:, 2 * H:])
            z = rz[:, H:]
            hn = (1.0 - z) * n + z * h_prev                             # (2B, H)
            hw = jnp.concatenate([hn * sel_f, hn * sel_b], axis=1)      # block-diag wide state
            hn_list.append(hn)

        # ---- assemble (B*T, 2H) output in vregs, store once (no per-step masked stores) ----
        blocks = []
        for b in range(B):
            f_b = jnp.concatenate([hn_list[t][b:b + 1, :] for t in range(T)], axis=0)
            r_b = jnp.concatenate([hn_list[T - 1 - t][B + b:B + b + 1, :] for t in range(T)],
                                  axis=0)
            blocks.append(jnp.concatenate([f_b, r_b], axis=1))          # (T, 2H)
        o_ref[...] = jnp.concatenate(blocks, axis=0)                    # (B*T, 2H)

    return kernel


# ============================ one-time parameter packing ============================

def pack_params(params):
    """Pack module params into MXU-friendly matrices + one small-vector table.

    Runs ONCE at setup (kept out of the per-call forward path)."""
    H, Din = DIM_HIDDEN, DIM_INPUT
    P0, P1 = DIM_PROJ

    # conv bank -> one (4*Din, K*H) weight, smaller-k taps zero padded
    wbank = jnp.zeros((len(BANK_OFFSETS) * Din, K * H), jnp.float32)
    for k in range(1, K + 1):
        wk = params["bank"][k - 1]["w"]                         # (H, Din, k)
        for j in range(k):
            i = BANK_OFFSETS.index(j - k // 2)
            wbank = wbank.at[i * Din:(i + 1) * Din, (k - 1) * H:k * H].set(wk[:, :, j].T)

    def pack_proj_w(p):
        w = p["w"]                                              # (cout, cin, 3), taps d = -1,0,1
        return jnp.concatenate([w[:, :, j].T for j in range(3)], axis=0)

    w1 = pack_proj_w(params["proj1"])                           # (3*K*H, P0)
    w2 = pack_proj_w(params["proj2"])                           # (3*P0, P1)
    wfc = params["fc"]["w"].T                                   # (P1, H)
    whw = jnp.stack([jnp.concatenate([hp["wh"].T, hp["wt"].T], axis=1)
                     for hp in params["highway"]], axis=0)      # (4, H, 2H)

    gfwd, gbwd = params["gru"]
    wih = jnp.concatenate([gfwd["w_ih"].T, gbwd["w_ih"].T], axis=1)      # (H, 6H)
    whh = jnp.concatenate([gfwd["w_hh"].T, gbwd["w_hh"].T], axis=0)      # (2H, 3H)

    # ---- pack every small bias/gamma/beta vector into one (12, VW) table ----
    VW = max(K * H, 6 * H, 3 * (P0 + P1), 3 * H, 2 * H, H)

    def row(v):
        v = jnp.asarray(v, jnp.float32).reshape(-1)
        return jnp.pad(v, (0, VW - v.shape[0]))

    rows = [
        row(jnp.concatenate([params["bank"][k]["b"] for k in range(K)])),      # 0 bbank
        row(jnp.concatenate([params["bank"][k]["gamma"] for k in range(K)])),  # 1 gbank
        row(jnp.concatenate([params["bank"][k]["beta"] for k in range(K)])),   # 2 betabank
        row(jnp.concatenate([params["proj1"]["b"], params["proj1"]["gamma"],
                             params["proj1"]["beta"], params["proj2"]["b"],
                             params["proj2"]["gamma"], params["proj2"]["beta"]])),  # 3
        row(params["fc"]["b"]),                                                # 4 bfc
    ]
    for hp in params["highway"]:
        rows.append(row(jnp.concatenate([hp["bh"], hp["bt"]])))                # 5..8 bhw
    rows.append(row(jnp.concatenate([gfwd["b_ih"], gbwd["b_ih"]])))            # 9 bih
    rows.append(row(gfwd["b_hh"]))                                             # 10 bhh fwd
    rows.append(row(gbwd["b_hh"]))                                             # 11 bhh bwd
    vecs = jnp.stack(rows, axis=0)                                             # (12, VW)

    return dict(wbank=wbank, w1=w1, w2=w2, wfc=wfc, whw=whw, wih=wih, whh=whh, vecs=vecs)


# ============================ forward: ONE pallas_call ============================

def cbhg_forward(packed, x):
    B, T, Din = x.shape
    H = DIM_HIDDEN
    P0, P1 = DIM_PROJ
    assert P1 == Din, "residual requires dim_proj_hiddens[1] == dim_input"

    kernel = _build_kernel(B, T, Din, H, P0, P1)
    out = pl.pallas_call(
        kernel,
        out_shape=jax.ShapeDtypeStruct((B * T, 2 * H), jnp.float32),
        in_specs=[_VMEM] * 9,
        out_specs=_VMEM,
    )(x.reshape(B * T, Din), packed["wbank"], packed["w1"], packed["w2"],
      packed["wfc"], packed["whw"], packed["wih"], packed["whh"], packed["vecs"])
    return out.reshape(B, T, 2 * H)        # free metadata reshape


# ============================ deterministic params ============================

def init_params(key):
    keys = iter(jax.random.split(key, 64))

    def nrm(shape, scale=0.1):
        return scale * jax.random.normal(next(keys), shape, dtype=jnp.float32)

    def conv_block(cout, cin, k):
        return dict(w=nrm((cout, cin, k)), b=nrm((cout,)),
                    gamma=jnp.ones((cout,), jnp.float32) + nrm((cout,), 0.05),
                    beta=nrm((cout,), 0.05))

    P0, P1 = DIM_PROJ
    params = {
        "bank": [conv_block(DIM_HIDDEN, DIM_INPUT, k) for k in range(1, K + 1)],
        "proj1": conv_block(P0, K * DIM_HIDDEN, 3),
        "proj2": conv_block(P1, P0, 3),
        "fc": dict(w=nrm((DIM_HIDDEN, P1)), b=nrm((DIM_HIDDEN,))),
        "highway": [dict(wh=nrm((DIM_HIDDEN, DIM_HIDDEN)), bh=nrm((DIM_HIDDEN,)),
                         wt=nrm((DIM_HIDDEN, DIM_HIDDEN)), bt=nrm((DIM_HIDDEN,)))
                    for _ in range(N_HIGHWAY)],
        "gru": [dict(w_ih=nrm((3 * DIM_HIDDEN, DIM_HIDDEN)),
                     w_hh=nrm((3 * DIM_HIDDEN, DIM_HIDDEN)),
                     b_ih=nrm((3 * DIM_HIDDEN,)),
                     b_hh=nrm((3 * DIM_HIDDEN,)))
                for _ in range(2)],
    }
    return params


if __name__ == "__main__":
    root = jax.random.PRNGKey(0)
    k_par, k_in = jax.random.split(root)
    params = init_params(k_par)
    packed = pack_params(params)                     # one-time packing, off the call path
    x = jax.random.normal(k_in, (BATCH, SEQ, DIM_INPUT), dtype=jnp.float32)

    fwd = jax.jit(cbhg_forward)
    out = jax.block_until_ready(fwd(packed, x))
    assert out.shape == (BATCH, SEQ, 2 * DIM_HIDDEN)
    assert bool(jnp.all(jnp.isfinite(out)))
    print("KERNEL_OK")
</pallas_src>

<mosaic_0001>
module attributes {stable_mosaic.version = 11 : i64} {
  func.func @kernel(%arg0: memref<32x32xf32, #tpu.memory_space<vmem>>, %arg1: memref<128x128xf32, #tpu.memory_space<vmem>>, %arg2: memref<384x32xf32, #tpu.memory_space<vmem>>, %arg3: memref<96x32xf32, #tpu.memory_space<vmem>>, %arg4: memref<32x32xf32, #tpu.memory_space<vmem>>, %arg5: memref<4x32x64xf32, #tpu.memory_space<vmem>>, %arg6: memref<32x192xf32, #tpu.memory_space<vmem>>, %arg7: memref<64x96xf32, #tpu.memory_space<vmem>>, %arg8: memref<12x192xf32, #tpu.memory_space<vmem>>, %arg9: memref<32x64xf32, #tpu.memory_space<vmem>>) attributes {dimension_semantics = [], scalar_prefetch = 0 : i64, scratch_operands = 0 : i64, tpu.core_type = #tpu.core_type<tc>} {
    %c0 = arith.constant 0 : index
    %c0_0 = arith.constant 0 : index
    %0 = vector.load %arg8[%c0, %c0_0] : memref<12x192xf32, #tpu.memory_space<vmem>>, vector<12x192xf32>
    %1 = vector.extract_strided_slice %0 {offsets = [0, 0], sizes = [1, 128], strides = [1, 1]} : vector<12x192xf32> to vector<1x128xf32>
    %2 = vector.extract_strided_slice %0 {offsets = [1, 0], sizes = [1, 128], strides = [1, 1]} : vector<12x192xf32> to vector<1x128xf32>
    %3 = vector.extract_strided_slice %0 {offsets = [2, 0], sizes = [1, 128], strides = [1, 1]} : vector<12x192xf32> to vector<1x128xf32>
    %4 = vector.extract_strided_slice %0 {offsets = [3, 0], sizes = [1, 192], strides = [1, 1]} : vector<12x192xf32> to vector<1x192xf32>
    %5 = vector.extract_strided_slice %4 {offsets = [0, 0], sizes = [1, 32], strides = [1, 1]} : vector<1x192xf32> to vector<1x32xf32>
    %6 = vector.extract_strided_slice %4 {offsets = [0, 32], sizes = [1, 32], strides = [1, 1]} : vector<1x192xf32> to vector<1x32xf32>
    %7 = vector.extract_strided_slice %4 {offsets = [0, 64], sizes = [1, 32], strides = [1, 1]} : vector<1x192xf32> to vector<1x32xf32>
    %8 = vector.extract_strided_slice %4 {offsets = [0, 96], sizes = [1, 32], strides = [1, 1]} : vector<1x192xf32> to vector<1x32xf32>
    %9 = vector.extract_strided_slice %4 {offsets = [0, 128], sizes = [1, 32], strides = [1, 1]} : vector<1x192xf32> to vector<1x32xf32>
    %10 = vector.extract_strided_slice %4 {offsets = [0, 160], sizes = [1, 32], strides = [1, 1]} : vector<1x192xf32> to vector<1x32xf32>
    %11 = vector.extract_strided_slice %0 {offsets = [4, 0], sizes = [1, 32], strides = [1, 1]} : vector<12x192xf32> to vector<1x32xf32>
    %12 = vector.extract_strided_slice %0 {offsets = [9, 0], sizes = [1, 192], strides = [1, 1]} : vector<12x192xf32> to vector<1x192xf32>
    %13 = vector.extract_strided_slice %0 {offsets = [10, 0], sizes = [1, 96], strides = [1, 1]} : vector<12x192xf32> to vector<1x96xf32>
    %14 = vector.shape_cast %13 : vector<1x96xf32> to vector<1x96xf32>
    %15 = vector.broadcast %14 : vector<1x96xf32> to vector<2x96xf32>
    %16 = vector.extract_strided_slice %0 {offsets = [11, 0], sizes = [1, 96], strides = [1, 1]} : vector<12x192xf32> to vector<1x96xf32>
    %17 = vector.shape_cast %16 : vector<1x96xf32> to vector<1x96xf32>
    %18 = vector.broadcast %17 : vector<1x96xf32> to vector<2x96xf32>
    %19 = tpu.concatenate %15, %18 in 0 : vector<2x96xf32>, vector<2x96xf32> -> vector<4x96xf32>
    %20 = tpu.iota {dimensions = array<i32: 0>} : vector<32x1xi32>
    %c16_i32 = arith.constant 16 : i32
    %c0_i32 = arith.constant 0 : i32
    %21 = arith.cmpi eq, %c16_i32, %c0_i32 : i32
    %c1_i32 = arith.constant 1 : i32
    %22 = arith.select %21, %c1_i32, %c16_i32 : i32
    %23 = vector.broadcast %22 : i32 to vector<32x1xi32>
    %24 = arith.remsi %20, %23 : vector<32x1xi32>
    %c0_i32_1 = arith.constant 0 : i32
    %25 = vector.broadcast %c0_i32_1 : i32 to vector<32x1xi32>
    %26 = arith.cmpi ne, %24, %25 : vector<32x1xi32>
    %c0_i32_2 = arith.constant 0 : i32
    %27 = vector.broadcast %c0_i32_2 : i32 to vector<32x1xi32>
    %28 = arith.cmpi slt, %24, %27 : vector<32x1xi32>
    %c0_i32_3 = arith.constant 0 : i32
    %29 = arith.cmpi slt, %22, %c0_i32_3 : i32
    %30 = vector.broadcast %29 : i1 to vector<32x1xi1>
    %31 = vector.broadcast %30 : vector<32x1xi1> to vector<32x1xi1>
    %32 = arith.xori %28, %31 : vector<32x1xi1>
    %33 = arith.andi %32, %26 : vector<32x1xi1>
    %34 = vector.broadcast %22 : i32 to vector<32x1xi32>
    %35 = arith.addi %24, %34 : vector<32x1xi32>
    %36 = arith.select %33, %35, %24 : vector<32x1xi1>, vector<32x1xi32>
    %c15_i32 = arith.constant 15 : i32
    %37 = vector.broadcast %c15_i32 : i32 to vector<32x1xi32>
    %38 = arith.cmpi slt, %36, %37 : vector<32x1xi32>
    %c2_i32 = arith.constant 2 : i32
    %39 = vector.broadcast %c2_i32 : i32 to vector<32x1xi32>
    %40 = arith.cmpi sge, %36, %39 : vector<32x1xi32>
    %c1_i32_4 = arith.constant 1 : i32
    %41 = vector.broadcast %c1_i32_4 : i32 to vector<32x1xi32>
    %42 = arith.cmpi sge, %36, %41 : vector<32x1xi32>
    %c0_5 = arith.constant 0 : index
    %c0_6 = arith.constant 0 : index
    %43 = vector.load %arg0[%c0_5, %c0_6] : memref<32x32xf32, #tpu.memory_space<vmem>>, vector<32x32xf32>
    %44 = vector.extract_strided_slice %43 {offsets = [30, 0], sizes = [2, 32], strides = [1, 1]} : vector<32x32xf32> to vector<2x32xf32>
    %45 = vector.extract_strided_slice %43 {offsets = [0, 0], sizes = [30, 32], strides = [1, 1]} : vector<32x32xf32> to vector<30x32xf32>
    %46 = tpu.concatenate %44, %45 in 0 : vector<2x32xf32>, vector<30x32xf32> -> vector<32x32xf32>
    %cst = arith.constant 0.000000e+00 : f32
    %47 = vector.shape_cast %40 : vector<32x1xi1> to vector<32x1xi1>
    %48 = vector.broadcast %47 : vector<32x1xi1> to vector<32x32xi1>
    %49 = vector.broadcast %cst : f32 to vector<32x32xf32>
    %50 = arith.select %48, %46, %49 : vector<32x32xi1>, vector<32x32xf32>
    %51 = vector.extract_strided_slice %43 {offsets = [31, 0], sizes = [1, 32], strides = [1, 1]} : vector<32x32xf32> to vector<1x32xf32>
    %52 = vector.extract_strided_slice %43 {offsets = [0, 0], sizes = [31, 32], strides = [1, 1]} : vector<32x32xf32> to vector<31x32xf32>
    %53 = tpu.concatenate %51, %52 in 0 : vector<1x32xf32>, vector<31x32xf32> -> vector<32x32xf32>
    %cst_7 = arith.constant 0.000000e+00 : f32
    %54 = vector.shape_cast %42 : vector<32x1xi1> to vector<32x1xi1>
    %55 = vector.broadcast %54 : vector<32x1xi1> to vector<32x32xi1>
    %56 = vector.broadcast %cst_7 : f32 to vector<32x32xf32>
    %57 = arith.select %55, %53, %56 : vector<32x32xi1>, vector<32x32xf32>
    %58 = vector.extract_strided_slice %43 {offsets = [1, 0], sizes = [31, 32], strides = [1, 1]} : vector<32x32xf32> to vector<31x32xf32>
    %59 = vector.extract_strided_slice %43 {offsets = [0, 0], sizes = [1, 32], strides = [1, 1]} : vector<32x32xf32> to vector<1x32xf32>
    %60 = tpu.concatenate %58, %59 in 0 : vector<31x32xf32>, vector<1x32xf32> -> vector<32x32xf32>
    %cst_8 = arith.constant 0.000000e+00 : f32
    %61 = vector.shape_cast %38 : vector<32x1xi1> to vector<32x1xi1>
    %62 = vector.broadcast %61 : vector<32x1xi1> to vector<32x32xi1>
    %63 = vector.broadcast %cst_8 : f32 to vector<32x32xf32>
    %64 = arith.select %62, %60, %63 : vector<32x32xi1>, vector<32x32xf32>
    %65 = tpu.concatenate %50, %57, %43, %64 in 1 : vector<32x32xf32>, vector<32x32xf32>, vector<32x32xf32>, vector<32x32xf32> -> vector<32x128xf32>
    %c0_9 = arith.constant 0 : index
    %c0_10 = arith.constant 0 : index
    %66 = vector.load %arg1[%c0_9, %c0_10] : memref<128x128xf32, #tpu.memory_space<vmem>>, vector<128x128xf32>
    %cst_11 = arith.constant dense<0.000000e+00> : vector<32x128xf32>
    %67 = tpu.matmul %65, %66, %cst_11 {dimension_numbers = #tpu.dot_dimension_numbers<[1], [0], [0], [1], [0, 0, 1, 1], [], []>} : vector<32x128xf32>, vector<128x128xf32>, vector<32x128xf32> -> vector<32x128xf32>
    %68 = vector.broadcast %1 : vector<1x128xf32> to vector<32x128xf32>
    %69 = arith.addf %67, %68 : vector<32x128xf32>
    %cst_12 = arith.constant 0.000000e+00 : f32
    %70 = vector.broadcast %cst_12 : f32 to vector<32x128xf32>
    %71 = arith.maximumf %69, %70 : vector<32x128xf32>
    %cst_13 = arith.constant dense<0.000000e+00> : vector<128xf32>
    %72 = vector.multi_reduction <add>, %71, %cst_13 [0] : vector<32x128xf32> to vector<128xf32>
    %73 = vector.shape_cast %72 : vector<128xf32> to vector<1x128xf32>
    %cst_14 = arith.constant 3.200000e+01 : f32
    %74 = vector.broadcast %cst_14 : f32 to vector<1x128xf32>
    %75 = arith.divf %73, %74 : vector<1x128xf32>
    %76 = vector.broadcast %75 : vector<1x128xf32> to vector<32x128xf32>
    %77 = arith.subf %71, %76 : vector<32x128xf32>
    %78 = arith.mulf %77, %77 : vector<32x128xf32>
    %cst_15 = arith.constant dense<0.000000e+00> : vector<128xf32>
    %79 = vector.multi_reduction <add>, %78, %cst_15 [0] : vector<32x128xf32> to vector<128xf32>
    %80 = vector.shape_cast %79 : vector<128xf32> to vector<1x128xf32>
    %cst_16 = arith.constant 3.200000e+01 : f32
    %81 = vector.broadcast %cst_16 : f32 to vector<1x128xf32>
    %82 = arith.divf %80, %81 : vector<1x128xf32>
    %83 = vector.broadcast %75 : vector<1x128xf32> to vector<32x128xf32>
    %84 = arith.subf %71, %83 : vector<32x128xf32>
    %cst_17 = arith.constant 1.000000e-03 : f32
    %85 = vector.broadcast %cst_17 : f32 to vector<1x128xf32>
    %86 = arith.addf %82, %85 : vector<1x128xf32>
    %87 = math.rsqrt %86 : vector<1x128xf32>
    %88 = vector.broadcast %87 : vector<1x128xf32> to vector<32x128xf32>
    %89 = arith.mulf %84, %88 : vector<32x128xf32>
    %90 = vector.broadcast %2 : vector<1x128xf32> to vector<32x128xf32>
    %91 = arith.mulf %89, %90 : vector<32x128xf32>
    %92 = vector.broadcast %3 : vector<1x128xf32> to vector<32x128xf32>
    %93 = arith.addf %91, %92 : vector<32x128xf32>
    %94 = vector.extract_strided_slice %93 {offsets = [31, 0], sizes = [1, 128], strides = [1, 1]} : vector<32x128xf32> to vector<1x128xf32>
    %95 = vector.extract_strided_slice %93 {offsets = [0, 0], sizes = [31, 128], strides = [1, 1]} : vector<32x128xf32> to vector<31x128xf32>
    %96 = tpu.concatenate %94, %95 in 0 : vector<1x128xf32>, vector<31x128xf32> -> vector<32x128xf32>
    %97 = vector.shape_cast %42 : vector<32x1xi1> to vector<32x1xi1>
    %98 = vector.broadcast %97 : vector<32x1xi1> to vector<32x128xi1>
    %99 = arith.select %98, %96, %93 : vector<32x128xi1>, vector<32x128xf32>
    %100 = arith.maximumf %93, %99 : vector<32x128xf32>
    %101 = vector.extract_strided_slice %100 {offsets = [31, 0], sizes = [1, 128], strides = [1, 1]} : vector<32x128xf32> to vector<1x128xf32>
    %102 = vector.extract_strided_slice %100 {offsets = [0, 0], sizes = [31, 128], strides = [1, 1]} : vector<32x128xf32> to vector<31x128xf32>
    %103 = tpu.concatenate %101, %102 in 0 : vector<1x128xf32>, vector<31x128xf32> -> vector<32x128xf32>
    %cst_18 = arith.constant 0.000000e+00 : f32
    %104 = vector.shape_cast %42 : vector<32x1xi1> to vector<32x1xi1>
    %105 = vector.broadcast %104 : vector<32x1xi1> to vector<32x128xi1>
    %106 = vector.broadcast %cst_18 : f32 to vector<32x128xf32>
    %107 = arith.select %105, %103, %106 : vector<32x128xi1>, vector<32x128xf32>
    %108 = vector.extract_strided_slice %100 {offsets = [1, 0], sizes = [31, 128], strides = [1, 1]} : vector<32x128xf32> to vector<31x128xf32>
    %109 = vector.extract_strided_slice %100 {offsets = [0, 0], sizes = [1, 128], strides = [1, 1]} : vector<32x128xf32> to vector<1x128xf32>
    %110 = tpu.concatenate %108, %109 in 0 : vector<31x128xf32>, vector<1x128xf32> -> vector<32x128xf32>
    %cst_19 = arith.constant 0.000000e+00 : f32
    %111 = vector.shape_cast %38 : vector<32x1xi1> to vector<32x1xi1>
    %112 = vector.broadcast %111 : vector<32x1xi1> to vector<32x128xi1>
    %113 = vector.broadcast %cst_19 : f32 to vector<32x128xf32>
    %114 = arith.select %112, %110, %113 : vector<32x128xi1>, vector<32x128xf32>
    %115 = tpu.concatenate %107, %100, %114 in 1 : vector<32x128xf32>, vector<32x128xf32>, vector<32x128xf32> -> vector<32x384xf32>
    %c0_20 = arith.constant 0 : index
    %c0_21 = arith.constant 0 : index
    %116 = vector.load %arg2[%c0_20, %c0_21] : memref<384x32xf32, #tpu.memory_space<vmem>>, vector<384x32xf32>
    %cst_22 = arith.constant dense<0.000000e+00> : vector<32x32xf32>
    %117 = tpu.matmul %115, %116, %cst_22 {dimension_numbers = #tpu.dot_dimension_numbers<[1], [0], [0], [1], [0, 0, 1, 1], [], []>} : vector<32x384xf32>, vector<384x32xf32>, vector<32x32xf32> -> vector<32x32xf32>
    %118 = vector.broadcast %5 : vector<1x32xf32> to vector<32x32xf32>
    %119 = arith.addf %117, %118 : vector<32x32xf32>
    %cst_23 = arith.constant 0.000000e+00 : f32
    %120 = vector.broadcast %cst_23 : f32 to vector<32x32xf32>
    %121 = arith.maximumf %119, %120 : vector<32x32xf32>
    %cst_24 = arith.constant dense<0.000000e+00> : vector<32xf32>
    %122 = vector.multi_reduction <add>, %121, %cst_24 [0] : vector<32x32xf32> to vector<32xf32>
    %123 = vector.shape_cast %122 : vector<32xf32> to vector<1x32xf32>
    %cst_25 = arith.constant 3.200000e+01 : f32
    %124 = vector.broadcast %cst_25 : f32 to vector<1x32xf32>
    %125 = arith.divf %123, %124 : vector<1x32xf32>
    %126 = vector.broadcast %125 : vector<1x32xf32> to vector<32x32xf32>
    %127 = arith.subf %121, %126 : vector<32x32xf32>
    %128 = arith.mulf %127, %127 : vector<32x32xf32>
    %cst_26 = arith.constant dense<0.000000e+00> : vector<32xf32>
    %129 = vector.multi_reduction <add>, %128, %cst_26 [0] : vector<32x32xf32> to vector<32xf32>
    %130 = vector.shape_cast %129 : vector<32xf32> to vector<1x32xf32>
    %cst_27 = arith.constant 3.200000e+01 : f32
    %131 = vector.broadcast %cst_27 : f32 to vector<1x32xf32>
    %132 = arith.divf %130, %131 : vector<1x32xf32>
    %133 = vector.broadcast %125 : vector<1x32xf32> to vector<32x32xf32>
    %134 = arith.subf %121, %133 : vector<32x32xf32>
    %cst_28 = arith.constant 1.000000e-03 : f32
    %135 = vector.broadcast %cst_28 : f32 to vector<1x32xf32>
    %136 = arith.addf %132, %135 : vector<1x32xf32>
    %137 = math.rsqrt %136 : vector<1x32xf32>
    %138 = vector.broadcast %137 : vector<1x32xf32> to vector<32x32xf32>
    %139 = arith.mulf %134, %138 : vector<32x32xf32>
    %140 = vector.broadcast %6 : vector<1x32xf32> to vector<32x32xf32>
    %141 = arith.mulf %139, %140 : vector<32x32xf32>
    %142 = vector.broadcast %7 : vector<1x32xf32> to vector<32x32xf32>
    %143 = arith.addf %141, %142 : vector<32x32xf32>
    %144 = vector.extract_strided_slice %143 {offsets = [31, 0], sizes = [1, 32], strides = [1, 1]} : vector<32x32xf32> to vector<1x32xf32>
    %145 = vector.extract_strided_slice %143 {offsets = [0, 0], sizes = [31, 32], strides = [1, 1]} : vector<32x32xf32> to vector<31x32xf32>
    %146 = tpu.concatenate %144, %145 in 0 : vector<1x32xf32>, vector<31x32xf32> -> vector<32x32xf32>
    %cst_29 = arith.constant 0.000000e+00 : f32
    %147 = vector.shape_cast %42 : vector<32x1xi1> to vector<32x1xi1>
    %148 = vector.broadcast %147 : vector<32x1xi1> to vector<32x32xi1>
    %149 = vector.broadcast %cst_29 : f32 to vector<32x32xf32>
    %150 = arith.select %148, %146, %149 : vector<32x32xi1>, vector<32x32xf32>
    %151 = vector.extract_strided_slice %143 {offsets = [1, 0], sizes = [31, 32], strides = [1, 1]} : vector<32x32xf32> to vector<31x32xf32>
    %152 = vector.extract_strided_slice %143 {offsets = [0, 0], sizes = [1, 32], strides = [1, 1]} : vector<32x32xf32> to vector<1x32xf32>
    %153 = tpu.concatenate %151, %152 in 0 : vector<31x32xf32>, vector<1x32xf32> -> vector<32x32xf32>
    %cst_30 = arith.constant 0.000000e+00 : f32
    %154 = vector.shape_cast %38 : vector<32x1xi1> to vector<32x1xi1>
    %155 = vector.broadcast %154 : vector<32x1xi1> to vector<32x32xi1>
    %156 = vector.broadcast %cst_30 : f32 to vector<32x32xf32>
    %157 = arith.select %155, %153, %156 : vector<32x32xi1>, vector<32x32xf32>
    %158 = tpu.concatenate %150, %143, %157 in 1 : vector<32x32xf32>, vector<32x32xf32>, vector<32x32xf32> -> vector<32x96xf32>
    %c0_31 = arith.constant 0 : index
    %c0_32 = arith.constant 0 : index
    %159 = vector.load %arg3[%c0_31, %c0_32] : memref<96x32xf32, #tpu.memory_space<vmem>>, vector<96x32xf32>
    %cst_33 = arith.constant dense<0.000000e+00> : vector<32x32xf32>
    %160 = tpu.matmul %158, %159, %cst_33 {dimension_numbers = #tpu.dot_dimension_numbers<[1], [0], [0], [1], [0, 0, 1, 1], [], []>} : vector<32x96xf32>, vector<96x32xf32>, vector<32x32xf32> -> vector<32x32xf32>
    %161 = vector.broadcast %8 : vector<1x32xf32> to vector<32x32xf32>
    %162 = arith.addf %160, %161 : vector<32x32xf32>
    %cst_34 = arith.constant 0.000000e+00 : f32
    %163 = vector.broadcast %cst_34 : f32 to vector<32x32xf32>
    %164 = arith.maximumf %162, %163 : vector<32x32xf32>
    %cst_35 = arith.constant dense<0.000000e+00> : vector<32xf32>
    %165 = vector.multi_reduction <add>, %164, %cst_35 [0] : vector<32x32xf32> to vector<32xf32>
    %166 = vector.shape_cast %165 : vector<32xf32> to vector<1x32xf32>
    %cst_36 = arith.constant 3.200000e+01 : f32
    %167 = vector.broadcast %cst_36 : f32 to vector<1x32xf32>
    %168 = arith.divf %166, %167 : vector<1x32xf32>
    %169 = vector.broadcast %168 : vector<1x32xf32> to vector<32x32xf32>
    %170 = arith.subf %164, %169 : vector<32x32xf32>
    %171 = arith.mulf %170, %170 : vector<32x32xf32>
    %cst_37 = arith.constant dense<0.000000e+00> : vector<32xf32>
    %172 = vector.multi_reduction <add>, %171, %cst_37 [0] : vector<32x32xf32> to vector<32xf32>
    %173 = vector.shape_cast %172 : vector<32xf32> to vector<1x32xf32>
    %cst_38 = arith.constant 3.200000e+01 : f32
    %174 = vector.broadcast %cst_38 : f32 to vector<1x32xf32>
    %175 = arith.divf %173, %174 : vector<1x32xf32>
    %176 = vector.broadcast %168 : vector<1x32xf32> to vector<32x32xf32>
    %177 = arith.subf %164, %176 : vector<32x32xf32>
    %cst_39 = arith.constant 1.000000e-03 : f32
    %178 = vector.broadcast %cst_39 : f32 to vector<1x32xf32>
    %179 = arith.addf %175, %178 : vector<1x32xf32>
    %180 = math.rsqrt %179 : vector<1x32xf32>
    %181 = vector.broadcast %180 : vector<1x32xf32> to vector<32x32xf32>
    %182 = arith.mulf %177, %181 : vector<32x32xf32>
    %183 = vector.broadcast %9 : vector<1x32xf32> to vector<32x32xf32>
    %184 = arith.mulf %182, %183 : vector<32x32xf32>
    %185 = vector.broadcast %10 : vector<1x32xf32> to vector<32x32xf32>
    %186 = arith.addf %184, %185 : vector<32x32xf32>
    %187 = arith.addf %186, %43 : vector<32x32xf32>
    %c0_40 = arith.constant 0 : index
    %c0_41 = arith.constant 0 : index
    %188 = vector.load %arg4[%c0_40, %c0_41] : memref<32x32xf32, #tpu.memory_space<vmem>>, vector<32x32xf32>
    %cst_42 = arith.constant dense<0.000000e+00> : vector<32x32xf32>
    %189 = tpu.matmul %187, %188, %cst_42 {dimension_numbers = #tpu.dot_dimension_numbers<[1], [0], [0], [1], [0, 0, 1, 1], [], []>} : vector<32x32xf32>, vector<32x32xf32>, vector<32x32xf32> -> vector<32x32xf32>
    %190 = vector.broadcast %11 : vector<1x32xf32> to vector<32x32xf32>
    %191 = arith.addf %189, %190 : vector<32x32xf32>
    %c0_43 = arith.constant 0 : index
    %c0_44 = arith.constant 0 : index
    %c0_45 = arith.constant 0 : index
    %192 = vector.load %arg5[%c0_43, %c0_44, %c0_45] : memref<4x32x64xf32, #tpu.memory_space<vmem>>, vector<1x32x64xf32>
    %193 = vector.shape_cast %192 : vector<1x32x64xf32> to vector<32x64xf32>
    %cst_46 = arith.constant dense<0.000000e+00> : vector<32x64xf32>
    %194 = tpu.matmul %191, %193, %cst_46 {dimension_numbers = #tpu.dot_dimension_numbers<[1], [0], [0], [1], [0, 0, 1, 1], [], []>} : vector<32x32xf32>, vector<32x64xf32>, vector<32x64xf32> -> vector<32x64xf32>
    %195 = vector.extract_strided_slice %0 {offsets = [5, 0], sizes = [1, 64], strides = [1, 1]} : vector<12x192xf32> to vector<1x64xf32>
    %196 = vector.broadcast %195 : vector<1x64xf32> to vector<32x64xf32>
    %197 = arith.addf %194, %196 : vector<32x64xf32>
    %198 = vector.extract_strided_slice %197 {offsets = [0, 0], sizes = [32, 32], strides = [1, 1]} : vector<32x64xf32> to vector<32x32xf32>
    %cst_47 = arith.constant 0.000000e+00 : f32
    %199 = vector.broadcast %cst_47 : f32 to vector<32x32xf32>
    %200 = arith.maximumf %198, %199 : vector<32x32xf32>
    %201 = vector.extract_strided_slice %197 {offsets = [0, 32], sizes = [32, 32], strides = [1, 1]} : vector<32x64xf32> to vector<32x32xf32>
    %202 = arith.negf %201 : vector<32x32xf32>
    %203 = math.exp %202 : vector<32x32xf32>
    %cst_48 = arith.constant 1.000000e+00 : f32
    %204 = vector.broadcast %cst_48 : f32 to vector<32x32xf32>
    %205 = arith.addf %204, %203 : vector<32x32xf32>
    %206 = arith.divf %204, %205 : vector<32x32xf32>
    %207 = arith.mulf %200, %206 : vector<32x32xf32>
    %cst_49 = arith.constant 1.000000e+00 : f32
    %208 = vector.broadcast %cst_49 : f32 to vector<32x32xf32>
    %209 = arith.subf %208, %206 : vector<32x32xf32>
    %210 = arith.mulf %191, %209 : vector<32x32xf32>
    %211 = arith.addf %207, %210 : vector<32x32xf32>
    %c1 = arith.constant 1 : index
    %c0_50 = arith.constant 0 : index
    %c0_51 = arith.constant 0 : index
    %212 = vector.load %arg5[%c1, %c0_50, %c0_51] : memref<4x32x64xf32, #tpu.memory_space<vmem>>, vector<1x32x64xf32>
    %213 = vector.shape_cast %212 : vector<1x32x64xf32> to vector<32x64xf32>
    %cst_52 = arith.constant dense<0.000000e+00> : vector<32x64xf32>
    %214 = tpu.matmul %211, %213, %cst_52 {dimension_numbers = #tpu.dot_dimension_numbers<[1], [0], [0], [1], [0, 0, 1, 1], [], []>} : vector<32x32xf32>, vector<32x64xf32>, vector<32x64xf32> -> vector<32x64xf32>
    %215 = vector.extract_strided_slice %0 {offsets = [6, 0], sizes = [1, 64], strides = [1, 1]} : vector<12x192xf32> to vector<1x64xf32>
    %216 = vector.broadcast %215 : vector<1x64xf32> to vector<32x64xf32>
    %217 = arith.addf %214, %216 : vector<32x64xf32>
    %218 = vector.extract_strided_slice %217 {offsets = [0, 0], sizes = [32, 32], strides = [1, 1]} : vector<32x64xf32> to vector<32x32xf32>
    %cst_53 = arith.constant 0.000000e+00 : f32
    %219 = vector.broadcast %cst_53 : f32 to vector<32x32xf32>
    %220 = arith.maximumf %218, %219 : vector<32x32xf32>
    %221 = vector.extract_strided_slice %217 {offsets = [0, 32], sizes = [32, 32], strides = [1, 1]} : vector<32x64xf32> to vector<32x32xf32>
    %222 = arith.negf %221 : vector<32x32xf32>
    %223 = math.exp %222 : vector<32x32xf32>
    %cst_54 = arith.constant 1.000000e+00 : f32
    %224 = vector.broadcast %cst_54 : f32 to vector<32x32xf32>
    %225 = arith.addf %224, %223 : vector<32x32xf32>
    %226 = arith.divf %224, %225 : vector<32x32xf32>
    %227 = arith.mulf %220, %226 : vector<32x32xf32>
    %cst_55 = arith.constant 1.000000e+00 : f32
    %228 = vector.broadcast %cst_55 : f32 to vector<32x32xf32>
    %229 = arith.subf %228, %226 : vector<32x32xf32>
    %230 = arith.mulf %211, %229 : vector<32x32xf32>
    %231 = arith.addf %227, %230 : vector<32x32xf32>
    %c2 = arith.constant 2 : index
    %c0_56 = arith.constant 0 : index
    %c0_57 = arith.constant 0 : index
    %232 = vector.load %arg5[%c2, %c0_56, %c0_57] : memref<4x32x64xf32, #tpu.memory_space<vmem>>, vector<1x32x64xf32>
    %233 = vector.shape_cast %232 : vector<1x32x64xf32> to vector<32x64xf32>
    %cst_58 = arith.constant dense<0.000000e+00> : vector<32x64xf32>
    %234 = tpu.matmul %231, %233, %cst_58 {dimension_numbers = #tpu.dot_dimension_numbers<[1], [0], [0], [1], [0, 0, 1, 1], [], []>} : vector<32x32xf32>, vector<32x64xf32>, vector<32x64xf32> -> vector<32x64xf32>
    %235 = vector.extract_strided_slice %0 {offsets = [7, 0], sizes = [1, 64], strides = [1, 1]} : vector<12x192xf32> to vector<1x64xf32>
    %236 = vector.broadcast %235 : vector<1x64xf32> to vector<32x64xf32>
    %237 = arith.addf %234, %236 : vector<32x64xf32>
    %238 = vector.extract_strided_slice %237 {offsets = [0, 0], sizes = [32, 32], strides = [1, 1]} : vector<32x64xf32> to vector<32x32xf32>
    %cst_59 = arith.constant 0.000000e+00 : f32
    %239 = vector.broadcast %cst_59 : f32 to vector<32x32xf32>
    %240 = arith.maximumf %238, %239 : vector<32x32xf32>
    %241 = vector.extract_strided_slice %237 {offsets = [0, 32], sizes = [32, 32], strides = [1, 1]} : vector<32x64xf32> to vector<32x32xf32>
    %242 = arith.negf %241 : vector<32x32xf32>
    %243 = math.exp %242 : vector<32x32xf32>
    %cst_60 = arith.constant 1.000000e+00 : f32
    %244 = vector.broadcast %cst_60 : f32 to vector<32x32xf32>
    %245 = arith.addf %244, %243 : vector<32x32xf32>
    %246 = arith.divf %244, %245 : vector<32x32xf32>
    %247 = arith.mulf %240, %246 : vector<32x32xf32>
    %cst_61 = arith.constant 1.000000e+00 : f32
    %248 = vector.broadcast %cst_61 : f32 to vector<32x32xf32>
    %249 = arith.subf %248, %246 : vector<32x32xf32>
    %250 = arith.mulf %231, %249 : vector<32x32xf32>
    %251 = arith.addf %247, %250 : vector<32x32xf32>
    %c3 = arith.constant 3 : index
    %c0_62 = arith.constant 0 : index
    %c0_63 = arith.constant 0 : index
    %252 = vector.load %arg5[%c3, %c0_62, %c0_63] : memref<4x32x64xf32, #tpu.memory_space<vmem>>, vector<1x32x64xf32>
    %253 = vector.shape_cast %252 : vector<1x32x64xf32> to vector<32x64xf32>
    %cst_64 = arith.constant dense<0.000000e+00> : vector<32x64xf32>
    %254 = tpu.matmul %251, %253, %cst_64 {dimension_numbers = #tpu.dot_dimension_numbers<[1], [0], [0], [1], [0, 0, 1, 1], [], []>} : vector<32x32xf32>, vector<32x64xf32>, vector<32x64xf32> -> vector<32x64xf32>
    %255 = vector.extract_strided_slice %0 {offsets = [8, 0], sizes = [1, 64], strides = [1, 1]} : vector<12x192xf32> to vector<1x64xf32>
    %256 = vector.broadcast %255 : vector<1x64xf32> to vector<32x64xf32>
    %257 = arith.addf %254, %256 : vector<32x64xf32>
    %258 = vector.extract_strided_slice %257 {offsets = [0, 0], sizes = [32, 32], strides = [1, 1]} : vector<32x64xf32> to vector<32x32xf32>
    %cst_65 = arith.constant 0.000000e+00 : f32
    %259 = vector.broadcast %cst_65 : f32 to vector<32x32xf32>
    %260 = arith.maximumf %258, %259 : vector<32x32xf32>
    %261 = vector.extract_strided_slice %257 {offsets = [0, 32], sizes = [32, 32], strides = [1, 1]} : vector<32x64xf32> to vector<32x32xf32>
    %262 = arith.negf %261 : vector<32x32xf32>
    %263 = math.exp %262 : vector<32x32xf32>
    %cst_66 = arith.constant 1.000000e+00 : f32
    %264 = vector.broadcast %cst_66 : f32 to vector<32x32xf32>
    %265 = arith.addf %264, %263 : vector<32x32xf32>
    %266 = arith.divf %264, %265 : vector<32x32xf32>
    %267 = arith.mulf %260, %266 : vector<32x32xf32>
    %cst_67 = arith.constant 1.000000e+00 : f32
    %268 = vector.broadcast %cst_67 : f32 to vector<32x32xf32>
    %269 = arith.subf %268, %266 : vector<32x32xf32>
    %270 = arith.mulf %251, %269 : vector<32x32xf32>
    %271 = arith.addf %267, %270 : vector<32x32xf32>
    %c0_68 = arith.constant 0 : index
    %c0_69 = arith.constant 0 : index
    %272 = vector.load %arg6[%c0_68, %c0_69] : memref<32x192xf32, #tpu.memory_space<vmem>>, vector<32x192xf32>
    %cst_70 = arith.constant dense<0.000000e+00> : vector<32x192xf32>
    %273 = tpu.matmul %271, %272, %cst_70 {dimension_numbers = #tpu.dot_dimension_numbers<[1], [0], [0], [1], [0, 0, 1, 1], [], []>} : vector<32x32xf32>, vector<32x192xf32>, vector<32x192xf32> -> vector<32x192xf32>
    %274 = vector.broadcast %12 : vector<1x192xf32> to vector<32x192xf32>
    %275 = arith.addf %273, %274 : vector<32x192xf32>
    %276 = tpu.iota {dimensions = array<i32: 0>} : vector<4x1xi32>
    %c2_i32_71 = arith.constant 2 : i32
    %277 = vector.broadcast %c2_i32_71 : i32 to vector<4x1xi32>
    %278 = arith.cmpi slt, %276, %277 : vector<4x1xi32>
    %279 = arith.extui %278 : vector<4x1xi1> to vector<4x1xi32>
    %280 = arith.sitofp %279 : vector<4x1xi32> to vector<4x1xf32>
    %cst_72 = arith.constant 1.000000e+00 : f32
    %281 = vector.broadcast %cst_72 : f32 to vector<4x1xf32>
    %282 = arith.subf %281, %280 : vector<4x1xf32>
    %c0_73 = arith.constant 0 : index
    %c0_74 = arith.constant 0 : index
    %283 = vector.load %arg7[%c0_73, %c0_74] : memref<64x96xf32, #tpu.memory_space<vmem>>, vector<64x96xf32>
    %284 = vector.extract_strided_slice %275 {offsets = [0, 0], sizes = [1, 96], strides = [1, 1]} : vector<32x192xf32> to vector<1x96xf32>
    %285 = vector.extract_strided_slice %275 {offsets = [16, 0], sizes = [1, 96], strides = [1, 1]} : vector<32x192xf32> to vector<1x96xf32>
    %286 = vector.extract_strided_slice %275 {offsets = [15, 96], sizes = [1, 96], strides = [1, 1]} : vector<32x192xf32> to vector<1x96xf32>
    %287 = vector.extract_strided_slice %275 {offsets = [31, 96], sizes = [1, 96], strides = [1, 1]} : vector<32x192xf32> to vector<1x96xf32>
    %288 = tpu.concatenate %284, %285, %286, %287 in 0 : vector<1x96xf32>, vector<1x96xf32>, vector<1x96xf32>, vector<1x96xf32> -> vector<4x96xf32>
    %cst_75 = arith.constant 0.000000e+00 : f32
    %289 = vector.broadcast %cst_75 : f32 to vector<4x32xf32>
    %290 = vector.extract_strided_slice %288 {offsets = [0, 0], sizes = [4, 64], strides = [1, 1]} : vector<4x96xf32> to vector<4x64xf32>
    %291 = vector.extract_strided_slice %19 {offsets = [0, 0], sizes = [4, 64], strides = [1, 1]} : vector<4x96xf32> to vector<4x64xf32>
    %292 = arith.addf %290, %291 : vector<4x64xf32>
    %293 = arith.negf %292 : vector<4x64xf32>
    %294 = math.exp %293 : vector<4x64xf32>
    %cst_76 = arith.constant 1.000000e+00 : f32
    %295 = vector.broadcast %cst_76 : f32 to vector<4x64xf32>
    %296 = arith.addf %295, %294 : vector<4x64xf32>
    %297 = arith.divf %295, %296 : vector<4x64xf32>
    %298 = vector.extract_strided_slice %288 {offsets = [0, 64], sizes = [4, 32], strides = [1, 1]} : vector<4x96xf32> to vector<4x32xf32>
    %299 = vector.extract_strided_slice %297 {offsets = [0, 0], sizes = [4, 32], strides = [1, 1]} : vector<4x64xf32> to vector<4x32xf32>
    %300 = vector.extract_strided_slice %19 {offsets = [0, 64], sizes = [4, 32], strides = [1, 1]} : vector<4x96xf32> to vector<4x32xf32>
    %301 = arith.mulf %299, %300 : vector<4x32xf32>
    %302 = arith.addf %298, %301 : vector<4x32xf32>
    %303 = math.tanh %302 : vector<4x32xf32>
    %304 = vector.extract_strided_slice %297 {offsets = [0, 32], sizes = [4, 32], strides = [1, 1]} : vector<4x64xf32> to vector<4x32xf32>
    %cst_77 = arith.constant 1.000000e+00 : f32
    %305 = vector.broadcast %cst_77 : f32 to vector<4x32xf32>
    %306 = arith.subf %305, %304 : vector<4x32xf32>
    %307 = arith.mulf %306, %303 : vector<4x32xf32>
    %308 = arith.mulf %304, %289 : vector<4x32xf32>
    %309 = arith.addf %307, %308 : vector<4x32xf32>
    %310 = vector.broadcast %280 : vector<4x1xf32> to vector<4x32xf32>
    %311 = arith.mulf %309, %310 : vector<4x32xf32>
    %312 = vector.broadcast %282 : vector<4x1xf32> to vector<4x32xf32>
    %313 = arith.mulf %309, %312 : vector<4x32xf32>
    %314 = tpu.concatenate %311, %313 in 1 : vector<4x32xf32>, vector<4x32xf32> -> vector<4x64xf32>
    %315 = vector.extract_strided_slice %275 {offsets = [1, 0], sizes = [1, 96], strides = [1, 1]} : vector<32x192xf32> to vector<1x96xf32>
    %316 = vector.extract_strided_slice %275 {offsets = [17, 0], sizes = [1, 96], strides = [1, 1]} : vector<32x192xf32> to vector<1x96xf32>
    %317 = vector.extract_strided_slice %275 {offsets = [14, 96], sizes = [1, 96], strides = [1, 1]} : vector<32x192xf32> to vector<1x96xf32>
    %318 = vector.extract_strided_slice %275 {offsets = [30, 96], sizes = [1, 96], strides = [1, 1]} : vector<32x192xf32> to vector<1x96xf32>
    %319 = tpu.concatenate %315, %316, %317, %318 in 0 : vector<1x96xf32>, vector<1x96xf32>, vector<1x96xf32>, vector<1x96xf32> -> vector<4x96xf32>
    %cst_78 = arith.constant dense<0.000000e+00> : vector<4x96xf32>
    %320 = tpu.matmul %314, %283, %cst_78 {dimension_numbers = #tpu.dot_dimension_numbers<[1], [0], [0], [1], [0, 0, 1, 1], [], []>} : vector<4x64xf32>, vector<64x96xf32>, vector<4x96xf32> -> vector<4x96xf32>
    %321 = arith.addf %320, %19 : vector<4x96xf32>
    %322 = vector.extract_strided_slice %314 {offsets = [0, 0], sizes = [4, 32], strides = [1, 1]} : vector<4x64xf32> to vector<4x32xf32>
    %323 = vector.extract_strided_slice %314 {offsets = [0, 32], sizes = [4, 32], strides = [1, 1]} : vector<4x64xf32> to vector<4x32xf32>
    %324 = arith.addf %322, %323 : vector<4x32xf32>
    %325 = vector.extract_strided_slice %319 {offsets = [0, 0], sizes = [4, 64], strides = [1, 1]} : vector<4x96xf32> to vector<4x64xf32>
    %326 = vector.extract_strided_slice %321 {offsets = [0, 0], sizes = [4, 64], strides = [1, 1]} : vector<4x96xf32> to vector<4x64xf32>
    %327 = arith.addf %325, %326 : vector<4x64xf32>
    %328 = arith.negf %327 : vector<4x64xf32>
    %329 = math.exp %328 : vector<4x64xf32>
    %cst_79 = arith.constant 1.000000e+00 : f32
    %330 = vector.broadcast %cst_79 : f32 to vector<4x64xf32>
    %331 = arith.addf %330, %329 : vector<4x64xf32>
    %332 = arith.divf %330, %331 : vector<4x64xf32>
    %333 = vector.extract_strided_slice %319 {offsets = [0, 64], sizes = [4, 32], strides = [1, 1]} : vector<4x96xf32> to vector<4x32xf32>
    %334 = vector.extract_strided_slice %332 {offsets = [0, 0], sizes = [4, 32], strides = [1, 1]} : vector<4x64xf32> to vector<4x32xf32>
    %335 = vector.extract_strided_slice %321 {offsets = [0, 64], sizes = [4, 32], strides = [1, 1]} : vector<4x96xf32> to vector<4x32xf32>
    %336 = arith.mulf %334, %335 : vector<4x32xf32>
    %337 = arith.addf %333, %336 : vector<4x32xf32>
    %338 = math.tanh %337 : vector<4x32xf32>
    %339 = vector.extract_strided_slice %332 {offsets = [0, 32], sizes = [4, 32], strides = [1, 1]} : vector<4x64xf32> to vector<4x32xf32>
    %cst_80 = arith.constant 1.000000e+00 : f32
    %340 = vector.broadcast %cst_80 : f32 to vector<4x32xf32>
    %341 = arith.subf %340, %339 : vector<4x32xf32>
    %342 = arith.mulf %341, %338 : vector<4x32xf32>
    %343 = arith.mulf %339, %324 : vector<4x32xf32>
    %344 = arith.addf %342, %343 : vector<4x32xf32>
    %345 = vector.broadcast %280 : vector<4x1xf32> to vector<4x32xf32>
    %346 = arith.mulf %344, %345 : vector<4x32xf32>
    %347 = vector.broadcast %282 : vector<4x1xf32> to vector<4x32xf32>
    %348 = arith.mulf %344, %347 : vector<4x32xf32>
    %349 = tpu.concatenate %346, %348 in 1 : vector<4x32xf32>, vector<4x32xf32> -> vector<4x64xf32>
    %350 = vector.extract_strided_slice %275 {offsets = [2, 0], sizes = [1, 96], strides = [1, 1]} : vector<32x192xf32> to vector<1x96xf32>
    %351 = vector.extract_strided_slice %275 {offsets = [18, 0], sizes = [1, 96], strides = [1, 1]} : vector<32x192xf32> to vector<1x96xf32>
    %352 = vector.extract_strided_slice %275 {offsets = [13, 96], sizes = [1, 96], strides = [1, 1]} : vector<32x192xf32> to vector<1x96xf32>
    %353 = vector.extract_strided_slice %275 {offsets = [29, 96], sizes = [1, 96], strides = [1, 1]} : vector<32x192xf32> to vector<1x96xf32>
    %354 = tpu.concatenate %350, %351, %352, %353 in 0 : vector<1x96xf32>, vector<1x96xf32>, vector<1x96xf32>, vector<1x96xf32> -> vector<4x96xf32>
    %cst_81 = arith.constant dense<0.000000e+00> : vector<4x96xf32>
    %355 = tpu.matmul %349, %283, %cst_81 {dimension_numbers = #tpu.dot_dimension_numbers<[1], [0], [0], [1], [0, 0, 1, 1], [], []>} : vector<4x64xf32>, vector<64x96xf32>, vector<4x96xf32> -> vector<4x96xf32>
    %356 = arith.addf %355, %19 : vector<4x96xf32>
    %357 = vector.extract_strided_slice %349 {offsets = [0, 0], sizes = [4, 32], strides = [1, 1]} : vector<4x64xf32> to vector<4x32xf32>
    %358 = vector.extract_strided_slice %349 {offsets = [0, 32], sizes = [4, 32], strides = [1, 1]} : vector<4x64xf32> to vector<4x32xf32>
    %359 = arith.addf %357, %358 : vector<4x32xf32>
    %360 = vector.extract_strided_slice %354 {offsets = [0, 0], sizes = [4, 64], strides = [1, 1]} : vector<4x96xf32> to vector<4x64xf32>
    %361 = vector.extract_strided_slice %356 {offsets = [0, 0], sizes = [4, 64], strides = [1, 1]} : vector<4x96xf32> to vector<4x64xf32>
    %362 = arith.addf %360, %361 : vector<4x64xf32>
    %363 = arith.negf %362 : vector<4x64xf32>
    %364 = math.exp %363 : vector<4x64xf32>
    %cst_82 = arith.constant 1.000000e+00 : f32
    %365 = vector.broadcast %cst_82 : f32 to vector<4x64xf32>
    %366 = arith.addf %365, %364 : vector<4x64xf32>
    %367 = arith.divf %365, %366 : vector<4x64xf32>
    %368 = vector.extract_strided_slice %354 {offsets = [0, 64], sizes = [4, 32], strides = [1, 1]} : vector<4x96xf32> to vector<4x32xf32>
    %369 = vector.extract_strided_slice %367 {offsets = [0, 0], sizes = [4, 32], strides = [1, 1]} : vector<4x64xf32> to vector<4x32xf32>
    %370 = vector.extract_strided_slice %356 {offsets = [0, 64], sizes = [4, 32], strides = [1, 1]} : vector<4x96xf32> to vector<4x32xf32>
    %371 = arith.mulf %369, %370 : vector<4x32xf32>
    %372 = arith.addf %368, %371 : vector<4x32xf32>
    %373 = math.tanh %372 : vector<4x32xf32>
    %374 = vector.extract_strided_slice %367 {offsets = [0, 32], sizes = [4, 32], strides = [1, 1]} : vector<4x64xf32> to vector<4x32xf32>
    %cst_83 = arith.constant 1.000000e+00 : f32
    %375 = vector.broadcast %cst_83 : f32 to vector<4x32xf32>
    %376 = arith.subf %375, %374 : vector<4x32xf32>
    %377 = arith.mulf %376, %373 : vector<4x32xf32>
    %378 = arith.mulf %374, %359 : vector<4x32xf32>
    %379 = arith.addf %377, %378 : vector<4x32xf32>
    %380 = vector.broadcast %280 : vector<4x1xf32> to vector<4x32xf32>
    %381 = arith.mulf %379, %380 : vector<4x32xf32>
    %382 = vector.broadcast %282 : vector<4x1xf32> to vector<4x32xf32>
    %383 = arith.mulf %379, %382 : vector<4x32xf32>
    %384 = tpu.concatenate %381, %383 in 1 : vector<4x32xf32>, vector<4x32xf32> -> vector<4x64xf32>
    %385 = vector.extract_strided_slice %275 {offsets = [3, 0], sizes = [1, 96], strides = [1, 1]} : vector<32x192xf32> to vector<1x96xf32>
    %386 = vector.extract_strided_slice %275 {offsets = [19, 0], sizes = [1, 96], strides = [1, 1]} : vector<32x192xf32> to vector<1x96xf32>
    %387 = vector.extract_strided_slice %275 {offsets = [12, 96], sizes = [1, 96], strides = [1, 1]} : vector<32x192xf32> to vector<1x96xf32>
    %388 = vector.extract_strided_slice %275 {offsets = [28, 96], sizes = [1, 96], strides = [1, 1]} : vector<32x192xf32> to vector<1x96xf32>
    %389 = tpu.concatenate %385, %386, %387, %388 in 0 : vector<1x96xf32>, vector<1x96xf32>, vector<1x96xf32>, vector<1x96xf32> -> vector<4x96xf32>
    %cst_84 = arith.constant dense<0.000000e+00> : vector<4x96xf32>
    %390 = tpu.matmul %384, %283, %cst_84 {dimension_numbers = #tpu.dot_dimension_numbers<[1], [0], [0], [1], [0, 0, 1, 1], [], []>} : vector<4x64xf32>, vector<64x96xf32>, vector<4x96xf32> -> vector<4x96xf32>
    %391 = arith.addf %390, %19 : vector<4x96xf32>
    %392 = vector.extract_strided_slice %384 {offsets = [0, 0], sizes = [4, 32], strides = [1, 1]} : vector<4x64xf32> to vector<4x32xf32>
    %393 = vector.extract_strided_slice %384 {offsets = [0, 32], sizes = [4, 32], strides = [1, 1]} : vector<4x64xf32> to vector<4x32xf32>
    %394 = arith.addf %392, %393 : vector<4x32xf32>
    %395 = vector.extract_strided_slice %389 {offsets = [0, 0], sizes = [4, 64], strides = [1, 1]} : vector<4x96xf32> to vector<4x64xf32>
    %396 = vector.extract_strided_slice %391 {offsets = [0, 0], sizes = [4, 64], strides = [1, 1]} : vector<4x96xf32> to vector<4x64xf32>
    %397 = arith.addf %395, %396 : vector<4x64xf32>
    %398 = arith.negf %397 : vector<4x64xf32>
    %399 = math.exp %398 : vector<4x64xf32>
    %cst_85 = arith.constant 1.000000e+00 : f32
    %400 = vector.broadcast %cst_85 : f32 to vector<4x64xf32>
    %401 = arith.addf %400, %399 : vector<4x64xf32>
    %402 = arith.divf %400, %401 : vector<4x64xf32>
    %403 = vector.extract_strided_slice %389 {offsets = [0, 64], sizes = [4, 32], strides = [1, 1]} : vector<4x96xf32> to vector<4x32xf32>
    %404 = vector.extract_strided_slice %402 {offsets = [0, 0], sizes = [4, 32], strides = [1, 1]} : vector<4x64xf32> to vector<4x32xf32>
    %405 = vector.extract_strided_slice %391 {offsets = [0, 64], sizes = [4, 32], strides = [1, 1]} : vector<4x96xf32> to vector<4x32xf32>
    %406 = arith.mulf %404, %405 : vector<4x32xf32>
    %407 = arith.addf %403, %406 : vector<4x32xf32>
    %408 = math.tanh %407 : vector<4x32xf32>
    %409 = vector.extract_strided_slice %402 {offsets = [0, 32], sizes = [4, 32], strides = [1, 1]} : vector<4x64xf32> to vector<4x32xf32>
    %cst_86 = arith.constant 1.000000e+00 : f32
    %410 = vector.broadcast %cst_86 : f32 to vector<4x32xf32>
    %411 = arith.subf %410, %409 : vector<4x32xf32>
    %412 = arith.mulf %411, %408 : vector<4x32xf32>
    %413 = arith.mulf %409, %394 : vector<4x32xf32>
    %414 = arith.addf %412, %413 : vector<4x32xf32>
    %415 = vector.broadcast %280 : vector<4x1xf32> to vector<4x32xf32>
    %416 = arith.mulf %414, %415 : vector<4x32xf32>
    %417 = vector.broadcast %282 : vector<4x1xf32> to vector<4x32xf32>
    %418 = arith.mulf %414, %417 : vector<4x32xf32>
    %419 = tpu.concatenate %416, %418 in 1 : vector<4x32xf32>, vector<4x32xf32> -> vector<4x64xf32>
    %420 = vector.extract_strided_slice %275 {offsets = [4, 0], sizes = [1, 96], strides = [1, 1]} : vector<32x192xf32> to vector<1x96xf32>
    %421 = vector.extract_strided_slice %275 {offsets = [20, 0], sizes = [1, 96], strides = [1, 1]} : vector<32x192xf32> to vector<1x96xf32>
    %422 = vector.extract_strided_slice %275 {offsets = [11, 96], sizes = [1, 96], strides = [1, 1]} : vector<32x192xf32> to vector<1x96xf32>
    %423 = vector.extract_strided_slice %275 {offsets = [27, 96], sizes = [1, 96], strides = [1, 1]} : vector<32x192xf32> to vector<1x96xf32>
    %424 = tpu.concatenate %420, %421, %422, %423 in 0 : vector<1x96xf32>, vector<1x96xf32>, vector<1x96xf32>, vector<1x96xf32> -> vector<4x96xf32>
    %cst_87 = arith.constant dense<0.000000e+00> : vector<4x96xf32>
    %425 = tpu.matmul %419, %283, %cst_87 {dimension_numbers = #tpu.dot_dimension_numbers<[1], [0], [0], [1], [0, 0, 1, 1], [], []>} : vector<4x64xf32>, vector<64x96xf32>, vector<4x96xf32> -> vector<4x96xf32>
    %426 = arith.addf %425, %19 : vector<4x96xf32>
    %427 = vector.extract_strided_slice %419 {offsets = [0, 0], sizes = [4, 32], strides = [1, 1]} : vector<4x64xf32> to vector<4x32xf32>
    %428 = vector.extract_strided_slice %419 {offsets = [0, 32], sizes = [4, 32], strides = [1, 1]} : vector<4x64xf32> to vector<4x32xf32>
    %429 = arith.addf %427, %428 : vector<4x32xf32>
    %430 = vector.extract_strided_slice %424 {offsets = [0, 0], sizes = [4, 64], strides = [1, 1]} : vector<4x96xf32> to vector<4x64xf32>
    %431 = vector.extract_strided_slice %426 {offsets = [0, 0], sizes = [4, 64], strides = [1, 1]} : vector<4x96xf32> to vector<4x64xf32>
    %432 = arith.addf %430, %431 : vector<4x64xf32>
    %433 = arith.negf %432 : vector<4x64xf32>
    %434 = math.exp %433 : vector<4x64xf32>
    %cst_88 = arith.constant 1.000000e+00 : f32
    %435 = vector.broadcast %cst_88 : f32 to vector<4x64xf32>
    %436 = arith.addf %435, %434 : vector<4x64xf32>
    %437 = arith.divf %435, %436 : vector<4x64xf32>
    %438 = vector.extract_strided_slice %424 {offsets = [0, 64], sizes = [4, 32], strides = [1, 1]} : vector<4x96xf32> to vector<4x32xf32>
    %439 = vector.extract_strided_slice %437 {offsets = [0, 0], sizes = [4, 32], strides = [1, 1]} : vector<4x64xf32> to vector<4x32xf32>
    %440 = vector.extract_strided_slice %426 {offsets = [0, 64], sizes = [4, 32], strides = [1, 1]} : vector<4x96xf32> to vector<4x32xf32>
    %441 = arith.mulf %439, %440 : vector<4x32xf32>
    %442 = arith.addf %438, %441 : vector<4x32xf32>
    %443 = math.tanh %442 : vector<4x32xf32>
    %444 = vector.extract_strided_slice %437 {offsets = [0, 32], sizes = [4, 32], strides = [1, 1]} : vector<4x64xf32> to vector<4x32xf32>
    %cst_89 = arith.constant 1.000000e+00 : f32
    %445 = vector.broadcast %cst_89 : f32 to vector<4x32xf32>
    %446 = arith.subf %445, %444 : vector<4x32xf32>
    %447 = arith.mulf %446, %443 : vector<4x32xf32>
    %448 = arith.mulf %444, %429 : vector<4x32xf32>
    %449 = arith.addf %447, %448 : vector<4x32xf32>
    %450 = vector.broadcast %280 : vector<4x1xf32> to vector<4x32xf32>
    %451 = arith.mulf %449, %450 : vector<4x32xf32>
    %452 = vector.broadcast %282 : vector<4x1xf32> to vector<4x32xf32>
    %453 = arith.mulf %449, %452 : vector<4x32xf32>
    %454 = tpu.concatenate %451, %453 in 1 : vector<4x32xf32>, vector<4x32xf32> -> vector<4x64xf32>
    %455 = vector.extract_strided_slice %275 {offsets = [5, 0], sizes = [1, 96], strides = [1, 1]} : vector<32x192xf32> to vector<1x96xf32>
    %456 = vector.extract_strided_slice %275 {offsets = [21, 0], sizes = [1, 96], strides = [1, 1]} : vector<32x192xf32> to vector<1x96xf32>
    %457 = vector.extract_strided_slice %275 {offsets = [10, 96], sizes = [1, 96], strides = [1, 1]} : vector<32x192xf32> to vector<1x96xf32>
    %458 = vector.extract_strided_slice %275 {offsets = [26, 96], sizes = [1, 96], strides = [1, 1]} : vector<32x192xf32> to vector<1x96xf32>
    %459 = tpu.concatenate %455, %456, %457, %458 in 0 : vector<1x96xf32>, vector<1x96xf32>, vector<1x96xf32>, vector<1x96xf32> -> vector<4x96xf32>
    %cst_90 = arith.constant dense<0.000000e+00> : vector<4x96xf32>
    %460 = tpu.matmul %454, %283, %cst_90 {dimension_numbers = #tpu.dot_dimension_numbers<[1], [0], [0], [1], [0, 0, 1, 1], [], []>} : vector<4x64xf32>, vector<64x96xf32>, vector<4x96xf32> -> vector<4x96xf32>
    %461 = arith.addf %460, %19 : vector<4x96xf32>
    %462 = vector.extract_strided_slice %454 {offsets = [0, 0], sizes = [4, 32], strides = [1, 1]} : vector<4x64xf32> to vector<4x32xf32>
    %463 = vector.extract_strided_slice %454 {offsets = [0, 32], sizes = [4, 32], strides = [1, 1]} : vector<4x64xf32> to vector<4x32xf32>
    %464 = arith.addf %462, %463 : vector<4x32xf32>
    %465 = vector.extract_strided_slice %459 {offsets = [0, 0], sizes = [4, 64], strides = [1, 1]} : vector<4x96xf32> to vector<4x64xf32>
    %466 = vector.extract_strided_slice %461 {offsets = [0, 0], sizes = [4, 64], strides = [1, 1]} : vector<4x96xf32> to vector<4x64xf32>
    %467 = arith.addf %465, %466 : vector<4x64xf32>
    %468 = arith.negf %467 : vector<4x64xf32>
    %469 = math.exp %468 : vector<4x64xf32>
    %cst_91 = arith.constant 1.000000e+00 : f32
    %470 = vector.broadcast %cst_91 : f32 to vector<4x64xf32>
    %471 = arith.addf %470, %469 : vector<4x64xf32>
    %472 = arith.divf %470, %471 : vector<4x64xf32>
    %473 = vector.extract_strided_slice %459 {offsets = [0, 64], sizes = [4, 32], strides = [1, 1]} : vector<4x96xf32> to vector<4x32xf32>
    %474 = vector.extract_strided_slice %472 {offsets = [0, 0], sizes = [4, 32], strides = [1, 1]} : vector<4x64xf32> to vector<4x32xf32>
    %475 = vector.extract_strided_slice %461 {offsets = [0, 64], sizes = [4, 32], strides = [1, 1]} : vector<4x96xf32> to vector<4x32xf32>
    %476 = arith.mulf %474, %475 : vector<4x32xf32>
    %477 = arith.addf %473, %476 : vector<4x32xf32>
    %478 = math.tanh %477 : vector<4x32xf32>
    %479 = vector.extract_strided_slice %472 {offsets = [0, 32], sizes = [4, 32], strides = [1, 1]} : vector<4x64xf32> to vector<4x32xf32>
    %cst_92 = arith.constant 1.000000e+00 : f32
    %480 = vector.broadcast %cst_92 : f32 to vector<4x32xf32>
    %481 = arith.subf %480, %479 : vector<4x32xf32>
    %482 = arith.mulf %481, %478 : vector<4x32xf32>
    %483 = arith.mulf %479, %464 : vector<4x32xf32>
    %484 = arith.addf %482, %483 : vector<4x32xf32>
    %485 = vector.broadcast %280 : vector<4x1xf32> to vector<4x32xf32>
    %486 = arith.mulf %484, %485 : vector<4x32xf32>
    %487 = vector.broadcast %282 : vector<4x1xf32> to vector<4x32xf32>
    %488 = arith.mulf %484, %487 : vector<4x32xf32>
    %489 = tpu.concatenate %486, %488 in 1 : vector<4x32xf32>, vector<4x32xf32> -> vector<4x64xf32>
    %490 = vector.extract_strided_slice %275 {offsets = [6, 0], sizes = [1, 96], strides = [1, 1]} : vector<32x192xf32> to vector<1x96xf32>
    %491 = vector.extract_strided_slice %275 {offsets = [22, 0], sizes = [1, 96], strides = [1, 1]} : vector<32x192xf32> to vector<1x96xf32>
    %492 = vector.extract_strided_slice %275 {offsets = [9, 96], sizes = [1, 96], strides = [1, 1]} : vector<32x192xf32> to vector<1x96xf32>
    %493 = vector.extract_strided_slice %275 {offsets = [25, 96], sizes = [1, 96], strides = [1, 1]} : vector<32x192xf32> to vector<1x96xf32>
    %494 = tpu.concatenate %490, %491, %492, %493 in 0 : vector<1x96xf32>, vector<1x96xf32>, vector<1x96xf32>, vector<1x96xf32> -> vector<4x96xf32>
    %cst_93 = arith.constant dense<0.000000e+00> : vector<4x96xf32>
    %495 = tpu.matmul %489, %283, %cst_93 {dimension_numbers = #tpu.dot_dimension_numbers<[1], [0], [0], [1], [0, 0, 1, 1], [], []>} : vector<4x64xf32>, vector<64x96xf32>, vector<4x96xf32> -> vector<4x96xf32>
    %496 = arith.addf %495, %19 : vector<4x96xf32>
    %497 = vector.extract_strided_slice %489 {offsets = [0, 0], sizes = [4, 32], strides = [1, 1]} : vector<4x64xf32> to vector<4x32xf32>
    %498 = vector.extract_strided_slice %489 {offsets = [0, 32], sizes = [4, 32], strides = [1, 1]} : vector<4x64xf32> to vector<4x32xf32>
    %499 = arith.addf %497, %498 : vector<4x32xf32>
    %500 = vector.extract_strided_slice %494 {offsets = [0, 0], sizes = [4, 64], strides = [1, 1]} : vector<4x96xf32> to vector<4x64xf32>
    %501 = vector.extract_strided_slice %496 {offsets = [0, 0], sizes = [4, 64], strides = [1, 1]} : vector<4x96xf32> to vector<4x64xf32>
    %502 = arith.addf %500, %501 : vector<4x64xf32>
    %503 = arith.negf %502 : vector<4x64xf32>
    %504 = math.exp %503 : vector<4x64xf32>
    %cst_94 = arith.constant 1.000000e+00 : f32
    %505 = vector.broadcast %cst_94 : f32 to vector<4x64xf32>
    %506 = arith.addf %505, %504 : vector<4x64xf32>
    %507 = arith.divf %505, %506 : vector<4x64xf32>
    %508 = vector.extract_strided_slice %494 {offsets = [0, 64], sizes = [4, 32], strides = [1, 1]} : vector<4x96xf32> to vector<4x32xf32>
    %509 = vector.extract_strided_slice %507 {offsets = [0, 0], sizes = [4, 32], strides = [1, 1]} : vector<4x64xf32> to vector<4x32xf32>
    %510 = vector.extract_strided_slice %496 {offsets = [0, 64], sizes = [4, 32], strides = [1, 1]} : vector<4x96xf32> to vector<4x32xf32>
    %511 = arith.mulf %509, %510 : vector<4x32xf32>
    %512 = arith.addf %508, %511 : vector<4x32xf32>
    %513 = math.tanh %512 : vector<4x32xf32>
    %514 = vector.extract_strided_slice %507 {offsets = [0, 32], sizes = [4, 32], strides = [1, 1]} : vector<4x64xf32> to vector<4x32xf32>
    %cst_95 = arith.constant 1.000000e+00 : f32
    %515 = vector.broadcast %cst_95 : f32 to vector<4x32xf32>
    %516 = arith.subf %515, %514 : vector<4x32xf32>
    %517 = arith.mulf %516, %513 : vector<4x32xf32>
    %518 = arith.mulf %514, %499 : vector<4x32xf32>
    %519 = arith.addf %517, %518 : vector<4x32xf32>
    %520 = vector.broadcast %280 : vector<4x1xf32> to vector<4x32xf32>
    %521 = arith.mulf %519, %520 : vector<4x32xf32>
    %522 = vector.broadcast %282 : vector<4x1xf32> to vector<4x32xf32>
    %523 = arith.mulf %519, %522 : vector<4x32xf32>
    %524 = tpu.concatenate %521, %523 in 1 : vector<4x32xf32>, vector<4x32xf32> -> vector<4x64xf32>
    %525 = vector.extract_strided_slice %275 {offsets = [7, 0], sizes = [1, 96], strides = [1, 1]} : vector<32x192xf32> to vector<1x96xf32>
    %526 = vector.extract_strided_slice %275 {offsets = [23, 0], sizes = [1, 96], strides = [1, 1]} : vector<32x192xf32> to vector<1x96xf32>
    %527 = vector.extract_strided_slice %275 {offsets = [8, 96], sizes = [1, 96], strides = [1, 1]} : vector<32x192xf32> to vector<1x96xf32>
    %528 = vector.extract_strided_slice %275 {offsets = [24, 96], sizes = [1, 96], strides = [1, 1]} : vector<32x192xf32> to vector<1x96xf32>
    %529 = tpu.concatenate %525, %526, %527, %528 in 0 : vector<1x96xf32>, vector<1x96xf32>, vector<1x96xf32>, vector<1x96xf32> -> vector<4x96xf32>
    %cst_96 = arith.constant dense<0.000000e+00> : vector<4x96xf32>
    %530 = tpu.matmul %524, %283, %cst_96 {dimension_numbers = #tpu.dot_dimension_numbers<[1], [0], [0], [1], [0, 0, 1, 1], [], []>} : vector<4x64xf32>, vector<64x96xf32>, vector<4x96xf32> -> vector<4x96xf32>
    %531 = arith.addf %530, %19 : vector<4x96xf32>
    %532 = vector.extract_strided_slice %524 {offsets = [0, 0], sizes = [4, 32], strides = [1, 1]} : vector<4x64xf32> to vector<4x32xf32>
    %533 = vector.extract_strided_slice %524 {offsets = [0, 32], sizes = [4, 32], strides = [1, 1]} : vector<4x64xf32> to vector<4x32xf32>
    %534 = arith.addf %532, %533 : vector<4x32xf32>
    %535 = vector.extract_strided_slice %529 {offsets = [0, 0], sizes = [4, 64], strides = [1, 1]} : vector<4x96xf32> to vector<4x64xf32>
    %536 = vector.extract_strided_slice %531 {offsets = [0, 0], sizes = [4, 64], strides = [1, 1]} : vector<4x96xf32> to vector<4x64xf32>
    %537 = arith.addf %535, %536 : vector<4x64xf32>
    %538 = arith.negf %537 : vector<4x64xf32>
    %539 = math.exp %538 : vector<4x64xf32>
    %cst_97 = arith.constant 1.000000e+00 : f32
    %540 = vector.broadcast %cst_97 : f32 to vector<4x64xf32>
    %541 = arith.addf %540, %539 : vector<4x64xf32>
    %542 = arith.divf %540, %541 : vector<4x64xf32>
    %543 = vector.extract_strided_slice %529 {offsets = [0, 64], sizes = [4, 32], strides = [1, 1]} : vector<4x96xf32> to vector<4x32xf32>
    %544 = vector.extract_strided_slice %542 {offsets = [0, 0], sizes = [4, 32], strides = [1, 1]} : vector<4x64xf32> to vector<4x32xf32>
    %545 = vector.extract_strided_slice %531 {offsets = [0, 64], sizes = [4, 32], strides = [1, 1]} : vector<4x96xf32> to vector<4x32xf32>
    %546 = arith.mulf %544, %545 : vector<4x32xf32>
    %547 = arith.addf %543, %546 : vector<4x32xf32>
    %548 = math.tanh %547 : vector<4x32xf32>
    %549 = vector.extract_strided_slice %542 {offsets = [0, 32], sizes = [4, 32], strides = [1, 1]} : vector<4x64xf32> to vector<4x32xf32>
    %cst_98 = arith.constant 1.000000e+00 : f32
    %550 = vector.broadcast %cst_98 : f32 to vector<4x32xf32>
    %551 = arith.subf %550, %549 : vector<4x32xf32>
    %552 = arith.mulf %551, %548 : vector<4x32xf32>
    %553 = arith.mulf %549, %534 : vector<4x32xf32>
    %554 = arith.addf %552, %553 : vector<4x32xf32>
    %555 = vector.broadcast %280 : vector<4x1xf32> to vector<4x32xf32>
    %556 = arith.mulf %554, %555 : vector<4x32xf32>
    %557 = vector.broadcast %282 : vector<4x1xf32> to vector<4x32xf32>
    %558 = arith.mulf %554, %557 : vector<4x32xf32>
    %559 = tpu.concatenate %556, %558 in 1 : vector<4x32xf32>, vector<4x32xf32> -> vector<4x64xf32>
    %560 = vector.extract_strided_slice %275 {offsets = [8, 0], sizes = [1, 96], strides = [1, 1]} : vector<32x192xf32> to vector<1x96xf32>
    %561 = vector.extract_strided_slice %275 {offsets = [24, 0], sizes = [1, 96], strides = [1, 1]} : vector<32x192xf32> to vector<1x96xf32>
    %562 = vector.extract_strided_slice %275 {offsets = [7, 96], sizes = [1, 96], strides = [1, 1]} : vector<32x192xf32> to vector<1x96xf32>
    %563 = vector.extract_strided_slice %275 {offsets = [23, 96], sizes = [1, 96], strides = [1, 1]} : vector<32x192xf32> to vector<1x96xf32>
    %564 = tpu.concatenate %560, %561, %562, %563 in 0 : vector<1x96xf32>, vector<1x96xf32>, vector<1x96xf32>, vector<1x96xf32> -> vector<4x96xf32>
    %cst_99 = arith.constant dense<0.000000e+00> : vector<4x96xf32>
    %565 = tpu.matmul %559, %283, %cst_99 {dimension_numbers = #tpu.dot_dimension_numbers<[1], [0], [0], [1], [0, 0, 1, 1], [], []>} : vector<4x64xf32>, vector<64x96xf32>, vector<4x96xf32> -> vector<4x96xf32>
    %566 = arith.addf %565, %19 : vector<4x96xf32>
    %567 = vector.extract_strided_slice %559 {offsets = [0, 0], sizes = [4, 32], strides = [1, 1]} : vector<4x64xf32> to vector<4x32xf32>
    %568 = vector.extract_strided_slice %559 {offsets = [0, 32], sizes = [4, 32], strides = [1, 1]} : vector<4x64xf32> to vector<4x32xf32>
    %569 = arith.addf %567, %568 : vector<4x32xf32>
    %570 = vector.extract_strided_slice %564 {offsets = [0, 0], sizes = [4, 64], strides = [1, 1]} : vector<4x96xf32> to vector<4x64xf32>
    %571 = vector.extract_strided_slice %566 {offsets = [0, 0], sizes = [4, 64], strides = [1, 1]} : vector<4x96xf32> to vector<4x64xf32>
    %572 = arith.addf %570, %571 : vector<4x64xf32>
    %573 = arith.negf %572 : vector<4x64xf32>
    %574 = math.exp %573 : vector<4x64xf32>
    %cst_100 = arith.constant 1.000000e+00 : f32
    %575 = vector.broadcast %cst_100 : f32 to vector<4x64xf32>
    %576 = arith.addf %575, %574 : vector<4x64xf32>
    %577 = arith.divf %575, %576 : vector<4x64xf32>
    %578 = vector.extract_strided_slice %564 {offsets = [0, 64], sizes = [4, 32], strides = [1, 1]} : vector<4x96xf32> to vector<4x32xf32>
    %579 = vector.extract_strided_slice %577 {offsets = [0, 0], sizes = [4, 32], strides = [1, 1]} : vector<4x64xf32> to vector<4x32xf32>
    %580 = vector.extract_strided_slice %566 {offsets = [0, 64], sizes = [4, 32], strides = [1, 1]} : vector<4x96xf32> to vector<4x32xf32>
    %581 = arith.mulf %579, %580 : vector<4x32xf32>
    %582 = arith.addf %578, %581 : vector<4x32xf32>
    %583 = math.tanh %582 : vector<4x32xf32>
    %584 = vector.extract_strided_slice %577 {offsets = [0, 32], sizes = [4, 32], strides = [1, 1]} : vector<4x64xf32> to vector<4x32xf32>
    %cst_101 = arith.constant 1.000000e+00 : f32
    %585 = vector.broadcast %cst_101 : f32 to vector<4x32xf32>
    %586 = arith.subf %585, %584 : vector<4x32xf32>
    %587 = arith.mulf %586, %583 : vector<4x32xf32>
    %588 = arith.mulf %584, %569 : vector<4x32xf32>
    %589 = arith.addf %587, %588 : vector<4x32xf32>
    %590 = vector.broadcast %280 : vector<4x1xf32> to vector<4x32xf32>
    %591 = arith.mulf %589, %590 : vector<4x32xf32>
    %592 = vector.broadcast %282 : vector<4x1xf32> to vector<4x32xf32>
    %593 = arith.mulf %589, %592 : vector<4x32xf32>
    %594 = tpu.concatenate %591, %593 in 1 : vector<4x32xf32>, vector<4x32xf32> -> vector<4x64xf32>
    %595 = vector.extract_strided_slice %275 {offsets = [9, 0], sizes = [1, 96], strides = [1, 1]} : vector<32x192xf32> to vector<1x96xf32>
    %596 = vector.extract_strided_slice %275 {offsets = [25, 0], sizes = [1, 96], strides = [1, 1]} : vector<32x192xf32> to vector<1x96xf32>
    %597 = vector.extract_strided_slice %275 {offsets = [6, 96], sizes = [1, 96], strides = [1, 1]} : vector<32x192xf32> to vector<1x96xf32>
    %598 = vector.extract_strided_slice %275 {offsets = [22, 96], sizes = [1, 96], strides = [1, 1]} : vector<32x192xf32> to vector<1x96xf32>
    %599 = tpu.concatenate %595, %596, %597, %598 in 0 : vector<1x96xf32>, vector<1x96xf32>, vector<1x96xf32>, vector<1x96xf32> -> vector<4x96xf32>
    %cst_102 = arith.constant dense<0.000000e+00> : vector<4x96xf32>
    %600 = tpu.matmul %594, %283, %cst_102 {dimension_numbers = #tpu.dot_dimension_numbers<[1], [0], [0], [1], [0, 0, 1, 1], [], []>} : vector<4x64xf32>, vector<64x96xf32>, vector<4x96xf32> -> vector<4x96xf32>
    %601 = arith.addf %600, %19 : vector<4x96xf32>
    %602 = vector.extract_strided_slice %594 {offsets = [0, 0], sizes = [4, 32], strides = [1, 1]} : vector<4x64xf32> to vector<4x32xf32>
    %603 = vector.extract_strided_slice %594 {offsets = [0, 32], sizes = [4, 32], strides = [1, 1]} : vector<4x64xf32> to vector<4x32xf32>
    %604 = arith.addf %602, %603 : vector<4x32xf32>
    %605 = vector.extract_strided_slice %599 {offsets = [0, 0], sizes = [4, 64], strides = [1, 1]} : vector<4x96xf32> to vector<4x64xf32>
    %606 = vector.extract_strided_slice %601 {offsets = [0, 0], sizes = [4, 64], strides = [1, 1]} : vector<4x96xf32> to vector<4x64xf32>
    %607 = arith.addf %605, %606 : vector<4x64xf32>
    %608 = arith.negf %607 : vector<4x64xf32>
    %609 = math.exp %608 : vector<4x64xf32>
    %cst_103 = arith.constant 1.000000e+00 : f32
    %610 = vector.broadcast %cst_103 : f32 to vector<4x64xf32>
    %611 = arith.addf %610, %609 : vector<4x64xf32>
    %612 = arith.divf %610, %611 : vector<4x64xf32>
    %613 = vector.extract_strided_slice %599 {offsets = [0, 64], sizes = [4, 32], strides = [1, 1]} : vector<4x96xf32> to vector<4x32xf32>
    %614 = vector.extract_strided_slice %612 {offsets = [0, 0], sizes = [4, 32], strides = [1, 1]} : vector<4x64xf32> to vector<4x32xf32>
    %615 = vector.extract_strided_slice %601 {offsets = [0, 64], sizes = [4, 32], strides = [1, 1]} : vector<4x96xf32> to vector<4x32xf32>
    %616 = arith.mulf %614, %615 : vector<4x32xf32>
    %617 = arith.addf %613, %616 : vector<4x32xf32>
    %618 = math.tanh %617 : vector<4x32xf32>
    %619 = vector.extract_strided_slice %612 {offsets = [0, 32], sizes = [4, 32], strides = [1, 1]} : vector<4x64xf32> to vector<4x32xf32>
    %cst_104 = arith.constant 1.000000e+00 : f32
    %620 = vector.broadcast %cst_104 : f32 to vector<4x32xf32>
    %621 = arith.subf %620, %619 : vector<4x32xf32>
    %622 = arith.mulf %621, %618 : vector<4x32xf32>
    %623 = arith.mulf %619, %604 : vector<4x32xf32>
    %624 = arith.addf %622, %623 : vector<4x32xf32>
    %625 = vector.broadcast %280 : vector<4x1xf32> to vector<4x32xf32>
    %626 = arith.mulf %624, %625 : vector<4x32xf32>
    %627 = vector.broadcast %282 : vector<4x1xf32> to vector<4x32xf32>
    %628 = arith.mulf %624, %627 : vector<4x32xf32>
    %629 = tpu.concatenate %626, %628 in 1 : vector<4x32xf32>, vector<4x32xf32> -> vector<4x64xf32>
    %630 = vector.extract_strided_slice %275 {offsets = [10, 0], sizes = [1, 96], strides = [1, 1]} : vector<32x192xf32> to vector<1x96xf32>
    %631 = vector.extract_strided_slice %275 {offsets = [26, 0], sizes = [1, 96], strides = [1, 1]} : vector<32x192xf32> to vector<1x96xf32>
    %632 = vector.extract_strided_slice %275 {offsets = [5, 96], sizes = [1, 96], strides = [1, 1]} : vector<32x192xf32> to vector<1x96xf32>
    %633 = vector.extract_strided_slice %275 {offsets = [21, 96], sizes = [1, 96], strides = [1, 1]} : vector<32x192xf32> to vector<1x96xf32>
    %634 = tpu.concatenate %630, %631, %632, %633 in 0 : vector<1x96xf32>, vector<1x96xf32>, vector<1x96xf32>, vector<1x96xf32> -> vector<4x96xf32>
    %cst_105 = arith.constant dense<0.000000e+00> : vector<4x96xf32>
    %635 = tpu.matmul %629, %283, %cst_105 {dimension_numbers = #tpu.dot_dimension_numbers<[1], [0], [0], [1], [0, 0, 1, 1], [], []>} : vector<4x64xf32>, vector<64x96xf32>, vector<4x96xf32> -> vector<4x96xf32>
    %636 = arith.addf %635, %19 : vector<4x96xf32>
    %637 = vector.extract_strided_slice %629 {offsets = [0, 0], sizes = [4, 32], strides = [1, 1]} : vector<4x64xf32> to vector<4x32xf32>
    %638 = vector.extract_strided_slice %629 {offsets = [0, 32], sizes = [4, 32], strides = [1, 1]} : vector<4x64xf32> to vector<4x32xf32>
    %639 = arith.addf %637, %638 : vector<4x32xf32>
    %640 = vector.extract_strided_slice %634 {offsets = [0, 0], sizes = [4, 64], strides = [1, 1]} : vector<4x96xf32> to vector<4x64xf32>
    %641 = vector.extract_strided_slice %636 {offsets = [0, 0], sizes = [4, 64], strides = [1, 1]} : vector<4x96xf32> to vector<4x64xf32>
    %642 = arith.addf %640, %641 : vector<4x64xf32>
    %643 = arith.negf %642 : vector<4x64xf32>
    %644 = math.exp %643 : vector<4x64xf32>
    %cst_106 = arith.constant 1.000000e+00 : f32
    %645 = vector.broadcast %cst_106 : f32 to vector<4x64xf32>
    %646 = arith.addf %645, %644 : vector<4x64xf32>
    %647 = arith.divf %645, %646 : vector<4x64xf32>
    %648 = vector.extract_strided_slice %634 {offsets = [0, 64], sizes = [4, 32], strides = [1, 1]} : vector<4x96xf32> to vector<4x32xf32>
    %649 = vector.extract_strided_slice %647 {offsets = [0, 0], sizes = [4, 32], strides = [1, 1]} : vector<4x64xf32> to vector<4x32xf32>
    %650 = vector.extract_strided_slice %636 {offsets = [0, 64], sizes = [4, 32], strides = [1, 1]} : vector<4x96xf32> to vector<4x32xf32>
    %651 = arith.mulf %649, %650 : vector<4x32xf32>
    %652 = arith.addf %648, %651 : vector<4x32xf32>
    %653 = math.tanh %652 : vector<4x32xf32>
    %654 = vector.extract_strided_slice %647 {offsets = [0, 32], sizes = [4, 32], strides = [1, 1]} : vector<4x64xf32> to vector<4x32xf32>
    %cst_107 = arith.constant 1.000000e+00 : f32
    %655 = vector.broadcast %cst_107 : f32 to vector<4x32xf32>
    %656 = arith.subf %655, %654 : vector<4x32xf32>
    %657 = arith.mulf %656, %653 : vector<4x32xf32>
    %658 = arith.mulf %654, %639 : vector<4x32xf32>
    %659 = arith.addf %657, %658 : vector<4x32xf32>
    %660 = vector.broadcast %280 : vector<4x1xf32> to vector<4x32xf32>
    %661 = arith.mulf %659, %660 : vector<4x32xf32>
    %662 = vector.broadcast %282 : vector<4x1xf32> to vector<4x32xf32>
    %663 = arith.mulf %659, %662 : vector<4x32xf32>
    %664 = tpu.concatenate %661, %663 in 1 : vector<4x32xf32>, vector<4x32xf32> -> vector<4x64xf32>
    %665 = vector.extract_strided_slice %275 {offsets = [11, 0], sizes = [1, 96], strides = [1, 1]} : vector<32x192xf32> to vector<1x96xf32>
    %666 = vector.extract_strided_slice %275 {offsets = [27, 0], sizes = [1, 96], strides = [1, 1]} : vector<32x192xf32> to vector<1x96xf32>
    %667 = vector.extract_strided_slice %275 {offsets = [4, 96], sizes = [1, 96], strides = [1, 1]} : vector<32x192xf32> to vector<1x96xf32>
    %668 = vector.extract_strided_slice %275 {offsets = [20, 96], sizes = [1, 96], strides = [1, 1]} : vector<32x192xf32> to vector<1x96xf32>
    %669 = tpu.concatenate %665, %666, %667, %668 in 0 : vector<1x96xf32>, vector<1x96xf32>, vector<1x96xf32>, vector<1x96xf32> -> vector<4x96xf32>
    %cst_108 = arith.constant dense<0.000000e+00> : vector<4x96xf32>
    %670 = tpu.matmul %664, %283, %cst_108 {dimension_numbers = #tpu.dot_dimension_numbers<[1], [0], [0], [1], [0, 0, 1, 1], [], []>} : vector<4x64xf32>, vector<64x96xf32>, vector<4x96xf32> -> vector<4x96xf32>
    %671 = arith.addf %670, %19 : vector<4x96xf32>
    %672 = vector.extract_strided_slice %664 {offsets = [0, 0], sizes = [4, 32], strides = [1, 1]} : vector<4x64xf32> to vector<4x32xf32>
    %673 = vector.extract_strided_slice %664 {offsets = [0, 32], sizes = [4, 32], strides = [1, 1]} : vector<4x64xf32> to vector<4x32xf32>
    %674 = arith.addf %672, %673 : vector<4x32xf32>
    %675 = vector.extract_strided_slice %669 {offsets = [0, 0], sizes = [4, 64], strides = [1, 1]} : vector<4x96xf32> to vector<4x64xf32>
    %676 = vector.extract_strided_slice %671 {offsets = [0, 0], sizes = [4, 64], strides = [1, 1]} : vector<4x96xf32> to vector<4x64xf32>
    %677 = arith.addf %675, %676 : vector<4x64xf32>
    %678 = arith.negf %677 : vector<4x64xf32>
    %679 = math.exp %678 : vector<4x64xf32>
    %cst_109 = arith.constant 1.000000e+00 : f32
    %680 = vector.broadcast %cst_109 : f32 to vector<4x64xf32>
    %681 = arith.addf %680, %679 : vector<4x64xf32>
    %682 = arith.divf %680, %681 : vector<4x64xf32>
    %683 = vector.extract_strided_slice %669 {offsets = [0, 64], sizes = [4, 32], strides = [1, 1]} : vector<4x96xf32> to vector<4x32xf32>
    %684 = vector.extract_strided_slice %682 {offsets = [0, 0], sizes = [4, 32], strides = [1, 1]} : vector<4x64xf32> to vector<4x32xf32>
    %685 = vector.extract_strided_slice %671 {offsets = [0, 64], sizes = [4, 32], strides = [1, 1]} : vector<4x96xf32> to vector<4x32xf32>
    %686 = arith.mulf %684, %685 : vector<4x32xf32>
    %687 = arith.addf %683, %686 : vector<4x32xf32>
    %688 = math.tanh %687 : vector<4x32xf32>
    %689 = vector.extract_strided_slice %682 {offsets = [0, 32], sizes = [4, 32], strides = [1, 1]} : vector<4x64xf32> to vector<4x32xf32>
    %cst_110 = arith.constant 1.000000e+00 : f32
    %690 = vector.broadcast %cst_110 : f32 to vector<4x32xf32>
    %691 = arith.subf %690, %689 : vector<4x32xf32>
    %692 = arith.mulf %691, %688 : vector<4x32xf32>
    %693 = arith.mulf %689, %674 : vector<4x32xf32>
    %694 = arith.addf %692, %693 : vector<4x32xf32>
    %695 = vector.broadcast %280 : vector<4x1xf32> to vector<4x32xf32>
    %696 = arith.mulf %694, %695 : vector<4x32xf32>
    %697 = vector.broadcast %282 : vector<4x1xf32> to vector<4x32xf32>
    %698 = arith.mulf %694, %697 : vector<4x32xf32>
    %699 = tpu.concatenate %696, %698 in 1 : vector<4x32xf32>, vector<4x32xf32> -> vector<4x64xf32>
    %700 = vector.extract_strided_slice %275 {offsets = [12, 0], sizes = [1, 96], strides = [1, 1]} : vector<32x192xf32> to vector<1x96xf32>
    %701 = vector.extract_strided_slice %275 {offsets = [28, 0], sizes = [1, 96], strides = [1, 1]} : vector<32x192xf32> to vector<1x96xf32>
    %702 = vector.extract_strided_slice %275 {offsets = [3, 96], sizes = [1, 96], strides = [1, 1]} : vector<32x192xf32> to vector<1x96xf32>
    %703 = vector.extract_strided_slice %275 {offsets = [19, 96], sizes = [1, 96], strides = [1, 1]} : vector<32x192xf32> to vector<1x96xf32>
    %704 = tpu.concatenate %700, %701, %702, %703 in 0 : vector<1x96xf32>, vector<1x96xf32>, vector<1x96xf32>, vector<1x96xf32> -> vector<4x96xf32>
    %cst_111 = arith.constant dense<0.000000e+00> : vector<4x96xf32>
    %705 = tpu.matmul %699, %283, %cst_111 {dimension_numbers = #tpu.dot_dimension_numbers<[1], [0], [0], [1], [0, 0, 1, 1], [], []>} : vector<4x64xf32>, vector<64x96xf32>, vector<4x96xf32> -> vector<4x96xf32>
    %706 = arith.addf %705, %19 : vector<4x96xf32>
    %707 = vector.extract_strided_slice %699 {offsets = [0, 0], sizes = [4, 32], strides = [1, 1]} : vector<4x64xf32> to vector<4x32xf32>
    %708 = vector.extract_strided_slice %699 {offsets = [0, 32], sizes = [4, 32], strides = [1, 1]} : vector<4x64xf32> to vector<4x32xf32>
    %709 = arith.addf %707, %708 : vector<4x32xf32>
    %710 = vector.extract_strided_slice %704 {offsets = [0, 0], sizes = [4, 64], strides = [1, 1]} : vector<4x96xf32> to vector<4x64xf32>
    %711 = vector.extract_strided_slice %706 {offsets = [0, 0], sizes = [4, 64], strides = [1, 1]} : vector<4x96xf32> to vector<4x64xf32>
    %712 = arith.addf %710, %711 : vector<4x64xf32>
    %713 = arith.negf %712 : vector<4x64xf32>
    %714 = math.exp %713 : vector<4x64xf32>
    %cst_112 = arith.constant 1.000000e+00 : f32
    %715 = vector.broadcast %cst_112 : f32 to vector<4x64xf32>
    %716 = arith.addf %715, %714 : vector<4x64xf32>
    %717 = arith.divf %715, %716 : vector<4x64xf32>
    %718 = vector.extract_strided_slice %704 {offsets = [0, 64], sizes = [4, 32], strides = [1, 1]} : vector<4x96xf32> to vector<4x32xf32>
    %719 = vector.extract_strided_slice %717 {offsets = [0, 0], sizes = [4, 32], strides = [1, 1]} : vector<4x64xf32> to vector<4x32xf32>
    %720 = vector.extract_strided_slice %706 {offsets = [0, 64], sizes = [4, 32], strides = [1, 1]} : vector<4x96xf32> to vector<4x32xf32>
    %721 = arith.mulf %719, %720 : vector<4x32xf32>
    %722 = arith.addf %718, %721 : vector<4x32xf32>
    %723 = math.tanh %722 : vector<4x32xf32>
    %724 = vector.extract_strided_slice %717 {offsets = [0, 32], sizes = [4, 32], strides = [1, 1]} : vector<4x64xf32> to vector<4x32xf32>
    %cst_113 = arith.constant 1.000000e+00 : f32
    %725 = vector.broadcast %cst_113 : f32 to vector<4x32xf32>
    %726 = arith.subf %725, %724 : vector<4x32xf32>
    %727 = arith.mulf %726, %723 : vector<4x32xf32>
    %728 = arith.mulf %724, %709 : vector<4x32xf32>
    %729 = arith.addf %727, %728 : vector<4x32xf32>
    %730 = vector.broadcast %280 : vector<4x1xf32> to vector<4x32xf32>
    %731 = arith.mulf %729, %730 : vector<4x32xf32>
    %732 = vector.broadcast %282 : vector<4x1xf32> to vector<4x32xf32>
    %733 = arith.mulf %729, %732 : vector<4x32xf32>
    %734 = tpu.concatenate %731, %733 in 1 : vector<4x32xf32>, vector<4x32xf32> -> vector<4x64xf32>
    %735 = vector.extract_strided_slice %275 {offsets = [13, 0], sizes = [1, 96], strides = [1, 1]} : vector<32x192xf32> to vector<1x96xf32>
    %736 = vector.extract_strided_slice %275 {offsets = [29, 0], sizes = [1, 96], strides = [1, 1]} : vector<32x192xf32> to vector<1x96xf32>
    %737 = vector.extract_strided_slice %275 {offsets = [2, 96], sizes = [1, 96], strides = [1, 1]} : vector<32x192xf32> to vector<1x96xf32>
    %738 = vector.extract_strided_slice %275 {offsets = [18, 96], sizes = [1, 96], strides = [1, 1]} : vector<32x192xf32> to vector<1x96xf32>
    %739 = tpu.concatenate %735, %736, %737, %738 in 0 : vector<1x96xf32>, vector<1x96xf32>, vector<1x96xf32>, vector<1x96xf32> -> vector<4x96xf32>
    %cst_114 = arith.constant dense<0.000000e+00> : vector<4x96xf32>
    %740 = tpu.matmul %734, %283, %cst_114 {dimension_numbers = #tpu.dot_dimension_numbers<[1], [0], [0], [1], [0, 0, 1, 1], [], []>} : vector<4x64xf32>, vector<64x96xf32>, vector<4x96xf32> -> vector<4x96xf32>
    %741 = arith.addf %740, %19 : vector<4x96xf32>
    %742 = vector.extract_strided_slice %734 {offsets = [0, 0], sizes = [4, 32], strides = [1, 1]} : vector<4x64xf32> to vector<4x32xf32>
    %743 = vector.extract_strided_slice %734 {offsets = [0, 32], sizes = [4, 32], strides = [1, 1]} : vector<4x64xf32> to vector<4x32xf32>
    %744 = arith.addf %742, %743 : vector<4x32xf32>
    %745 = vector.extract_strided_slice %739 {offsets = [0, 0], sizes = [4, 64], strides = [1, 1]} : vector<4x96xf32> to vector<4x64xf32>
    %746 = vector.extract_strided_slice %741 {offsets = [0, 0], sizes = [4, 64], strides = [1, 1]} : vector<4x96xf32> to vector<4x64xf32>
    %747 = arith.addf %745, %746 : vector<4x64xf32>
    %748 = arith.negf %747 : vector<4x64xf32>
    %749 = math.exp %748 : vector<4x64xf32>
    %cst_115 = arith.constant 1.000000e+00 : f32
    %750 = vector.broadcast %cst_115 : f32 to vector<4x64xf32>
    %751 = arith.addf %750, %749 : vector<4x64xf32>
    %752 = arith.divf %750, %751 : vector<4x64xf32>
    %753 = vector.extract_strided_slice %739 {offsets = [0, 64], sizes = [4, 32], strides = [1, 1]} : vector<4x96xf32> to vector<4x32xf32>
    %754 = vector.extract_strided_slice %752 {offsets = [0, 0], sizes = [4, 32], strides = [1, 1]} : vector<4x64xf32> to vector<4x32xf32>
    %755 = vector.extract_strided_slice %741 {offsets = [0, 64], sizes = [4, 32], strides = [1, 1]} : vector<4x96xf32> to vector<4x32xf32>
    %756 = arith.mulf %754, %755 : vector<4x32xf32>
    %757 = arith.addf %753, %756 : vector<4x32xf32>
    %758 = math.tanh %757 : vector<4x32xf32>
    %759 = vector.extract_strided_slice %752 {offsets = [0, 32], sizes = [4, 32], strides = [1, 1]} : vector<4x64xf32> to vector<4x32xf32>
    %cst_116 = arith.constant 1.000000e+00 : f32
    %760 = vector.broadcast %cst_116 : f32 to vector<4x32xf32>
    %761 = arith.subf %760, %759 : vector<4x32xf32>
    %762 = arith.mulf %761, %758 : vector<4x32xf32>
    %763 = arith.mulf %759, %744 : vector<4x32xf32>
    %764 = arith.addf %762, %763 : vector<4x32xf32>
    %765 = vector.broadcast %280 : vector<4x1xf32> to vector<4x32xf32>
    %766 = arith.mulf %764, %765 : vector<4x32xf32>
    %767 = vector.broadcast %282 : vector<4x1xf32> to vector<4x32xf32>
    %768 = arith.mulf %764, %767 : vector<4x32xf32>
    %769 = tpu.concatenate %766, %768 in 1 : vector<4x32xf32>, vector<4x32xf32> -> vector<4x64xf32>
    %770 = vector.extract_strided_slice %275 {offsets = [14, 0], sizes = [1, 96], strides = [1, 1]} : vector<32x192xf32> to vector<1x96xf32>
    %771 = vector.extract_strided_slice %275 {offsets = [30, 0], sizes = [1, 96], strides = [1, 1]} : vector<32x192xf32> to vector<1x96xf32>
    %772 = vector.extract_strided_slice %275 {offsets = [1, 96], sizes = [1, 96], strides = [1, 1]} : vector<32x192xf32> to vector<1x96xf32>
    %773 = vector.extract_strided_slice %275 {offsets = [17, 96], sizes = [1, 96], strides = [1, 1]} : vector<32x192xf32> to vector<1x96xf32>
    %774 = tpu.concatenate %770, %771, %772, %773 in 0 : vector<1x96xf32>, vector<1x96xf32>, vector<1x96xf32>, vector<1x96xf32> -> vector<4x96xf32>
    %cst_117 = arith.constant dense<0.000000e+00> : vector<4x96xf32>
    %775 = tpu.matmul %769, %283, %cst_117 {dimension_numbers = #tpu.dot_dimension_numbers<[1], [0], [0], [1], [0, 0, 1, 1], [], []>} : vector<4x64xf32>, vector<64x96xf32>, vector<4x96xf32> -> vector<4x96xf32>
    %776 = arith.addf %775, %19 : vector<4x96xf32>
    %777 = vector.extract_strided_slice %769 {offsets = [0, 0], sizes = [4, 32], strides = [1, 1]} : vector<4x64xf32> to vector<4x32xf32>
    %778 = vector.extract_strided_slice %769 {offsets = [0, 32], sizes = [4, 32], strides = [1, 1]} : vector<4x64xf32> to vector<4x32xf32>
    %779 = arith.addf %777, %778 : vector<4x32xf32>
    %780 = vector.extract_strided_slice %774 {offsets = [0, 0], sizes = [4, 64], strides = [1, 1]} : vector<4x96xf32> to vector<4x64xf32>
    %781 = vector.extract_strided_slice %776 {offsets = [0, 0], sizes = [4, 64], strides = [1, 1]} : vector<4x96xf32> to vector<4x64xf32>
    %782 = arith.addf %780, %781 : vector<4x64xf32>
    %783 = arith.negf %782 : vector<4x64xf32>
    %784 = math.exp %783 : vector<4x64xf32>
    %cst_118 = arith.constant 1.000000e+00 : f32
    %785 = vector.broadcast %cst_118 : f32 to vector<4x64xf32>
    %786 = arith.addf %785, %784 : vector<4x64xf32>
    %787 = arith.divf %785, %786 : vector<4x64xf32>
    %788 = vector.extract_strided_slice %774 {offsets = [0, 64], sizes = [4, 32], strides = [1, 1]} : vector<4x96xf32> to vector<4x32xf32>
    %789 = vector.extract_strided_slice %787 {offsets = [0, 0], sizes = [4, 32], strides = [1, 1]} : vector<4x64xf32> to vector<4x32xf32>
    %790 = vector.extract_strided_slice %776 {offsets = [0, 64], sizes = [4, 32], strides = [1, 1]} : vector<4x96xf32> to vector<4x32xf32>
    %791 = arith.mulf %789, %790 : vector<4x32xf32>
    %792 = arith.addf %788, %791 : vector<4x32xf32>
    %793 = math.tanh %792 : vector<4x32xf32>
    %794 = vector.extract_strided_slice %787 {offsets = [0, 32], sizes = [4, 32], strides = [1, 1]} : vector<4x64xf32> to vector<4x32xf32>
    %cst_119 = arith.constant 1.000000e+00 : f32
    %795 = vector.broadcast %cst_119 : f32 to vector<4x32xf32>
    %796 = arith.subf %795, %794 : vector<4x32xf32>
    %797 = arith.mulf %796, %793 : vector<4x32xf32>
    %798 = arith.mulf %794, %779 : vector<4x32xf32>
    %799 = arith.addf %797, %798 : vector<4x32xf32>
    %800 = vector.broadcast %280 : vector<4x1xf32> to vector<4x32xf32>
    %801 = arith.mulf %799, %800 : vector<4x32xf32>
    %802 = vector.broadcast %282 : vector<4x1xf32> to vector<4x32xf32>
    %803 = arith.mulf %799, %802 : vector<4x32xf32>
    %804 = tpu.concatenate %801, %803 in 1 : vector<4x32xf32>, vector<4x32xf32> -> vector<4x64xf32>
    %805 = vector.extract_strided_slice %275 {offsets = [15, 0], sizes = [1, 96], strides = [1, 1]} : vector<32x192xf32> to vector<1x96xf32>
    %806 = vector.extract_strided_slice %275 {offsets = [31, 0], sizes = [1, 96], strides = [1, 1]} : vector<32x192xf32> to vector<1x96xf32>
    %807 = vector.extract_strided_slice %275 {offsets = [0, 96], sizes = [1, 96], strides = [1, 1]} : vector<32x192xf32> to vector<1x96xf32>
    %808 = vector.extract_strided_slice %275 {offsets = [16, 96], sizes = [1, 96], strides = [1, 1]} : vector<32x192xf32> to vector<1x96xf32>
    %809 = tpu.concatenate %805, %806, %807, %808 in 0 : vector<1x96xf32>, vector<1x96xf32>, vector<1x96xf32>, vector<1x96xf32> -> vector<4x96xf32>
    %cst_120 = arith.constant dense<0.000000e+00> : vector<4x96xf32>
    %810 = tpu.matmul %804, %283, %cst_120 {dimension_numbers = #tpu.dot_dimension_numbers<[1], [0], [0], [1], [0, 0, 1, 1], [], []>} : vector<4x64xf32>, vector<64x96xf32>, vector<4x96xf32> -> vector<4x96xf32>
    %811 = arith.addf %810, %19 : vector<4x96xf32>
    %812 = vector.extract_strided_slice %804 {offsets = [0, 0], sizes = [4, 32], strides = [1, 1]} : vector<4x64xf32> to vector<4x32xf32>
    %813 = vector.extract_strided_slice %804 {offsets = [0, 32], sizes = [4, 32], strides = [1, 1]} : vector<4x64xf32> to vector<4x32xf32>
    %814 = arith.addf %812, %813 : vector<4x32xf32>
    %815 = vector.extract_strided_slice %809 {offsets = [0, 0], sizes = [4, 64], strides = [1, 1]} : vector<4x96xf32> to vector<4x64xf32>
    %816 = vector.extract_strided_slice %811 {offsets = [0, 0], sizes = [4, 64], strides = [1, 1]} : vector<4x96xf32> to vector<4x64xf32>
    %817 = arith.addf %815, %816 : vector<4x64xf32>
    %818 = arith.negf %817 : vector<4x64xf32>
    %819 = math.exp %818 : vector<4x64xf32>
    %cst_121 = arith.constant 1.000000e+00 : f32
    %820 = vector.broadcast %cst_121 : f32 to vector<4x64xf32>
    %821 = arith.addf %820, %819 : vector<4x64xf32>
    %822 = arith.divf %820, %821 : vector<4x64xf32>
    %823 = vector.extract_strided_slice %809 {offsets = [0, 64], sizes = [4, 32], strides = [1, 1]} : vector<4x96xf32> to vector<4x32xf32>
    %824 = vector.extract_strided_slice %822 {offsets = [0, 0], sizes = [4, 32], strides = [1, 1]} : vector<4x64xf32> to vector<4x32xf32>
    %825 = vector.extract_strided_slice %811 {offsets = [0, 64], sizes = [4, 32], strides = [1, 1]} : vector<4x96xf32> to vector<4x32xf32>
    %826 = arith.mulf %824, %825 : vector<4x32xf32>
    %827 = arith.addf %823, %826 : vector<4x32xf32>
    %828 = math.tanh %827 : vector<4x32xf32>
    %829 = vector.extract_strided_slice %822 {offsets = [0, 32], sizes = [4, 32], strides = [1, 1]} : vector<4x64xf32> to vector<4x32xf32>
    %cst_122 = arith.constant 1.000000e+00 : f32
    %830 = vector.broadcast %cst_122 : f32 to vector<4x32xf32>
    %831 = arith.subf %830, %829 : vector<4x32xf32>
    %832 = arith.mulf %831, %828 : vector<4x32xf32>
    %833 = arith.mulf %829, %814 : vector<4x32xf32>
    %834 = arith.addf %832, %833 : vector<4x32xf32>
    %835 = vector.extract_strided_slice %309 {offsets = [0, 0], sizes = [1, 32], strides = [1, 1]} : vector<4x32xf32> to vector<1x32xf32>
    %836 = vector.extract_strided_slice %344 {offsets = [0, 0], sizes = [1, 32], strides = [1, 1]} : vector<4x32xf32> to vector<1x32xf32>
    %837 = vector.extract_strided_slice %379 {offsets = [0, 0], sizes = [1, 32], strides = [1, 1]} : vector<4x32xf32> to vector<1x32xf32>
    %838 = vector.extract_strided_slice %414 {offsets = [0, 0], sizes = [1, 32], strides = [1, 1]} : vector<4x32xf32> to vector<1x32xf32>
    %839 = vector.extract_strided_slice %449 {offsets = [0, 0], sizes = [1, 32], strides = [1, 1]} : vector<4x32xf32> to vector<1x32xf32>
    %840 = vector.extract_strided_slice %484 {offsets = [0, 0], sizes = [1, 32], strides = [1, 1]} : vector<4x32xf32> to vector<1x32xf32>
    %841 = vector.extract_strided_slice %519 {offsets = [0, 0], sizes = [1, 32], strides = [1, 1]} : vector<4x32xf32> to vector<1x32xf32>
    %842 = vector.extract_strided_slice %554 {offsets = [0, 0], sizes = [1, 32], strides = [1, 1]} : vector<4x32xf32> to vector<1x32xf32>
    %843 = vector.extract_strided_slice %589 {offsets = [0, 0], sizes = [1, 32], strides = [1, 1]} : vector<4x32xf32> to vector<1x32xf32>
    %844 = vector.extract_strided_slice %624 {offsets = [0, 0], sizes = [1, 32], strides = [1, 1]} : vector<4x32xf32> to vector<1x32xf32>
    %845 = vector.extract_strided_slice %659 {offsets = [0, 0], sizes = [1, 32], strides = [1, 1]} : vector<4x32xf32> to vector<1x32xf32>
    %846 = vector.extract_strided_slice %694 {offsets = [0, 0], sizes = [1, 32], strides = [1, 1]} : vector<4x32xf32> to vector<1x32xf32>
    %847 = vector.extract_strided_slice %729 {offsets = [0, 0], sizes = [1, 32], strides = [1, 1]} : vector<4x32xf32> to vector<1x32xf32>
    %848 = vector.extract_strided_slice %764 {offsets = [0, 0], sizes = [1, 32], strides = [1, 1]} : vector<4x32xf32> to vector<1x32xf32>
    %849 = vector.extract_strided_slice %799 {offsets = [0, 0], sizes = [1, 32], strides = [1, 1]} : vector<4x32xf32> to vector<1x32xf32>
    %850 = vector.extract_strided_slice %834 {offsets = [0, 0], sizes = [1, 32], strides = [1, 1]} : vector<4x32xf32> to vector<1x32xf32>
    %851 = tpu.concatenate %835, %836, %837, %838, %839, %840, %841, %842, %843, %844, %845, %846, %847, %848, %849, %850 in 0 : vector<1x32xf32>, vector<1x32xf32>, vector<1x32xf32>, vector<1x32xf32>, vector<1x32xf32>, vector<1x32xf32>, vector<1x32xf32>, vector<1x32xf32>, vector<1x32xf32>, vector<1x32xf32>, vector<1x32xf32>, vector<1x32xf32>, vector<1x32xf32>, vector<1x32xf32>, vector<1x32xf32>, vector<1x32xf32> -> vector<16x32xf32>
    %852 = vector.extract_strided_slice %834 {offsets = [2, 0], sizes = [1, 32], strides = [1, 1]} : vector<4x32xf32> to vector<1x32xf32>
    %853 = vector.extract_strided_slice %799 {offsets = [2, 0], sizes = [1, 32], strides = [1, 1]} : vector<4x32xf32> to vector<1x32xf32>
    %854 = vector.extract_strided_slice %764 {offsets = [2, 0], sizes = [1, 32], strides = [1, 1]} : vector<4x32xf32> to vector<1x32xf32>
    %855 = vector.extract_strided_slice %729 {offsets = [2, 0], sizes = [1, 32], strides = [1, 1]} : vector<4x32xf32> to vector<1x32xf32>
    %856 = vector.extract_strided_slice %694 {offsets = [2, 0], sizes = [1, 32], strides = [1, 1]} : vector<4x32xf32> to vector<1x32xf32>
    %857 = vector.extract_strided_slice %659 {offsets = [2, 0], sizes = [1, 32], strides = [1, 1]} : vector<4x32xf32> to vector<1x32xf32>
    %858 = vector.extract_strided_slice %624 {offsets = [2, 0], sizes = [1, 32], strides = [1, 1]} : vector<4x32xf32> to vector<1x32xf32>
    %859 = vector.extract_strided_slice %589 {offsets = [2, 0], sizes = [1, 32], strides = [1, 1]} : vector<4x32xf32> to vector<1x32xf32>
    %860 = vector.extract_strided_slice %554 {offsets = [2, 0], sizes = [1, 32], strides = [1, 1]} : vector<4x32xf32> to vector<1x32xf32>
    %861 = vector.extract_strided_slice %519 {offsets = [2, 0], sizes = [1, 32], strides = [1, 1]} : vector<4x32xf32> to vector<1x32xf32>
    %862 = vector.extract_strided_slice %484 {offsets = [2, 0], sizes = [1, 32], strides = [1, 1]} : vector<4x32xf32> to vector<1x32xf32>
    %863 = vector.extract_strided_slice %449 {offsets = [2, 0], sizes = [1, 32], strides = [1, 1]} : vector<4x32xf32> to vector<1x32xf32>
    %864 = vector.extract_strided_slice %414 {offsets = [2, 0], sizes = [1, 32], strides = [1, 1]} : vector<4x32xf32> to vector<1x32xf32>
    %865 = vector.extract_strided_slice %379 {offsets = [2, 0], sizes = [1, 32], strides = [1, 1]} : vector<4x32xf32> to vector<1x32xf32>
    %866 = vector.extract_strided_slice %344 {offsets = [2, 0], sizes = [1, 32], strides = [1, 1]} : vector<4x32xf32> to vector<1x32xf32>
    %867 = vector.extract_strided_slice %309 {offsets = [2, 0], sizes = [1, 32], strides = [1, 1]} : vector<4x32xf32> to vector<1x32xf32>
    %868 = tpu.concatenate %852, %853, %854, %855, %856, %857, %858, %859, %860, %861, %862, %863, %864, %865, %866, %867 in 0 : vector<1x32xf32>, vector<1x32xf32>, vector<1x32xf32>, vector<1x32xf32>, vector<1x32xf32>, vector<1x32xf32>, vector<1x32xf32>, vector<1x32xf32>, vector<1x32xf32>, vector<1x32xf32>, vector<1x32xf32>, vector<1x32xf32>, vector<1x32xf32>, vector<1x32xf32>, vector<1x32xf32>, vector<1x32xf32> -> vector<16x32xf32>
    %869 = tpu.concatenate %851, %868 in 1 : vector<16x32xf32>, vector<16x32xf32> -> vector<16x64xf32>
    %870 = vector.extract_strided_slice %309 {offsets = [1, 0], sizes = [1, 32], strides = [1, 1]} : vector<4x32xf32> to vector<1x32xf32>
    %871 = vector.extract_strided_slice %344 {offsets = [1, 0], sizes = [1, 32], strides = [1, 1]} : vector<4x32xf32> to vector<1x32xf32>
    %872 = vector.extract_strided_slice %379 {offsets = [1, 0], sizes = [1, 32], strides = [1, 1]} : vector<4x32xf32> to vector<1x32xf32>
    %873 = vector.extract_strided_slice %414 {offsets = [1, 0], sizes = [1, 32], strides = [1, 1]} : vector<4x32xf32> to vector<1x32xf32>
    %874 = vector.extract_strided_slice %449 {offsets = [1, 0], sizes = [1, 32], strides = [1, 1]} : vector<4x32xf32> to vector<1x32xf32>
    %875 = vector.extract_strided_slice %484 {offsets = [1, 0], sizes = [1, 32], strides = [1, 1]} : vector<4x32xf32> to vector<1x32xf32>
    %876 = vector.extract_strided_slice %519 {offsets = [1, 0], sizes = [1, 32], strides = [1, 1]} : vector<4x32xf32> to vector<1x32xf32>
    %877 = vector.extract_strided_slice %554 {offsets = [1, 0], sizes = [1, 32], strides = [1, 1]} : vector<4x32xf32> to vector<1x32xf32>
    %878 = vector.extract_strided_slice %589 {offsets = [1, 0], sizes = [1, 32], strides = [1, 1]} : vector<4x32xf32> to vector<1x32xf32>
    %879 = vector.extract_strided_slice %624 {offsets = [1, 0], sizes = [1, 32], strides = [1, 1]} : vector<4x32xf32> to vector<1x32xf32>
    %880 = vector.extract_strided_slice %659 {offsets = [1, 0], sizes = [1, 32], strides = [1, 1]} : vector<4x32xf32> to vector<1x32xf32>
    %881 = vector.extract_strided_slice %694 {offsets = [1, 0], sizes = [1, 32], strides = [1, 1]} : vector<4x32xf32> to vector<1x32xf32>
    %882 = vector.extract_strided_slice %729 {offsets = [1, 0], sizes = [1, 32], strides = [1, 1]} : vector<4x32xf32> to vector<1x32xf32>
    %883 = vector.extract_strided_slice %764 {offsets = [1, 0], sizes = [1, 32], strides = [1, 1]} : vector<4x32xf32> to vector<1x32xf32>
    %884 = vector.extract_strided_slice %799 {offsets = [1, 0], sizes = [1, 32], strides = [1, 1]} : vector<4x32xf32> to vector<1x32xf32>
    %885 = vector.extract_strided_slice %834 {offsets = [1, 0], sizes = [1, 32], strides = [1, 1]} : vector<4x32xf32> to vector<1x32xf32>
    %886 = tpu.concatenate %870, %871, %872, %873, %874, %875, %876, %877, %878, %879, %880, %881, %882, %883, %884, %885 in 0 : vector<1x32xf32>, vector<1x32xf32>, vector<1x32xf32>, vector<1x32xf32>, vector<1x32xf32>, vector<1x32xf32>, vector<1x32xf32>, vector<1x32xf32>, vector<1x32xf32>, vector<1x32xf32>, vector<1x32xf32>, vector<1x32xf32>, vector<1x32xf32>, vector<1x32xf32>, vector<1x32xf32>, vector<1x32xf32> -> vector<16x32xf32>
    %887 = vector.extract_strided_slice %834 {offsets = [3, 0], sizes = [1, 32], strides = [1, 1]} : vector<4x32xf32> to vector<1x32xf32>
    %888 = vector.extract_strided_slice %799 {offsets = [3, 0], sizes = [1, 32], strides = [1, 1]} : vector<4x32xf32> to vector<1x32xf32>
    %889 = vector.extract_strided_slice %764 {offsets = [3, 0], sizes = [1, 32], strides = [1, 1]} : vector<4x32xf32> to vector<1x32xf32>
    %890 = vector.extract_strided_slice %729 {offsets = [3, 0], sizes = [1, 32], strides = [1, 1]} : vector<4x32xf32> to vector<1x32xf32>
    %891 = vector.extract_strided_slice %694 {offsets = [3, 0], sizes = [1, 32], strides = [1, 1]} : vector<4x32xf32> to vector<1x32xf32>
    %892 = vector.extract_strided_slice %659 {offsets = [3, 0], sizes = [1, 32], strides = [1, 1]} : vector<4x32xf32> to vector<1x32xf32>
    %893 = vector.extract_strided_slice %624 {offsets = [3, 0], sizes = [1, 32], strides = [1, 1]} : vector<4x32xf32> to vector<1x32xf32>
    %894 = vector.extract_strided_slice %589 {offsets = [3, 0], sizes = [1, 32], strides = [1, 1]} : vector<4x32xf32> to vector<1x32xf32>
    %895 = vector.extract_strided_slice %554 {offsets = [3, 0], sizes = [1, 32], strides = [1, 1]} : vector<4x32xf32> to vector<1x32xf32>
    %896 = vector.extract_strided_slice %519 {offsets = [3, 0], sizes = [1, 32], strides = [1, 1]} : vector<4x32xf32> to vector<1x32xf32>
    %897 = vector.extract_strided_slice %484 {offsets = [3, 0], sizes = [1, 32], strides = [1, 1]} : vector<4x32xf32> to vector<1x32xf32>
    %898 = vector.extract_strided_slice %449 {offsets = [3, 0], sizes = [1, 32], strides = [1, 1]} : vector<4x32xf32> to vector<1x32xf32>
    %899 = vector.extract_strided_slice %414 {offsets = [3, 0], sizes = [1, 32], strides = [1, 1]} : vector<4x32xf32> to vector<1x32xf32>
    %900 = vector.extract_strided_slice %379 {offsets = [3, 0], sizes = [1, 32], strides = [1, 1]} : vector<4x32xf32> to vector<1x32xf32>
    %901 = vector.extract_strided_slice %344 {offsets = [3, 0], sizes = [1, 32], strides = [1, 1]} : vector<4x32xf32> to vector<1x32xf32>
    %902 = vector.extract_strided_slice %309 {offsets = [3, 0], sizes = [1, 32], strides = [1, 1]} : vector<4x32xf32> to vector<1x32xf32>
    %903 = tpu.concatenate %887, %888, %889, %890, %891, %892, %893, %894, %895, %896, %897, %898, %899, %900, %901, %902 in 0 : vector<1x32xf32>, vector<1x32xf32>, vector<1x32xf32>, vector<1x32xf32>, vector<1x32xf32>, vector<1x32xf32>, vector<1x32xf32>, vector<1x32xf32>, vector<1x32xf32>, vector<1x32xf32>, vector<1x32xf32>, vector<1x32xf32>, vector<1x32xf32>, vector<1x32xf32>, vector<1x32xf32>, vector<1x32xf32> -> vector<16x32xf32>
    %904 = tpu.concatenate %886, %903 in 1 : vector<16x32xf32>, vector<16x32xf32> -> vector<16x64xf32>
    %905 = tpu.concatenate %869, %904 in 0 : vector<16x64xf32>, vector<16x64xf32> -> vector<32x64xf32>
    %c0_123 = arith.constant 0 : index
    %c0_124 = arith.constant 0 : index
    %906 = vector.load %arg9[%c0_123, %c0_124] : memref<32x64xf32, #tpu.memory_space<vmem>>, vector<32x64xf32>
    tpu.vector_store %arg9[%c0_123, %c0_124], %905 {strides = array<i32>} : memref<32x64xf32, #tpu.memory_space<vmem>>, vector<32x64xf32>,
    return
  }
}

</mosaic_0001>

<llo_original>
// kernel: cbhg_forward.1
$region0: #{cbhg_forward.1}
  #allocation0 [shape = 'u32[]', space=smem, size = 0x4, offset = 0x4, fixed_abs, tag = 'smem constant byte address 0x4 - core index']
  #allocation1 [shape = 'u32[144,128]{1,0:T(1,128)}', space=vmem, size = 0x12000, scoped, tag = 'internal scratch']
  %s0 = inlined_call_operand.vmem [shape: f32[32,32], index: 0, kind: input, shape index: {}]
  %s1 = inlined_call_operand.vmem [shape: f32[128,128], index: 1, kind: input, shape index: {}]
  %s2 = inlined_call_operand.vmem [shape: f32[384,32], index: 2, kind: input, shape index: {}]
  %s3 = inlined_call_operand.vmem [shape: f32[96,32], index: 3, kind: input, shape index: {}]
  %s4 = inlined_call_operand.vmem [shape: f32[32,32], index: 4, kind: input, shape index: {}]
  %s5 = inlined_call_operand.vmem [shape: f32[4,32,64], index: 5, kind: input, shape index: {}]
  %s6 = inlined_call_operand.vmem [shape: f32[32,192], index: 6, kind: input, shape index: {}]
  %s7 = inlined_call_operand.vmem [shape: f32[64,96], index: 7, kind: input, shape index: {}]
  %s8 = inlined_call_operand.vmem [shape: f32[12,192], index: 8, kind: input, shape index: {}]
  %s9 = inlined_call_operand.hbm [shape: f32[32,64], index: 9, kind: output, shape index: {}]
  %s10 = sld [smem:[#allocation0]]
  $region46: #{cbhg_forward.1} parent=0
    _
  %s12 = ssub.s32 1, %s10
  %s13 = scalar_select 0, %s12, %s10
  $region1: #{cbhg_forward.1} parent=0
    #allocation2 [shape = 'u8[16384]{0}', space=vmem, size = 0x4000, scoped, tag = 'output window, operand 0, single buffered']
    #allocation3 [shape = 's32[1]{0}', space=sflag, size = 0x4, scoped, tag = 'scoped memory for cbhg_forward.1']
    %14 = vsyncpa [#allocation3], 0
    // Predicated region
    $region2: #{cbhg_forward.1} parent=1 // pred_check
      _
    $region3: #{cbhg_forward.1} parent=1 // pred_check_branch
      %16 = sbr.rel (0) target = $region5
    $region4: #{cbhg_forward.1} parent=1 // pred_region
      _
    $region5: #{cbhg_forward.1} parent=1 // pred_fallthru
      _
    // Predicated region
    $region6: #{cbhg_forward.1} parent=1 // pred_check
      _
    $region7: #{cbhg_forward.1} parent=1 // pred_check_branch
      %18 = sbr.rel (0) target = $region9
    $region8: #{cbhg_forward.1} parent=1 // pred_region
      _
    $region9: #{cbhg_forward.1} parent=1 // pred_fallthru
      _
    // Predicated region
    $region10: #{cbhg_forward.1} parent=1 // pred_check
      _
    $region11: #{cbhg_forward.1} parent=1 // pred_check_branch
      %20 = sbr.rel (0) target = $region13
    $region12: #{cbhg_forward.1} parent=1 // pred_region
      _
    $region13: #{cbhg_forward.1} parent=1 // pred_fallthru
      _
    // Predicated region
    $region14: #{cbhg_forward.1} parent=1 // pred_check
      _
    $region15: #{cbhg_forward.1} parent=1 // pred_check_branch
      %22 = sbr.rel (0) target = $region17
    $region16: #{cbhg_forward.1} parent=1 // pred_region
      _
    $region17: #{cbhg_forward.1} parent=1 // pred_fallthru
      _
    // Predicated region
    $region18: #{cbhg_forward.1} parent=1 // pred_check
      _
    $region19: #{cbhg_forward.1} parent=1 // pred_check_branch
      %24 = sbr.rel (0) target = $region21
    $region20: #{cbhg_forward.1} parent=1 // pred_region
      _
    $region21: #{cbhg_forward.1} parent=1 // pred_fallthru
      _
    // Predicated region
    $region22: #{cbhg_forward.1} parent=1 // pred_check
      _
    $region23: #{cbhg_forward.1} parent=1 // pred_check_branch
      %26 = sbr.rel (0) target = $region25
    $region24: #{cbhg_forward.1} parent=1 // pred_region
      _
    $region25: #{cbhg_forward.1} parent=1 // pred_fallthru
      _
    // Predicated region
    $region26: #{cbhg_forward.1} parent=1 // pred_check
      _
    $region27: #{cbhg_forward.1} parent=1 // pred_check_branch
      %28 = sbr.rel (0) target = $region29
    $region28: #{cbhg_forward.1} parent=1 // pred_region
      _
    $region29: #{cbhg_forward.1} parent=1 // pred_fallthru
      _
    // Predicated region
    $region30: #{cbhg_forward.1} parent=1 // pred_check
      _
    $region31: #{cbhg_forward.1} parent=1 // pred_check_branch
      %30 = sbr.rel (0) target = $region33
    $region32: #{cbhg_forward.1} parent=1 // pred_region
      _
    $region33: #{cbhg_forward.1} parent=1 // pred_fallthru
      _
    // Predicated region
    $region34: #{cbhg_forward.1} parent=1 // pred_check
      _
    $region35: #{cbhg_forward.1} parent=1 // pred_check_branch
      %32 = sbr.rel (0) target = $region37
    $region36: #{cbhg_forward.1} parent=1 // pred_region
      _
    $region37: #{cbhg_forward.1} parent=1 // pred_fallthru
      _
    %v33 = vld [vmem:[%s8] sm:$0xff]
    %v34 = vld [vmem:[%s8 + $0x8] sm:$0xff]
    %v35 = vld [vmem:[%s8 + $0x10] sm:$0xf]
    %v36 = vld [vmem:[%s8 + $0x18] sm:$0xf]
    %v37 = vlaneseq
    %v38 = vshrl.u32 %v37, 7
    %v39 = vsub.s32 2, %v38
    %v40 = vrot.slane %v35, %v39
    %v41 = vlaneseq
    %v42 = vshrl.u32 %v41, 7
    %v43 = vsub.s32 3, %v42
    %v44 = vrot.slane %v35, %v43
    %vm45 = vcmask 1041408
    %v46 = vsel %vm45, %v40, %v44
    %v47 = vlaneseq
    %v48 = vshrl.u32 %v47, 7
    %v49 = vadd.s32 %v48, 8
    %v50 = vadd.s32 %v48, 16
    %v51 = vadd.s32 %v48, 24
    %vm52 = vcmp.lt.s32.totalorder %v48, 0
    %v53 = vsub.s32 0, %v48
    %v54 = vsel %vm52, %v53, %v48
    %v55 = vshrl.u32 %v54, 4
    %v56 = vand.u32 %v54, 15
    %v57 = vsub.s32 0, %v56
    %v58 = vsel %vm52, %v57, %v56
    %vm59 = vcmp.lt.s32.totalorder %v49, 0
    %v60 = vsub.s32 0, %v49
    %v61 = vsel %vm59, %v60, %v49
    %v62 = vshrl.u32 %v61, 4
    %v63 = vand.u32 %v61, 15
    %v64 = vsub.s32 0, %v63
    %v65 = vsel %vm59, %v64, %v63
    %vm66 = vcmp.lt.s32.totalorder %v50, 0
    %v67 = vsub.s32 0, %v50
    %v68 = vsel %vm66, %v67, %v50
    %v69 = vshrl.u32 %v68, 4
    %v70 = vand.u32 %v68, 15
    %v71 = vsub.s32 0, %v70
    %v72 = vsel %vm66, %v71, %v70
    %vm73 = vcmp.lt.s32.totalorder %v51, 0
    %v74 = vsub.s32 0, %v51
    %v75 = vsel %vm73, %v74, %v51
    %v76 = vshrl.u32 %v75, 4
    %v77 = vand.u32 %v75, 15
    %v78 = vsub.s32 0, %v77
    %v79 = vsel %vm73, %v78, %v77
    %vm80 = vcmp.ne.s32.totalorder %v58, 0
    %vm81 = vcmp.ne.s32.totalorder %v65, 0
    %vm82 = vcmp.ne.s32.totalorder %v72, 0
    %vm83 = vcmp.ne.s32.totalorder %v79, 0
    %vm84 = vcmp.lt.s32.totalorder %v58, 0
    %vm85 = vcmp.lt.s32.totalorder %v65, 0
    %vm86 = vcmp.lt.s32.totalorder %v72, 0
    %vm87 = vcmp.lt.s32.totalorder %v79, 0
    %vm88 = vmand %vm84, %vm80
    %vm89 = vmand %vm85, %vm81
    %vm90 = vmand %vm86, %vm82
    %vm91 = vmand %vm87, %vm83
    %v92 = vadd.s32 %v58, 16
    %v93 = vadd.s32 %v65, 16
    %v94 = vadd.s32 %v72, 16
    %v95 = vadd.s32 %v79, 16
    %v96 = vsel %vm88, %v92, %v58
    %v97 = vsel %vm89, %v93, %v65
    %v98 = vsel %vm90, %v94, %v72
    %v99 = vsel %vm91, %v95, %v79
    %vm100 = vcmp.lt.s32.totalorder %v96, 15
    %vm101 = vcmp.lt.s32.totalorder %v97, 15
    %vm102 = vcmp.lt.s32.totalorder %v98, 15
    %vm103 = vcmp.lt.s32.totalorder %v99, 15
    %vm104 = vcmp.ge.s32.totalorder %v96, 2
    %vm105 = vcmp.ge.s32.totalorder %v97, 2
    %vm106 = vcmp.ge.s32.totalorder %v98, 2
    %vm107 = vcmp.ge.s32.totalorder %v99, 2
    %vm108 = vcmp.ge.s32.totalorder %v96, 1
    %vm109 = vcmp.ge.s32.totalorder %v97, 1
    %vm110 = vcmp.ge.s32.totalorder %v98, 1
    %vm111 = vcmp.ge.s32.totalorder %v99, 1
    %v112 = vld [vmem:[%s0] sm:$0xff]
    %v113 = vld [vmem:[%s0 + $0x8] sm:$0xff]
    %v114 = vld [vmem:[%s0 + $0x10] sm:$0xff]
    %v115 = vld [vmem:[%s0 + $0x18] sm:$0xff]
    %v117 = vrot.slane %v115, 6
    %v122 = vrot.slane %v112, 6
    %v123 = vrot.slane %v113, 6
    %v124 = vsel %vm45, %v122, %v123
    %v125 = vrot.slane %v114, 6
    %v126 = vsel %vm45, %v123, %v125
    %v127 = vsel %vm45, %v125, %v117
    %v132 = vsel %vm45, %v117, %v122
    %v133 = vsel %vm104, 1, 0
    %v134 = vsel %vm105, 1, 0
    %v135 = vsel %vm106, 1, 0
    %v136 = vsel %vm107, 1, 0
    %vm137 = vcmp.eq.s32.totalorder %v133, 1
    %vm138 = vcmp.eq.s32.totalorder %v134, 1
    %vm139 = vcmp.eq.s32.totalorder %v135, 1
    %vm140 = vcmp.eq.s32.totalorder %v136, 1
    %v141 = vsel %vm137, %v132, 0.0
    %v142 = vsel %vm138, %v124, 0.0
    %v143 = vsel %vm139, %v126, 0.0
    %v144 = vsel %vm140, %v127, 0.0
    %v145 = vrot.slane %v115, 7
    %vm147 = vcmask 1040384
    %v148 = vrot.slane %v112, 7
    %v149 = vrot.slane %v113, 7
    %v150 = vsel %vm147, %v148, %v149
    %v151 = vrot.slane %v114, 7
    %v152 = vsel %vm147, %v149, %v151
    %v153 = vsel %vm147, %v151, %v145
    %v158 = vsel %vm147, %v145, %v148
    %v159 = vsel %vm108, 1, 0
    %v160 = vsel %vm109, 1, 0
    %v161 = vsel %vm110, 1, 0
    %v162 = vsel %vm111, 1, 0
    %vm163 = vcmp.eq.s32.totalorder %v159, 1
    %vm164 = vcmp.eq.s32.totalorder %v160, 1
    %vm165 = vcmp.eq.s32.totalorder %v161, 1
    %vm166 = vcmp.eq.s32.totalorder %v162, 1
    %v167 = vsel %vm163, %v158, 0.0
    %v168 = vsel %vm164, %v150, 0.0
    %v169 = vsel %vm165, %v152, 0.0
    %v170 = vsel %vm166, %v153, 0.0
    %vm171 = vcmask 1046528
    %v172 = vrot.slane %v112, 1
    %v173 = vrot.slane %v113, 1
    %v174 = vsel %vm171, %v172, %v173
    %v175 = vrot.slane %v114, 1
    %v176 = vsel %vm171, %v173, %v175
    %v177 = vrot.slane %v115, 1
    %v178 = vsel %vm171, %v175, %v177
    %v184 = vsel %vm171, %v177, %v172
    %v185 = vsel %vm100, 1, 0
    %v186 = vsel %vm101, 1, 0
    %v187 = vsel %vm102, 1, 0
    %v188 = vsel %vm103, 1, 0
    %vm189 = vcmp.eq.s32.totalorder %v185, 1
    %vm190 = vcmp.eq.s32.totalorder %v186, 1
    %vm191 = vcmp.eq.s32.totalorder %v187, 1
    %vm192 = vcmp.eq.s32.totalorder %v188, 1
    %v193 = vsel %vm189, %v174, 0.0
    %v194 = vsel %vm190, %v176, 0.0
    %v195 = vsel %vm191, %v178, 0.0
    %v196 = vsel %vm192, %v184, 0.0
    %201 = vrot.lane.b32.xlu0 %v167, 32
    %v202 = vpop.permute.xlu0 %201
    %203 = vrot.lane.b32.xlu0 %v168, 32
    %v204 = vpop.permute.xlu0 %203
    %205 = vrot.lane.b32.xlu0 %v169, 32
    %v206 = vpop.permute.xlu0 %205
    %207 = vrot.lane.b32.xlu0 %v170, 32
    %v208 = vpop.permute.xlu0 %207
    %213 = vrot.lane.b32.xlu0 %v112, 64
    %v214 = vpop.permute.xlu0 %213
    %215 = vrot.lane.b32.xlu0 %v113, 64
    %v216 = vpop.permute.xlu0 %215
    %217 = vrot.lane.b32.xlu0 %v114, 64
    %v218 = vpop.permute.xlu0 %217
    %219 = vrot.lane.b32.xlu0 %v115, 64
    %v220 = vpop.permute.xlu0 %219
    %229 = vrot.lane.b32.xlu0 %v193, 96
    %v230 = vpop.permute.xlu0 %229
    %231 = vrot.lane.b32.xlu0 %v194, 96
    %v232 = vpop.permute.xlu0 %231
    %233 = vrot.lane.b32.xlu0 %v195, 96
    %v234 = vpop.permute.xlu0 %233
    %235 = vrot.lane.b32.xlu0 %v196, 96
    %v236 = vpop.permute.xlu0 %235
    %vm241 = vcmask 261120
    %v242 = vsel %vm241, %v141, %v202
    %v243 = vsel %vm241, %v142, %v204
    %v244 = vsel %vm241, %v143, %v206
    %v245 = vsel %vm241, %v144, %v208
    %vm246 = vcmask 523264
    %v247 = vsel %vm246, %v242, %v214
    %v248 = vsel %vm246, %v243, %v216
    %v249 = vsel %vm246, %v244, %v218
    %v250 = vsel %vm246, %v245, %v220
    %vm251 = vcmask 785408
    %v252 = vsel %vm251, %v247, %v230
    %v253 = vsel %vm251, %v248, %v232
    %v254 = vsel %vm251, %v249, %v234
    %v255 = vsel %vm251, %v250, %v236
    %v256 = vld [vmem:[%s1] sm:$0xff]
    %v257 = vld [vmem:[%s1 + $0x8] sm:$0xff]
    %v258 = vld [vmem:[%s1 + $0x10] sm:$0xff]
    %v259 = vld [vmem:[%s1 + $0x18] sm:$0xff]
    %v260 = vld [vmem:[%s1 + $0x20] sm:$0xff]
    %v261 = vld [vmem:[%s1 + $0x28] sm:$0xff]
    %v262 = vld [vmem:[%s1 + $0x30] sm:$0xff]
    %v263 = vld [vmem:[%s1 + $0x38] sm:$0xff]
    %v264 = vld [vmem:[%s1 + $0x40] sm:$0xff]
    %v265 = vld [vmem:[%s1 + $0x48] sm:$0xff]
    %v266 = vld [vmem:[%s1 + $0x50] sm:$0xff]
    %v267 = vld [vmem:[%s1 + $0x58] sm:$0xff]
    %v268 = vld [vmem:[%s1 + $0x60] sm:$0xff]
    %v269 = vld [vmem:[%s1 + $0x68] sm:$0xff]
    %v270 = vld [vmem:[%s1 + $0x70] sm:$0xff]
    %v271 = vld [vmem:[%s1 + $0x78] sm:$0xff]
    %v272 = vlaneseq
    %v273 = vshrl.u32 %v272, 7
    %v274 = vsub.s32 0, %v273
    %v275 = vrot.slane %v33, %v274
    %276 = vmatprep.subr.mxu0 0.0
    %277 = vmatpush1.msra.mxu0 %v256
    %278 = vmatprep.subr.mxu0 0.0
    %279 = vmatpush1.msra.mxu0 %v257
    %280 = vmatprep.subr.mxu0 0.0
    %281 = vmatpush1.msra.mxu0 %v258
    %282 = vmatprep.subr.mxu0 0.0
    %283 = vmatpush1.msra.mxu0 %v259
    %284 = vmatprep.subr.mxu0 0.0
    %285 = vmatpush1.msra.mxu0 %v260
    %286 = vmatprep.subr.mxu0 0.0
    %287 = vmatpush1.msra.mxu0 %v261
    %288 = vmatprep.subr.mxu0 0.0
    %289 = vmatpush1.msra.mxu0 %v262
    %290 = vmatprep.subr.mxu0 0.0
    %291 = vmatpush1.msra.mxu0 %v263
    %292 = vmatprep.subr.mxu0 0.0
    %293 = vmatpush1.msra.mxu0 %v264
    %294 = vmatprep.subr.mxu0 0.0
    %295 = vmatpush1.msra.mxu0 %v265
    %296 = vmatprep.subr.mxu0 0.0
    %297 = vmatpush1.msra.mxu0 %v266
    %298 = vmatprep.subr.mxu0 0.0
    %299 = vmatpush1.msra.mxu0 %v267
    %300 = vmatprep.subr.mxu0 0.0
    %301 = vmatpush1.msra.mxu0 %v268
    %302 = vmatprep.subr.mxu0 0.0
    %303 = vmatpush1.msra.mxu0 %v269
    %304 = vmatprep.subr.mxu0 0.0
    %305 = vmatpush1.msra.mxu0 %v270
    %306 = vmatprep.subr.mxu0 0.0
    %307 = vmatpush1.msra.mxu0 %v271
    %308 = vmatprep.subr.mxu0 0.0
    %309 = vmatpush1.msra.mxu0 0.0
    %310 = vmatprep.subr.mxu0 0.0
    %311 = vmatpush1.msra.mxu0 0.0
    %312 = vmatprep.subr.mxu0 0.0
    %313 = vmatpush1.msra.mxu0 0.0
    %314 = vmatprep.subr.mxu0 0.0
    %315 = vmatpush1.msra.mxu0 0.0
    %316 = vmatprep.subr.mxu0 0.0
    %317 = vmatpush1.msra.mxu0 0.0
    %318 = vmatprep.subr.mxu0 0.0
    %319 = vmatpush1.msra.mxu0 0.0
    %320 = vmatprep.subr.mxu0 0.0
    %321 = vmatpush1.msra.mxu0 0.0
    %322 = vmatprep.subr.mxu0 0.0
    %323 = vmatpush1.msra.mxu0 0.0
    %324 = vmatprep.subr.mxu0 0.0
    %325 = vmatpush1.msra.mxu0 0.0
    %326 = vmatprep.subr.mxu0 0.0
    %327 = vmatpush1.msra.mxu0 0.0
    %328 = vmatprep.subr.mxu0 0.0
    %329 = vmatpush1.msra.mxu0 0.0
    %330 = vmatprep.subr.mxu0 0.0
    %331 = vmatpush1.msra.mxu0 0.0
    %332 = vmatprep.subr.mxu0 0.0
    %333 = vmatpush1.msra.mxu0 0.0
    %334 = vmatprep.subr.mxu0 0.0
    %335 = vmatpush1.msra.mxu0 0.0
    %336 = vmatprep.subr.mxu0 0.0
    %337 = vmatpush1.msra.mxu0 0.0
    %338 = vmatprep.subr.mxu0 0.0
    %339 = vmatpush1.msra.mxu0 0.0
    %340 = vmatprep.mubr.f32.mxu0 0.0
    %341 = vmatmul.mubr.f32.gmra.mrb[0].mxu0 %v252
    %v342 = vpop.f32.mrb[0].mxu0
    %v343 = vadd.f32 %v275, %v342
    %v344 = vpop.f32.mrb[0].mxu0
    %345 = vmatprep.mubr.f32.mxu0 0.0
    %346 = vmatmul.mubr.f32.gmra.mrb[0].mxu0 %v253
    %v347 = vpop.f32.mrb[0].mxu0
    %v348 = vadd.f32 %v275, %v347
    %v349 = vpop.f32.mrb[0].mxu0
    %350 = vmatprep.mubr.f32.mxu0 0.0
    %351 = vmatmul.mubr.f32.gmra.mrb[0].mxu0 %v254
    %v352 = vpop.f32.mrb[0].mxu0
    %v353 = vadd.f32 %v275, %v352
    %v354 = vpop.f32.mrb[0].mxu0
    %355 = vmatprep.mubr.f32.mxu0 0.0
    %356 = vmatmul.mubr.f32.gmra.mrb[0].mxu0 %v255
    %v357 = vpop.f32.mrb[0].mxu0
    %v358 = vadd.f32 %v275, %v357
    %v359 = vpop.f32.mrb[0].mxu0
    %360 = vdwg.mxu0
    %v361 = vmax.f32 %v343, 0.0
    %v362 = vmax.f32 %v348, 0.0
    %v363 = vmax.f32 %v353, 0.0
    %v364 = vmax.f32 %v358, 0.0
    %v365 = vadd.f32 %v361, %v362
    %v366 = vadd.f32 %v365, %v363
    %v367 = vadd.f32 %v366, %v364
    %v368 = vrot.slane %v367, 4
    %v369 = vadd.f32 %v367, %v368
    %v370 = vrot.slane %v369, 2
    %v371 = vadd.f32 %v369, %v370
    %v372 = vrot.slane %v371, 1
    %v373 = vadd.f32 %v371, %v372
    %v374 = vrcp.pop 32.0
    %v375 = vmul.f32 %v373, %v374
    %v376 = vsub.f32 %v361, %v375
    %v377 = vsub.f32 %v362, %v375
    %v378 = vsub.f32 %v363, %v375
    %v379 = vsub.f32 %v364, %v375
    %v380 = vmul.f32 %v376, %v376
    %v381 = vmul.f32 %v377, %v377
    %v382 = vmul.f32 %v378, %v378
    %v383 = vmul.f32 %v379, %v379
    %v384 = vadd.f32 %v380, %v381
    %v385 = vadd.f32 %v384, %v382
    %v386 = vadd.f32 %v385, %v383
    %v387 = vrot.slane %v386, 4
    %v388 = vadd.f32 %v386, %v387
    %v389 = vrot.slane %v388, 2
    %v390 = vadd.f32 %v388, %v389
    %v391 = vrot.slane %v390, 1
    %v392 = vadd.f32 %v390, %v391
    %v393 = vmul.f32 %v392, %v374
    %v394 = vadd.f32 %v393, 0.001
    %v395 = vrsqrt.pop %v394
    %v396 = vmul.f32 %v376, %v395
    %v397 = vmul.f32 %v377, %v395
    %v398 = vmul.f32 %v378, %v395
    %v399 = vmul.f32 %v379, %v395
    %v400 = vlaneseq
    %v401 = vshrl.u32 %v400, 7
    %v402 = vsub.s32 1, %v401
    %v403 = vrot.slane %v33, %v402
    %v404 = vmul.f32 %v396, %v403
    %v405 = vmul.f32 %v397, %v403
    %v406 = vmul.f32 %v398, %v403
    %v407 = vmul.f32 %v399, %v403
    %v408 = vlaneseq
    %v409 = vshrl.u32 %v408, 7
    %v410 = vsub.s32 2, %v409
    %v411 = vrot.slane %v33, %v410
    %v412 = vadd.f32 %v404, %v411
    %v413 = vadd.f32 %v405, %v411
    %v414 = vadd.f32 %v406, %v411
    %v415 = vadd.f32 %v407, %v411
    %v417 = vrot.slane %v415, 7
    %v422 = vrot.slane %v412, 7
    %v423 = vrot.slane %v413, 7
    %v424 = vsel %vm147, %v422, %v423
    %v425 = vrot.slane %v414, 7
    %v426 = vsel %vm147, %v423, %v425
    %v427 = vsel %vm147, %v425, %v417
    %v432 = vsel %vm147, %v417, %v422
    %v433 = vsel %vm163, %v432, %v412
    %v434 = vsel %vm164, %v424, %v413
    %v435 = vsel %vm165, %v426, %v414
    %v436 = vsel %vm166, %v427, %v415
    %v437 = vmax.f32 %v412, %v433
    %v438 = vmax.f32 %v413, %v434
    %v439 = vmax.f32 %v414, %v435
    %v440 = vmax.f32 %v415, %v436
    %v442 = vrot.slane %v440, 7
    %v447 = vrot.slane %v437, 7
    %v448 = vrot.slane %v438, 7
    %v449 = vsel %vm147, %v447, %v448
    %v450 = vrot.slane %v439, 7
    %v451 = vsel %vm147, %v448, %v450
    %v452 = vsel %vm147, %v450, %v442
    %v457 = vsel %vm147, %v442, %v447
    %v458 = vsel %vm163, %v457, 0.0
    %v459 = vsel %vm164, %v449, 0.0
    %v460 = vsel %vm165, %v451, 0.0
    %v461 = vsel %vm166, %v452, 0.0
    %v462 = vrot.slane %v437, 1
    %v463 = vrot.slane %v438, 1
    %v464 = vsel %vm171, %v462, %v463
    %v465 = vrot.slane %v439, 1
    %v466 = vsel %vm171, %v463, %v465
    %v467 = vrot.slane %v440, 1
    %v468 = vsel %vm171, %v465, %v467
    %v474 = vsel %vm171, %v467, %v462
    %v475 = vsel %vm189, %v464, 0.0
    %v476 = vsel %vm190, %v466, 0.0
    %v477 = vsel %vm191, %v468, 0.0
    %v478 = vsel %vm192, %v474, 0.0
    %v479 = vld [vmem:[%s2] sm:$0xff]
    %v480 = vld [vmem:[%s2 + $0x8] sm:$0xff]
    %v481 = vld [vmem:[%s2 + $0x10] sm:$0xff]
    %v482 = vld [vmem:[%s2 + $0x18] sm:$0xff]
    %v483 = vld [vmem:[%s2 + $0x20] sm:$0xff]
    %v484 = vld [vmem:[%s2 + $0x28] sm:$0xff]
    %v485 = vld [vmem:[%s2 + $0x30] sm:$0xff]
    %v486 = vld [vmem:[%s2 + $0x38] sm:$0xff]
    %v487 = vld [vmem:[%s2 + $0x40] sm:$0xff]
    %v488 = vld [vmem:[%s2 + $0x48] sm:$0xff]
    %v489 = vld [vmem:[%s2 + $0x50] sm:$0xff]
    %v490 = vld [vmem:[%s2 + $0x58] sm:$0xff]
    %v491 = vld [vmem:[%s2 + $0x60] sm:$0xff]
    %v492 = vld [vmem:[%s2 + $0x68] sm:$0xff]
    %v493 = vld [vmem:[%s2 + $0x70] sm:$0xff]
    %v494 = vld [vmem:[%s2 + $0x78] sm:$0xff]
    %v495 = vld [vmem:[%s2 + $0x80] sm:$0xff]
    %v496 = vld [vmem:[%s2 + $0x88] sm:$0xff]
    %v497 = vld [vmem:[%s2 + $0x90] sm:$0xff]
    %v498 = vld [vmem:[%s2 + $0x98] sm:$0xff]
    %v499 = vld [vmem:[%s2 + $0xa0] sm:$0xff]
    %v500 = vld [vmem:[%s2 + $0xa8] sm:$0xff]
    %v501 = vld [vmem:[%s2 + $0xb0] sm:$0xff]
    %v502 = vld [vmem:[%s2 + $0xb8] sm:$0xff]
    %v503 = vld [vmem:[%s2 + $0xc0] sm:$0xff]
    %v504 = vld [vmem:[%s2 + $0xc8] sm:$0xff]
    %v505 = vld [vmem:[%s2 + $0xd0] sm:$0xff]
    %v506 = vld [vmem:[%s2 + $0xd8] sm:$0xff]
    %v507 = vld [vmem:[%s2 + $0xe0] sm:$0xff]
    %v508 = vld [vmem:[%s2 + $0xe8] sm:$0xff]
    %v509 = vld [vmem:[%s2 + $0xf0] sm:$0xff]
    %v510 = vld [vmem:[%s2 + $0xf8] sm:$0xff]
    %v511 = vld [vmem:[%s2 + $0x100] sm:$0xff]
    %v512 = vld [vmem:[%s2 + $0x108] sm:$0xff]
    %v513 = vld [vmem:[%s2 + $0x110] sm:$0xff]
    %v514 = vld [vmem:[%s2 + $0x118] sm:$0xff]
    %v515 = vld [vmem:[%s2 + $0x120] sm:$0xff]
    %v516 = vld [vmem:[%s2 + $0x128] sm:$0xff]
    %v517 = vld [vmem:[%s2 + $0x130] sm:$0xff]
    %v518 = vld [vmem:[%s2 + $0x138] sm:$0xff]
    %v519 = vld [vmem:[%s2 + $0x140] sm:$0xff]
    %v520 = vld [vmem:[%s2 + $0x148] sm:$0xff]
    %v521 = vld [vmem:[%s2 + $0x150] sm:$0xff]
    %v522 = vld [vmem:[%s2 + $0x158] sm:$0xff]
    %v523 = vld [vmem:[%s2 + $0x160] sm:$0xff]
    %v524 = vld [vmem:[%s2 + $0x168] sm:$0xff]
    %v525 = vld [vmem:[%s2 + $0x170] sm:$0xff]
    %v526 = vld [vmem:[%s2 + $0x178] sm:$0xff]
    %v527 = vlaneseq
    %v528 = vshrl.u32 %v527, 7
    %v529 = vsub.s32 3, %v528
    %v530 = vrot.slane %v33, %v529
    %531 = vmatprep.subr.mxu0 0.0
    %532 = vmatpush1.msra.mxu0 %v479
    %533 = vmatprep.subr.mxu0 0.0
    %534 = vmatpush1.msra.mxu0 %v480
    %535 = vmatprep.subr.mxu0 0.0
    %536 = vmatpush1.msra.mxu0 %v481
    %537 = vmatprep.subr.mxu0 0.0
    %538 = vmatpush1.msra.mxu0 %v482
    %539 = vmatprep.subr.mxu0 0.0
    %540 = vmatpush1.msra.mxu0 %v483
    %541 = vmatprep.subr.mxu0 0.0
    %542 = vmatpush1.msra.mxu0 %v484
    %543 = vmatprep.subr.mxu0 0.0
    %544 = vmatpush1.msra.mxu0 %v485
    %545 = vmatprep.subr.mxu0 0.0
    %546 = vmatpush1.msra.mxu0 %v486
    %547 = vmatprep.subr.mxu0 0.0
    %548 = vmatpush1.msra.mxu0 %v487
    %549 = vmatprep.subr.mxu0 0.0
    %550 = vmatpush1.msra.mxu0 %v488
    %551 = vmatprep.subr.mxu0 0.0
    %552 = vmatpush1.msra.mxu0 %v489
    %553 = vmatprep.subr.mxu0 0.0
    %554 = vmatpush1.msra.mxu0 %v490
    %555 = vmatprep.subr.mxu0 0.0
    %556 = vmatpush1.msra.mxu0 %v491
    %557 = vmatprep.subr.mxu0 0.0
    %558 = vmatpush1.msra.mxu0 %v492
    %559 = vmatprep.subr.mxu0 0.0
    %560 = vmatpush1.msra.mxu0 %v493
    %561 = vmatprep.subr.mxu0 0.0
    %562 = vmatpush1.msra.mxu0 %v494
    %563 = vmatprep.subr.mxu0 0.0
    %564 = vmatpush1.msra.mxu0 %v495
    %565 = vmatprep.subr.mxu0 0.0
    %566 = vmatpush1.msra.mxu0 %v496
    %567 = vmatprep.subr.mxu0 0.0
    %568 = vmatpush1.msra.mxu0 %v497
    %569 = vmatprep.subr.mxu0 0.0
    %570 = vmatpush1.msra.mxu0 %v498
    %571 = vmatprep.subr.mxu0 0.0
    %572 = vmatpush1.msra.mxu0 %v499
    %573 = vmatprep.subr.mxu0 0.0
    %574 = vmatpush1.msra.mxu0 %v500
    %575 = vmatprep.subr.mxu0 0.0
    %576 = vmatpush1.msra.mxu0 %v501
    %577 = vmatprep.subr.mxu0 0.0
    %578 = vmatpush1.msra.mxu0 %v502
    %579 = vmatprep.subr.mxu0 0.0
    %580 = vmatpush1.msra.mxu0 %v503
    %581 = vmatprep.subr.mxu0 0.0
    %582 = vmatpush1.msra.mxu0 %v504
    %583 = vmatprep.subr.mxu0 0.0
    %584 = vmatpush1.msra.mxu0 %v505
    %585 = vmatprep.subr.mxu0 0.0
    %586 = vmatpush1.msra.mxu0 %v506
    %587 = vmatprep.subr.mxu0 0.0
    %588 = vmatpush1.msra.mxu0 %v507
    %589 = vmatprep.subr.mxu0 0.0
    %590 = vmatpush1.msra.mxu0 %v508
    %591 = vmatprep.subr.mxu0 0.0
    %592 = vmatpush1.msra.mxu0 %v509
    %593 = vmatprep.subr.mxu0 0.0
    %594 = vmatpush1.msra.mxu0 %v510
    %595 = vmatprep.mubr.f32.mxu0 %v437
    %596 = vmatmul.mubr.f32.gmra.mrb[0].mxu0 %v458
    %v597 = vpop.f32.mrb[0].mxu0
    %v598 = vadd.f32 %v530, %v597
    %v599 = vpop.f32.mrb[0].mxu0
    %600 = vmatprep.mubr.f32.mxu0 %v438
    %601 = vmatmul.mubr.f32.gmra.mrb[0].mxu0 %v459
    %v602 = vpop.f32.mrb[0].mxu0
    %v603 = vadd.f32 %v530, %v602
    %v604 = vpop.f32.mrb[0].mxu0
    %605 = vmatprep.mubr.f32.mxu0 %v439
    %606 = vmatmul.mubr.f32.gmra.mrb[0].mxu0 %v460
    %v607 = vpop.f32.mrb[0].mxu0
    %v608 = vadd.f32 %v530, %v607
    %v609 = vpop.f32.mrb[0].mxu0
    %610 = vmatprep.mubr.f32.mxu0 %v440
    %611 = vmatmul.mubr.f32.gmra.mrb[0].mxu0 %v461
    %v612 = vpop.f32.mrb[0].mxu0
    %v613 = vadd.f32 %v530, %v612
    %v614 = vpop.f32.mrb[0].mxu0
    %615 = vdwg.mxu0
    %616 = vmatprep.subr.mxu0 0.0
    %617 = vmatpush1.msra.mxu0 %v511
    %618 = vmatprep.subr.mxu0 0.0
    %619 = vmatpush1.msra.mxu0 %v512
    %620 = vmatprep.subr.mxu0 0.0
    %621 = vmatpush1.msra.mxu0 %v513
    %622 = vmatprep.subr.mxu0 0.0
    %623 = vmatpush1.msra.mxu0 %v514
    %624 = vmatprep.subr.mxu0 0.0
    %625 = vmatpush1.msra.mxu0 %v515
    %626 = vmatprep.subr.mxu0 0.0
    %627 = vmatpush1.msra.mxu0 %v516
    %628 = vmatprep.subr.mxu0 0.0
    %629 = vmatpush1.msra.mxu0 %v517
    %630 = vmatprep.subr.mxu0 0.0
    %631 = vmatpush1.msra.mxu0 %v518
    %632 = vmatprep.subr.mxu0 0.0
    %633 = vmatpush1.msra.mxu0 %v519
    %634 = vmatprep.subr.mxu0 0.0
    %635 = vmatpush1.msra.mxu0 %v520
    %636 = vmatprep.subr.mxu0 0.0
    %637 = vmatpush1.msra.mxu0 %v521
    %638 = vmatprep.subr.mxu0 0.0
    %639 = vmatpush1.msra.mxu0 %v522
    %640 = vmatprep.subr.mxu0 0.0
    %641 = vmatpush1.msra.mxu0 %v523
    %642 = vmatprep.subr.mxu0 0.0
    %643 = vmatpush1.msra.mxu0 %v524
    %644 = vmatprep.subr.mxu0 0.0
    %645 = vmatpush1.msra.mxu0 %v525
    %646 = vmatprep.subr.mxu0 0.0
    %647 = vmatpush1.msra.mxu0 %v526
    %648 = vmatprep.subr.mxu0 0.0
    %649 = vmatpush1.msra.mxu0 0.0
    %650 = vmatprep.subr.mxu0 0.0
    %651 = vmatpush1.msra.mxu0 0.0
    %652 = vmatprep.subr.mxu0 0.0
    %653 = vmatpush1.msra.mxu0 0.0
    %654 = vmatprep.subr.mxu0 0.0
    %655 = vmatpush1.msra.mxu0 0.0
    %656 = vmatprep.subr.mxu0 0.0
    %657 = vmatpush1.msra.mxu0 0.0
    %658 = vmatprep.subr.mxu0 0.0
    %659 = vmatpush1.msra.mxu0 0.0
    %660 = vmatprep.subr.mxu0 0.0
    %661 = vmatpush1.msra.mxu0 0.0
    %662 = vmatprep.subr.mxu0 0.0
    %663 = vmatpush1.msra.mxu0 0.0
    %664 = vmatprep.subr.mxu0 0.0
    %665 = vmatpush1.msra.mxu0 0.0
    %666 = vmatprep.subr.mxu0 0.0
    %667 = vmatpush1.msra.mxu0 0.0
    %668 = vmatprep.subr.mxu0 0.0
    %669 = vmatpush1.msra.mxu0 0.0
    %670 = vmatprep.subr.mxu0 0.0
    %671 = vmatpush1.msra.mxu0 0.0
    %672 = vmatprep.subr.mxu0 0.0
    %673 = vmatpush1.msra.mxu0 0.0
    %674 = vmatprep.subr.mxu0 0.0
    %675 = vmatpush1.msra.mxu0 0.0
    %676 = vmatprep.subr.mxu0 0.0
    %677 = vmatpush1.msra.mxu0 0.0
    %678 = vmatprep.subr.mxu0 0.0
    %679 = vmatpush1.msra.mxu0 0.0
    %680 = vmatprep.mubr.f32.mxu0 0.0
    %681 = vmatmul.mubr.f32.gmra.mrb[0].mxu0 %v475
    %v682 = vpop.f32.mrb[0].mxu0
    %v683 = vadd.f32 %v598, %v682
    %v684 = vpop.f32.mrb[0].mxu0
    %685 = vmatprep.mubr.f32.mxu0 0.0
    %686 = vmatmul.mubr.f32.gmra.mrb[0].mxu0 %v476
    %v687 = vpop.f32.mrb[0].mxu0
    %v688 = vadd.f32 %v603, %v687
    %v689 = vpop.f32.mrb[0].mxu0
    %690 = vmatprep.mubr.f32.mxu0 0.0
    %691 = vmatmul.mubr.f32.gmra.mrb[0].mxu0 %v477
    %v692 = vpop.f32.mrb[0].mxu0
    %v693 = vadd.f32 %v608, %v692
    %v694 = vpop.f32.mrb[0].mxu0
    %695 = vmatprep.mubr.f32.mxu0 0.0
    %696 = vmatmul.mubr.f32.gmra.mrb[0].mxu0 %v478
    %v697 = vpop.f32.mrb[0].mxu0
    %v698 = vadd.f32 %v613, %v697
    %v699 = vpop.f32.mrb[0].mxu0
    %700 = vdwg.mxu0
    %v701 = vmax.f32 %v683, 0.0
    %v702 = vmax.f32 %v688, 0.0
    %v703 = vmax.f32 %v693, 0.0
    %v704 = vmax.f32 %v698, 0.0
    %v705 = vsel %vm241, %v701, 0.0
    %v706 = vsel %vm241, %v702, 0.0
    %v707 = vadd.f32 %v705, %v706
    %v708 = vsel %vm241, %v703, 0.0
    %v709 = vadd.f32 %v707, %v708
    %v710 = vsel %vm241, %v704, 0.0
    %v711 = vadd.f32 %v709, %v710
    %v712 = vrot.slane %v711, 4
    %v713 = vadd.f32 %v711, %v712
    %v714 = vrot.slane %v713, 2
    %v715 = vadd.f32 %v713, %v714
    %v716 = vrot.slane %v715, 1
    %v717 = vadd.f32 %v715, %v716
    %v718 = vmul.f32 %v717, %v374
    %v719 = vsub.f32 %v701, %v718
    %v720 = vsub.f32 %v702, %v718
    %v721 = vsub.f32 %v703, %v718
    %v722 = vsub.f32 %v704, %v718
    %v723 = vmul.f32 %v719, %v719
    %v724 = vmul.f32 %v720, %v720
    %v725 = vmul.f32 %v721, %v721
    %v726 = vmul.f32 %v722, %v722
    %v727 = vsel %vm241, %v723, 0.0
    %v728 = vsel %vm241, %v724, 0.0
    %v729 = vadd.f32 %v727, %v728
    %v730 = vsel %vm241, %v725, 0.0
    %v731 = vadd.f32 %v729, %v730
    %v732 = vsel %vm241, %v726, 0.0
    %v733 = vadd.f32 %v731, %v732
    %v734 = vrot.slane %v733, 4
    %v735 = vadd.f32 %v733, %v734
    %v736 = vrot.slane %v735, 2
    %v737 = vadd.f32 %v735, %v736
    %v738 = vrot.slane %v737, 1
    %v739 = vadd.f32 %v737, %v738
    %v740 = vmul.f32 %v739, %v374
    %v741 = vadd.f32 %v740, 0.001
    %v742 = vrsqrt.pop %v741
    %v743 = vmul.f32 %v719, %v742
    %v744 = vmul.f32 %v720, %v742
    %v745 = vmul.f32 %v721, %v742
    %v746 = vmul.f32 %v722, %v742
    %748 = vrot.lane.b32.xlu0 %v530, 96
    %v749 = vpop.permute.xlu0 %748
    %v751 = vmul.f32 %v743, %v749
    %v752 = vmul.f32 %v744, %v749
    %v753 = vmul.f32 %v745, %v749
    %v754 = vmul.f32 %v746, %v749
    %755 = vrot.lane.b32.xlu0 %v530, 64
    %v756 = vpop.permute.xlu0 %755
    %v758 = vadd.f32 %v751, %v756
    %v759 = vadd.f32 %v752, %v756
    %v760 = vadd.f32 %v753, %v756
    %v761 = vadd.f32 %v754, %v756
    %v763 = vrot.slane %v761, 7
    %v768 = vrot.slane %v758, 7
    %v769 = vrot.slane %v759, 7
    %v770 = vsel %vm147, %v768, %v769
    %v771 = vrot.slane %v760, 7
    %v772 = vsel %vm147, %v769, %v771
    %v773 = vsel %vm147, %v771, %v763
    %v778 = vsel %vm147, %v763, %v768
    %v779 = vsel %vm163, %v778, 0.0
    %v780 = vsel %vm164, %v770, 0.0
    %v781 = vsel %vm165, %v772, 0.0
    %v782 = vsel %vm166, %v773, 0.0
    %v783 = vrot.slane %v758, 1
    %v784 = vrot.slane %v759, 1
    %v785 = vsel %vm171, %v783, %v784
    %v786 = vrot.slane %v760, 1
    %v787 = vsel %vm171, %v784, %v786
    %v788 = vrot.slane %v761, 1
    %v789 = vsel %vm171, %v786, %v788
    %v795 = vsel %vm171, %v788, %v783
    %v796 = vsel %vm189, %v785, 0.0
    %v797 = vsel %vm190, %v787, 0.0
    %v798 = vsel %vm191, %v789, 0.0
    %v799 = vsel %vm192, %v795, 0.0
    %800 = vrot.lane.b32.xlu0 %v758, 32
    %v801 = vpop.permute.xlu0 %800
    %802 = vrot.lane.b32.xlu0 %v759, 32
    %v803 = vpop.permute.xlu0 %802
    %804 = vrot.lane.b32.xlu0 %v760, 32
    %v805 = vpop.permute.xlu0 %804
    %806 = vrot.lane.b32.xlu0 %v761, 32
    %v807 = vpop.permute.xlu0 %806
    %816 = vrot.lane.b32.xlu0 %v796, 64
    %v817 = vpop.permute.xlu0 %816
    %818 = vrot.lane.b32.xlu0 %v797, 64
    %v819 = vpop.permute.xlu0 %818
    %820 = vrot.lane.b32.xlu0 %v798, 64
    %v821 = vpop.permute.xlu0 %820
    %822 = vrot.lane.b32.xlu0 %v799, 64
    %v823 = vpop.permute.xlu0 %822
    %v828 = vsel %vm241, %v779, %v801
    %v829 = vsel %vm241, %v780, %v803
    %v830 = vsel %vm241, %v781, %v805
    %v831 = vsel %vm241, %v782, %v807
    %v832 = vsel %vm246, %v828, %v817
    %v833 = vsel %vm246, %v829, %v819
    %v834 = vsel %vm246, %v830, %v821
    %v835 = vsel %vm246, %v831, %v823
    %v836 = vld [vmem:[%s3] sm:$0xff]
    %v837 = vld [vmem:[%s3 + $0x8] sm:$0xff]
    %v838 = vld [vmem:[%s3 + $0x10] sm:$0xff]
    %v839 = vld [vmem:[%s3 + $0x18] sm:$0xff]
    %v840 = vld [vmem:[%s3 + $0x20] sm:$0xff]
    %v841 = vld [vmem:[%s3 + $0x28] sm:$0xff]
    %v842 = vld [vmem:[%s3 + $0x30] sm:$0xff]
    %v843 = vld [vmem:[%s3 + $0x38] sm:$0xff]
    %v844 = vld [vmem:[%s3 + $0x40] sm:$0xff]
    %v845 = vld [vmem:[%s3 + $0x48] sm:$0xff]
    %v846 = vld [vmem:[%s3 + $0x50] sm:$0xff]
    %v847 = vld [vmem:[%s3 + $0x58] sm:$0xff]
    %848 = vrot.lane.b32.xlu0 %v530, 32
    %v849 = vpop.permute.xlu0 %848
    %v852 = vsel %vm251, %v832, 0
    %v855 = vsel %vm251, %v833, 0
    %v858 = vsel %vm251, %v834, 0
    %v861 = vsel %vm251, %v835, 0
    %863 = vmatprep.subr.mxu0 0.0
    %864 = vmatpush1.msra.mxu0 %v836
    %865 = vmatprep.subr.mxu0 0.0
    %866 = vmatpush1.msra.mxu0 %v837
    %867 = vmatprep.subr.mxu0 0.0
    %868 = vmatpush1.msra.mxu0 %v838
    %869 = vmatprep.subr.mxu0 0.0
    %870 = vmatpush1.msra.mxu0 %v839
    %871 = vmatprep.subr.mxu0 0.0
    %872 = vmatpush1.msra.mxu0 %v840
    %873 = vmatprep.subr.mxu0 0.0
    %874 = vmatpush1.msra.mxu0 %v841
    %875 = vmatprep.subr.mxu0 0.0
    %876 = vmatpush1.msra.mxu0 %v842
    %877 = vmatprep.subr.mxu0 0.0
    %878 = vmatpush1.msra.mxu0 %v843
    %879 = vmatprep.subr.mxu0 0.0
    %880 = vmatpush1.msra.mxu0 %v844
    %881 = vmatprep.subr.mxu0 0.0
    %882 = vmatpush1.msra.mxu0 %v845
    %883 = vmatprep.subr.mxu0 0.0
    %884 = vmatpush1.msra.mxu0 %v846
    %885 = vmatprep.subr.mxu0 0.0
    %886 = vmatpush1.msra.mxu0 %v847
    %887 = vmatprep.subr.mxu0 0.0
    %888 = vmatpush1.msra.mxu0 0.0
    %889 = vmatprep.subr.mxu0 0.0
    %890 = vmatpush1.msra.mxu0 0.0
    %891 = vmatprep.subr.mxu0 0.0
    %892 = vmatpush1.msra.mxu0 0.0
    %893 = vmatprep.subr.mxu0 0.0
    %894 = vmatpush1.msra.mxu0 0.0
    %895 = vmatprep.subr.mxu0 0.0
    %896 = vmatpush1.msra.mxu0 0.0
    %897 = vmatprep.subr.mxu0 0.0
    %898 = vmatpush1.msra.mxu0 0.0
    %899 = vmatprep.subr.mxu0 0.0
    %900 = vmatpush1.msra.mxu0 0.0
    %901 = vmatprep.subr.mxu0 0.0
    %902 = vmatpush1.msra.mxu0 0.0
    %903 = vmatprep.subr.mxu0 0.0
    %904 = vmatpush1.msra.mxu0 0.0
    %905 = vmatprep.subr.mxu0 0.0
    %906 = vmatpush1.msra.mxu0 0.0
    %907 = vmatprep.subr.mxu0 0.0
    %908 = vmatpush1.msra.mxu0 0.0
    %909 = vmatprep.subr.mxu0 0.0
    %910 = vmatpush1.msra.mxu0 0.0
    %911 = vmatprep.subr.mxu0 0.0
    %912 = vmatpush1.msra.mxu0 0.0
    %913 = vmatprep.subr.mxu0 0.0
    %914 = vmatpush1.msra.mxu0 0.0
    %915 = vmatprep.subr.mxu0 0.0
    %916 = vmatpush1.msra.mxu0 0.0
    %917 = vmatprep.subr.mxu0 0.0
    %918 = vmatpush1.msra.mxu0 0.0
    %919 = vmatprep.subr.mxu0 0.0
    %920 = vmatpush1.msra.mxu0 0.0
    %921 = vmatprep.subr.mxu0 0.0
    %922 = vmatpush1.msra.mxu0 0.0
    %923 = vmatprep.subr.mxu0 0.0
    %924 = vmatpush1.msra.mxu0 0.0
    %925 = vmatprep.subr.mxu0 0.0
    %926 = vmatpush1.msra.mxu0 0.0
    %927 = vmatprep.mubr.f32.mxu0 0.0
    %928 = vmatmul.mubr.f32.gmra.mrb[0].mxu0 %v852
    %v929 = vpop.f32.mrb[0].mxu0
    %v930 = vadd.f32 %v849, %v929
    %v931 = vpop.f32.mrb[0].mxu0
    %932 = vmatprep.mubr.f32.mxu0 0.0
    %933 = vmatmul.mubr.f32.gmra.mrb[0].mxu0 %v855
    %v934 = vpop.f32.mrb[0].mxu0
    %v935 = vadd.f32 %v849, %v934
    %v936 = vpop.f32.mrb[0].mxu0
    %937 = vmatprep.mubr.f32.mxu0 0.0
    %938 = vmatmul.mubr.f32.gmra.mrb[0].mxu0 %v858
    %v939 = vpop.f32.mrb[0].mxu0
    %v940 = vadd.f32 %v849, %v939
    %v941 = vpop.f32.mrb[0].mxu0
    %942 = vmatprep.mubr.f32.mxu0 0.0
    %943 = vmatmul.mubr.f32.gmra.mrb[0].mxu0 %v861
    %v944 = vpop.f32.mrb[0].mxu0
    %v945 = vadd.f32 %v849, %v944
    %v946 = vpop.f32.mrb[0].mxu0
    %947 = vdwg.mxu0
    %v948 = vmax.f32 %v930, 0.0
    %v949 = vmax.f32 %v935, 0.0
    %v950 = vmax.f32 %v940, 0.0
    %v951 = vmax.f32 %v945, 0.0
    %v952 = vsel %vm241, %v948, 0.0
    %v953 = vsel %vm241, %v949, 0.0
    %v954 = vadd.f32 %v952, %v953
    %v955 = vsel %vm241, %v950, 0.0
    %v956 = vadd.f32 %v954, %v955
    %v957 = vsel %vm241, %v951, 0.0
    %v958 = vadd.f32 %v956, %v957
    %v959 = vrot.slane %v958, 4
    %v960 = vadd.f32 %v958, %v959
    %v961 = vrot.slane %v960, 2
    %v962 = vadd.f32 %v960, %v961
    %v963 = vrot.slane %v962, 1
    %v964 = vadd.f32 %v962, %v963
    %v965 = vmul.f32 %v964, %v374
    %v966 = vsub.f32 %v948, %v965
    %v967 = vsub.f32 %v949, %v965
    %v968 = vsub.f32 %v950, %v965
    %v969 = vsub.f32 %v951, %v965
    %v970 = vmul.f32 %v966, %v966
    %v971 = vmul.f32 %v967, %v967
    %v972 = vmul.f32 %v968, %v968
    %v973 = vmul.f32 %v969, %v969
    %v974 = vsel %vm241, %v970, 0.0
    %v975 = vsel %vm241, %v971, 0.0
    %v976 = vadd.f32 %v974, %v975
    %v977 = vsel %vm241, %v972, 0.0
    %v978 = vadd.f32 %v976, %v977
    %v979 = vsel %vm241, %v973, 0.0
    %v980 = vadd.f32 %v978, %v979
    %v981 = vrot.slane %v980, 4
    %v982 = vadd.f32 %v980, %v981
    %v983 = vrot.slane %v982, 2
    %v984 = vadd.f32 %v982, %v983
    %v985 = vrot.slane %v984, 1
    %v986 = vadd.f32 %v984, %v985
    %v987 = vmul.f32 %v986, %v374
    %v988 = vadd.f32 %v987, 0.001
    %v989 = vrsqrt.pop %v988
    %v990 = vmul.f32 %v966, %v989
    %v991 = vmul.f32 %v967, %v989
    %v992 = vmul.f32 %v968, %v989
    %v993 = vmul.f32 %v969, %v989
    %v994 = vlaneseq
    %v995 = vshrl.u32 %v994, 7
    %v996 = vsub.s32 3, %v995
    %v997 = vrot.slane %v34, %v996
    %v998 = vmul.f32 %v990, %v997
    %v999 = vmul.f32 %v991, %v997
    %v1000 = vmul.f32 %v992, %v997
    %v1001 = vmul.f32 %v993, %v997
    %1003 = vrot.lane.b32.xlu0 %v997, 96
    %v1004 = vpop.permute.xlu0 %1003
    %v1006 = vadd.f32 %v998, %v1004
    %v1007 = vadd.f32 %v999, %v1004
    %v1008 = vadd.f32 %v1000, %v1004
    %v1009 = vadd.f32 %v1001, %v1004
    %v1010 = vadd.f32 %v1006, %v112
    %v1011 = vadd.f32 %v1007, %v113
    %v1012 = vadd.f32 %v1008, %v114
    %v1013 = vadd.f32 %v1009, %v115
    %v1014 = vld [vmem:[%s4] sm:$0xff]
    %v1015 = vld [vmem:[%s4 + $0x8] sm:$0xff]
    %v1016 = vld [vmem:[%s4 + $0x10] sm:$0xff]
    %v1017 = vld [vmem:[%s4 + $0x18] sm:$0xff]
    %v1018 = vlaneseq
    %v1019 = vshrl.u32 %v1018, 7
    %v1020 = vsub.s32 4, %v1019
    %v1021 = vrot.slane %v33, %v1020
    %v1023 = vsel %vm241, %v1010, 0
    %v1026 = vsel %vm241, %v1011, 0
    %v1029 = vsel %vm241, %v1012, 0
    %v1032 = vsel %vm241, %v1013, 0
    %1034 = vmatprep.subr.mxu0 0.0
    %1035 = vmatpush1.msra.mxu0 %v1014
    %1036 = vmatprep.subr.mxu0 0.0
    %1037 = vmatpush1.msra.mxu0 %v1015
    %1038 = vmatprep.subr.mxu0 0.0
    %1039 = vmatpush1.msra.mxu0 %v1016
    %1040 = vmatprep.subr.mxu0 0.0
    %1041 = vmatpush1.msra.mxu0 %v1017
    %1042 = vmatprep.subr.mxu0 0.0
    %1043 = vmatpush1.msra.mxu0 0.0
    %1044 = vmatprep.subr.mxu0 0.0
    %1045 = vmatpush1.msra.mxu0 0.0
    %1046 = vmatprep.subr.mxu0 0.0
    %1047 = vmatpush1.msra.mxu0 0.0
    %1048 = vmatprep.subr.mxu0 0.0
    %1049 = vmatpush1.msra.mxu0 0.0
    %1050 = vmatprep.subr.mxu0 0.0
    %1051 = vmatpush1.msra.mxu0 0.0
    %1052 = vmatprep.subr.mxu0 0.0
    %1053 = vmatpush1.msra.mxu0 0.0
    %1054 = vmatprep.subr.mxu0 0.0
    %1055 = vmatpush1.msra.mxu0 0.0
    %1056 = vmatprep.subr.mxu0 0.0
    %1057 = vmatpush1.msra.mxu0 0.0
    %1058 = vmatprep.subr.mxu0 0.0
    %1059 = vmatpush1.msra.mxu0 0.0
    %1060 = vmatprep.subr.mxu0 0.0
    %1061 = vmatpush1.msra.mxu0 0.0
    %1062 = vmatprep.subr.mxu0 0.0
    %1063 = vmatpush1.msra.mxu0 0.0
    %1064 = vmatprep.subr.mxu0 0.0
    %1065 = vmatpush1.msra.mxu0 0.0
    %1066 = vmatprep.subr.mxu0 0.0
    %1067 = vmatpush1.msra.mxu0 0.0
    %1068 = vmatprep.subr.mxu0 0.0
    %1069 = vmatpush1.msra.mxu0 0.0
    %1070 = vmatprep.subr.mxu0 0.0
    %1071 = vmatpush1.msra.mxu0 0.0
    %1072 = vmatprep.subr.mxu0 0.0
    %1073 = vmatpush1.msra.mxu0 0.0
    %1074 = vmatprep.subr.mxu0 0.0
    %1075 = vmatpush1.msra.mxu0 0.0
    %1076 = vmatprep.subr.mxu0 0.0
    %1077 = vmatpush1.msra.mxu0 0.0
    %1078 = vmatprep.subr.mxu0 0.0
    %1079 = vmatpush1.msra.mxu0 0.0
    %1080 = vmatprep.subr.mxu0 0.0
    %1081 = vmatpush1.msra.mxu0 0.0
    %1082 = vmatprep.subr.mxu0 0.0
    %1083 = vmatpush1.msra.mxu0 0.0
    %1084 = vmatprep.subr.mxu0 0.0
    %1085 = vmatpush1.msra.mxu0 0.0
    %1086 = vmatprep.subr.mxu0 0.0
    %1087 = vmatpush1.msra.mxu0 0.0
    %1088 = vmatprep.subr.mxu0 0.0
    %1089 = vmatpush1.msra.mxu0 0.0
    %1090 = vmatprep.subr.mxu0 0.0
    %1091 = vmatpush1.msra.mxu0 0.0
    %1092 = vmatprep.subr.mxu0 0.0
    %1093 = vmatpush1.msra.mxu0 0.0
    %1094 = vmatprep.subr.mxu0 0.0
    %1095 = vmatpush1.msra.mxu0 0.0
    %1096 = vmatprep.subr.mxu0 0.0
    %1097 = vmatpush1.msra.mxu0 0.0
    %1098 = vmatprep.mubr.f32.mxu0 0.0
    %1099 = vmatmul.mubr.f32.gmra.mrb[0].mxu0 %v1023
    %v1100 = vpop.f32.mrb[0].mxu0
    %v1101 = vadd.f32 %v1021, %v1100
    %v1102 = vpop.f32.mrb[0].mxu0
    %1103 = vmatprep.mubr.f32.mxu0 0.0
    %1104 = vmatmul.mubr.f32.gmra.mrb[0].mxu0 %v1026
    %v1105 = vpop.f32.mrb[0].mxu0
    %v1106 = vadd.f32 %v1021, %v1105
    %v1107 = vpop.f32.mrb[0].mxu0
    %1108 = vmatprep.mubr.f32.mxu0 0.0
    %1109 = vmatmul.mubr.f32.gmra.mrb[0].mxu0 %v1029
    %v1110 = vpop.f32.mrb[0].mxu0
    %v1111 = vadd.f32 %v1021, %v1110
    %v1112 = vpop.f32.mrb[0].mxu0
    %1113 = vmatprep.mubr.f32.mxu0 0.0
    %1114 = vmatmul.mubr.f32.gmra.mrb[0].mxu0 %v1032
    %v1115 = vpop.f32.mrb[0].mxu0
    %v1116 = vadd.f32 %v1021, %v1115
    %v1117 = vpop.f32.mrb[0].mxu0
    %1118 = vdwg.mxu0
    %v1119 = vld [vmem:[%s5] sm:$0xff]
    %v1120 = vld [vmem:[%s5 + $0x8] sm:$0xff]
    %v1121 = vld [vmem:[%s5 + $0x10] sm:$0xff]
    %v1122 = vld [vmem:[%s5 + $0x18] sm:$0xff]
    %v1123 = vlaneseq
    %v1124 = vshrl.u32 %v1123, 7
    %v1125 = vsub.s32 5, %v1124
    %v1126 = vrot.slane %v33, %v1125
    %v1128 = vsel %vm241, %v1101, 0
    %v1131 = vsel %vm241, %v1106, 0
    %v1134 = vsel %vm241, %v1111, 0
    %v1137 = vsel %vm241, %v1116, 0
    %1139 = vmatprep.subr.mxu0 0.0
    %1140 = vmatpush1.msra.mxu0 %v1119
    %1141 = vmatprep.subr.mxu0 0.0
    %1142 = vmatpush1.msra.mxu0 %v1120
    %1143 = vmatprep.subr.mxu0 0.0
    %1144 = vmatpush1.msra.mxu0 %v1121
    %1145 = vmatprep.subr.mxu0 0.0
    %1146 = vmatpush1.msra.mxu0 %v1122
    %1147 = vmatprep.subr.mxu0 0.0
    %1148 = vmatpush1.msra.mxu0 0.0
    %1149 = vmatprep.subr.mxu0 0.0
    %1150 = vmatpush1.msra.mxu0 0.0
    %1151 = vmatprep.subr.mxu0 0.0
    %1152 = vmatpush1.msra.mxu0 0.0
    %1153 = vmatprep.subr.mxu0 0.0
    %1154 = vmatpush1.msra.mxu0 0.0
    %1155 = vmatprep.subr.mxu0 0.0
    %1156 = vmatpush1.msra.mxu0 0.0
    %1157 = vmatprep.subr.mxu0 0.0
    %1158 = vmatpush1.msra.mxu0 0.0
    %1159 = vmatprep.subr.mxu0 0.0
    %1160 = vmatpush1.msra.mxu0 0.0
    %1161 = vmatprep.subr.mxu0 0.0
    %1162 = vmatpush1.msra.mxu0 0.0
    %1163 = vmatprep.subr.mxu0 0.0
    %1164 = vmatpush1.msra.mxu0 0.0
    %1165 = vmatprep.subr.mxu0 0.0
    %1166 = vmatpush1.msra.mxu0 0.0
    %1167 = vmatprep.subr.mxu0 0.0
    %1168 = vmatpush1.msra.mxu0 0.0
    %1169 = vmatprep.subr.mxu0 0.0
    %1170 = vmatpush1.msra.mxu0 0.0
    %1171 = vmatprep.subr.mxu0 0.0
    %1172 = vmatpush1.msra.mxu0 0.0
    %1173 = vmatprep.subr.mxu0 0.0
    %1174 = vmatpush1.msra.mxu0 0.0
    %1175 = vmatprep.subr.mxu0 0.0
    %1176 = vmatpush1.msra.mxu0 0.0
    %1177 = vmatprep.subr.mxu0 0.0
    %1178 = vmatpush1.msra.mxu0 0.0
    %1179 = vmatprep.subr.mxu0 0.0
    %1180 = vmatpush1.msra.mxu0 0.0
    %1181 = vmatprep.subr.mxu0 0.0
    %1182 = vmatpush1.msra.mxu0 0.0
    %1183 = vmatprep.subr.mxu0 0.0
    %1184 = vmatpush1.msra.mxu0 0.0
    %1185 = vmatprep.subr.mxu0 0.0
    %1186 = vmatpush1.msra.mxu0 0.0
    %1187 = vmatprep.subr.mxu0 0.0
    %1188 = vmatpush1.msra.mxu0 0.0
    %1189 = vmatprep.subr.mxu0 0.0
    %1190 = vmatpush1.msra.mxu0 0.0
    %1191 = vmatprep.subr.mxu0 0.0
    %1192 = vmatpush1.msra.mxu0 0.0
    %1193 = vmatprep.subr.mxu0 0.0
    %1194 = vmatpush1.msra.mxu0 0.0
    %1195 = vmatprep.subr.mxu0 0.0
    %1196 = vmatpush1.msra.mxu0 0.0
    %1197 = vmatprep.subr.mxu0 0.0
    %1198 = vmatpush1.msra.mxu0 0.0
    %1199 = vmatprep.subr.mxu0 0.0
    %1200 = vmatpush1.msra.mxu0 0.0
    %1201 = vmatprep.subr.mxu0 0.0
    %1202 = vmatpush1.msra.mxu0 0.0
    %1203 = vmatprep.mubr.f32.mxu0 0.0
    %1204 = vmatmul.mubr.f32.gmra.mrb[0].mxu0 %v1128
    %v1205 = vpop.f32.mrb[0].mxu0
    %v1206 = vadd.f32 %v1126, %v1205
    %v1207 = vpop.f32.mrb[0].mxu0
    %1208 = vmatprep.mubr.f32.mxu0 0.0
    %1209 = vmatmul.mubr.f32.gmra.mrb[0].mxu0 %v1131
    %v1210 = vpop.f32.mrb[0].mxu0
    %v1211 = vadd.f32 %v1126, %v1210
    %v1212 = vpop.f32.mrb[0].mxu0
    %1213 = vmatprep.mubr.f32.mxu0 0.0
    %1214 = vmatmul.mubr.f32.gmra.mrb[0].mxu0 %v1134
    %v1215 = vpop.f32.mrb[0].mxu0
    %v1216 = vadd.f32 %v1126, %v1215
    %v1217 = vpop.f32.mrb[0].mxu0
    %1218 = vmatprep.mubr.f32.mxu0 0.0
    %1219 = vmatmul.mubr.f32.gmra.mrb[0].mxu0 %v1137
    %v1220 = vpop.f32.mrb[0].mxu0
    %v1221 = vadd.f32 %v1126, %v1220
    %v1222 = vpop.f32.mrb[0].mxu0
    %1223 = vdwg.mxu0
    %v1224 = vmax.f32 %v1206, 0.0
    %v1225 = vmax.f32 %v1211, 0.0
    %v1226 = vmax.f32 %v1216, 0.0
    %v1227 = vmax.f32 %v1221, 0.0
    %v1228 = vxor.u32 %v1206, 2147483648
    %v1229 = vxor.u32 %v1211, 2147483648
    %v1230 = vxor.u32 %v1216, 2147483648
    %v1231 = vxor.u32 %v1221, 2147483648
    %v1232 = vmul.f32 %v1228, 1.442695
    %v1233 = vpow.pop %v1232
    %v1234 = vmul.f32 %v1229, 1.442695
    %v1235 = vpow.pop %v1234
    %v1236 = vmul.f32 %v1230, 1.442695
    %v1237 = vpow.pop %v1236
    %v1238 = vmul.f32 %v1231, 1.442695
    %v1239 = vpow.pop %v1238
    %v1240 = vadd.f32 %v1233, 1.0
    %v1241 = vadd.f32 %v1235, 1.0
    %v1242 = vadd.f32 %v1237, 1.0
    %v1243 = vadd.f32 %v1239, 1.0
    %v1244 = vrcp.pop %v1240
    %v1245 = vmul.f32 1.0, %v1244
    %v1246 = vrcp.pop %v1241
    %v1247 = vmul.f32 1.0, %v1246
    %v1248 = vrcp.pop %v1242
    %v1249 = vmul.f32 1.0, %v1248
    %v1250 = vrcp.pop %v1243
    %v1251 = vmul.f32 1.0, %v1250
    %1256 = vrot.lane.b32.xlu0 %v1245, 96
    %v1257 = vpop.permute.xlu0 %1256
    %1258 = vrot.lane.b32.xlu0 %v1247, 96
    %v1259 = vpop.permute.xlu0 %1258
    %1260 = vrot.lane.b32.xlu0 %v1249, 96
    %v1261 = vpop.permute.xlu0 %1260
    %1262 = vrot.lane.b32.xlu0 %v1251, 96
    %v1263 = vpop.permute.xlu0 %1262
    %v1268 = vmul.f32 %v1224, %v1257
    %v1269 = vmul.f32 %v1225, %v1259
    %v1270 = vmul.f32 %v1226, %v1261
    %v1271 = vmul.f32 %v1227, %v1263
    %v1272 = vsub.f32 1.0, %v1245
    %v1273 = vsub.f32 1.0, %v1247
    %v1274 = vsub.f32 1.0, %v1249
    %v1275 = vsub.f32 1.0, %v1251
    %1280 = vrot.lane.b32.xlu0 %v1272, 96
    %v1281 = vpop.permute.xlu0 %1280
    %1282 = vrot.lane.b32.xlu0 %v1273, 96
    %v1283 = vpop.permute.xlu0 %1282
    %1284 = vrot.lane.b32.xlu0 %v1274, 96
    %v1285 = vpop.permute.xlu0 %1284
    %1286 = vrot.lane.b32.xlu0 %v1275, 96
    %v1287 = vpop.permute.xlu0 %1286
    %v1292 = vmul.f32 %v1101, %v1281
    %v1293 = vmul.f32 %v1106, %v1283
    %v1294 = vmul.f32 %v1111, %v1285
    %v1295 = vmul.f32 %v1116, %v1287
    %v1296 = vadd.f32 %v1268, %v1292
    %v1297 = vadd.f32 %v1269, %v1293
    %v1298 = vadd.f32 %v1270, %v1294
    %v1299 = vadd.f32 %v1271, %v1295
    %s1300 = scalar_lea.vmem %s5, 32
    %v1301 = vld [vmem:[%s1300] sm:$0xff]
    %v1302 = vld [vmem:[%s1300 + $0x8] sm:$0xff]
    %v1303 = vld [vmem:[%s1300 + $0x10] sm:$0xff]
    %v1304 = vld [vmem:[%s1300 + $0x18] sm:$0xff]
    %v1305 = vlaneseq
    %v1306 = vshrl.u32 %v1305, 7
    %v1307 = vsub.s32 6, %v1306
    %v1308 = vrot.slane %v33, %v1307
    %v1310 = vsel %vm241, %v1296, 0
    %v1313 = vsel %vm241, %v1297, 0
    %v1316 = vsel %vm241, %v1298, 0
    %v1319 = vsel %vm241, %v1299, 0
    %1321 = vmatprep.subr.mxu0 0.0
    %1322 = vmatpush1.msra.mxu0 %v1301
    %1323 = vmatprep.subr.mxu0 0.0
    %1324 = vmatpush1.msra.mxu0 %v1302
    %1325 = vmatprep.subr.mxu0 0.0
    %1326 = vmatpush1.msra.mxu0 %v1303
    %1327 = vmatprep.subr.mxu0 0.0
    %1328 = vmatpush1.msra.mxu0 %v1304
    %1329 = vmatprep.subr.mxu0 0.0
    %1330 = vmatpush1.msra.mxu0 0.0
    %1331 = vmatprep.subr.mxu0 0.0
    %1332 = vmatpush1.msra.mxu0 0.0
    %1333 = vmatprep.subr.mxu0 0.0
    %1334 = vmatpush1.msra.mxu0 0.0
    %1335 = vmatprep.subr.mxu0 0.0
    %1336 = vmatpush1.msra.mxu0 0.0
    %1337 = vmatprep.subr.mxu0 0.0
    %1338 = vmatpush1.msra.mxu0 0.0
    %1339 = vmatprep.subr.mxu0 0.0
    %1340 = vmatpush1.msra.mxu0 0.0
    %1341 = vmatprep.subr.mxu0 0.0
    %1342 = vmatpush1.msra.mxu0 0.0
    %1343 = vmatprep.subr.mxu0 0.0
    %1344 = vmatpush1.msra.mxu0 0.0
    %1345 = vmatprep.subr.mxu0 0.0
    %1346 = vmatpush1.msra.mxu0 0.0
    %1347 = vmatprep.subr.mxu0 0.0
    %1348 = vmatpush1.msra.mxu0 0.0
    %1349 = vmatprep.subr.mxu0 0.0
    %1350 = vmatpush1.msra.mxu0 0.0
    %1351 = vmatprep.subr.mxu0 0.0
    %1352 = vmatpush1.msra.mxu0 0.0
    %1353 = vmatprep.subr.mxu0 0.0
    %1354 = vmatpush1.msra.mxu0 0.0
    %1355 = vmatprep.subr.mxu0 0.0
    %1356 = vmatpush1.msra.mxu0 0.0
    %1357 = vmatprep.subr.mxu0 0.0
    %1358 = vmatpush1.msra.mxu0 0.0
    %1359 = vmatprep.subr.mxu0 0.0
    %1360 = vmatpush1.msra.mxu0 0.0
    %1361 = vmatprep.subr.mxu0 0.0
    %1362 = vmatpush1.msra.mxu0 0.0
    %1363 = vmatprep.subr.mxu0 0.0
    %1364 = vmatpush1.msra.mxu0 0.0
    %1365 = vmatprep.subr.mxu0 0.0
    %1366 = vmatpush1.msra.mxu0 0.0
    %1367 = vmatprep.subr.mxu0 0.0
    %1368 = vmatpush1.msra.mxu0 0.0
    %1369 = vmatprep.subr.mxu0 0.0
    %1370 = vmatpush1.msra.mxu0 0.0
    %1371 = vmatprep.subr.mxu0 0.0
    %1372 = vmatpush1.msra.mxu0 0.0
    %1373 = vmatprep.subr.mxu0 0.0
    %1374 = vmatpush1.msra.mxu0 0.0
    %1375 = vmatprep.subr.mxu0 0.0
    %1376 = vmatpush1.msra.mxu0 0.0
    %1377 = vmatprep.subr.mxu0 0.0
    %1378 = vmatpush1.msra.mxu0 0.0
    %1379 = vmatprep.subr.mxu0 0.0
    %1380 = vmatpush1.msra.mxu0 0.0
    %1381 = vmatprep.subr.mxu0 0.0
    %1382 = vmatpush1.msra.mxu0 0.0
    %1383 = vmatprep.subr.mxu0 0.0
    %1384 = vmatpush1.msra.mxu0 0.0
    %1385 = vmatprep.mubr.f32.mxu0 0.0
    %1386 = vmatmul.mubr.f32.gmra.mrb[0].mxu0 %v1310
    %v1387 = vpop.f32.mrb[0].mxu0
    %v1388 = vadd.f32 %v1308, %v1387
    %v1389 = vpop.f32.mrb[0].mxu0
    %1390 = vmatprep.mubr.f32.mxu0 0.0
    %1391 = vmatmul.mubr.f32.gmra.mrb[0].mxu0 %v1313
    %v1392 = vpop.f32.mrb[0].mxu0
    %v1393 = vadd.f32 %v1308, %v1392
    %v1394 = vpop.f32.mrb[0].mxu0
    %1395 = vmatprep.mubr.f32.mxu0 0.0
    %1396 = vmatmul.mubr.f32.gmra.mrb[0].mxu0 %v1316
    %v1397 = vpop.f32.mrb[0].mxu0
    %v1398 = vadd.f32 %v1308, %v1397
    %v1399 = vpop.f32.mrb[0].mxu0
    %1400 = vmatprep.mubr.f32.mxu0 0.0
    %1401 = vmatmul.mubr.f32.gmra.mrb[0].mxu0 %v1319
    %v1402 = vpop.f32.mrb[0].mxu0
    %v1403 = vadd.f32 %v1308, %v1402
    %v1404 = vpop.f32.mrb[0].mxu0
    %1405 = vdwg.mxu0
    %v1406 = vmax.f32 %v1388, 0.0
    %v1407 = vmax.f32 %v1393, 0.0
    %v1408 = vmax.f32 %v1398, 0.0
    %v1409 = vmax.f32 %v1403, 0.0
    %v1410 = vxor.u32 %v1388, 2147483648
    %v1411 = vxor.u32 %v1393, 2147483648
    %v1412 = vxor.u32 %v1398, 2147483648
    %v1413 = vxor.u32 %v1403, 2147483648
    %v1414 = vmul.f32 %v1410, 1.442695
    %v1415 = vpow.pop %v1414
    %v1416 = vmul.f32 %v1411, 1.442695
    %v1417 = vpow.pop %v1416
    %v1418 = vmul.f32 %v1412, 1.442695
    %v1419 = vpow.pop %v1418
    %v1420 = vmul.f32 %v1413, 1.442695
    %v1421 = vpow.pop %v1420
    %v1422 = vadd.f32 %v1415, 1.0
    %v1423 = vadd.f32 %v1417, 1.0
    %v1424 = vadd.f32 %v1419, 1.0
    %v1425 = vadd.f32 %v1421, 1.0
    %v1426 = vrcp.pop %v1422
    %v1427 = vmul.f32 1.0, %v1426
    %v1428 = vrcp.pop %v1423
    %v1429 = vmul.f32 1.0, %v1428
    %v1430 = vrcp.pop %v1424
    %v1431 = vmul.f32 1.0, %v1430
    %v1432 = vrcp.pop %v1425
    %v1433 = vmul.f32 1.0, %v1432
    %1438 = vrot.lane.b32.xlu0 %v1427, 96
    %v1439 = vpop.permute.xlu0 %1438
    %1440 = vrot.lane.b32.xlu0 %v1429, 96
    %v1441 = vpop.permute.xlu0 %1440
    %1442 = vrot.lane.b32.xlu0 %v1431, 96
    %v1443 = vpop.permute.xlu0 %1442
    %1444 = vrot.lane.b32.xlu0 %v1433, 96
    %v1445 = vpop.permute.xlu0 %1444
    %v1450 = vmul.f32 %v1406, %v1439
    %v1451 = vmul.f32 %v1407, %v1441
    %v1452 = vmul.f32 %v1408, %v1443
    %v1453 = vmul.f32 %v1409, %v1445
    %v1454 = vsub.f32 1.0, %v1427
    %v1455 = vsub.f32 1.0, %v1429
    %v1456 = vsub.f32 1.0, %v1431
    %v1457 = vsub.f32 1.0, %v1433
    %1462 = vrot.lane.b32.xlu0 %v1454, 96
    %v1463 = vpop.permute.xlu0 %1462
    %1464 = vrot.lane.b32.xlu0 %v1455, 96
    %v1465 = vpop.permute.xlu0 %1464
    %1466 = vrot.lane.b32.xlu0 %v1456, 96
    %v1467 = vpop.permute.xlu0 %1466
    %1468 = vrot.lane.b32.xlu0 %v1457, 96
    %v1469 = vpop.permute.xlu0 %1468
    %v1474 = vmul.f32 %v1296, %v1463
    %v1475 = vmul.f32 %v1297, %v1465
    %v1476 = vmul.f32 %v1298, %v1467
    %v1477 = vmul.f32 %v1299, %v1469
    %v1478 = vadd.f32 %v1450, %v1474
    %v1479 = vadd.f32 %v1451, %v1475
    %v1480 = vadd.f32 %v1452, %v1476
    %v1481 = vadd.f32 %v1453, %v1477
    %s1482 = scalar_lea.vmem %s5, 64
    %v1483 = vld [vmem:[%s1482] sm:$0xff]
    %v1484 = vld [vmem:[%s1482 + $0x8] sm:$0xff]
    %v1485 = vld [vmem:[%s1482 + $0x10] sm:$0xff]
    %v1486 = vld [vmem:[%s1482 + $0x18] sm:$0xff]
    %v1487 = vlaneseq
    %v1488 = vshrl.u32 %v1487, 7
    %v1489 = vsub.s32 7, %v1488
    %v1490 = vrot.slane %v33, %v1489
    %v1492 = vsel %vm241, %v1478, 0
    %v1495 = vsel %vm241, %v1479, 0
    %v1498 = vsel %vm241, %v1480, 0
    %v1501 = vsel %vm241, %v1481, 0
    %1503 = vmatprep.subr.mxu0 0.0
    %1504 = vmatpush1.msra.mxu0 %v1483
    %1505 = vmatprep.subr.mxu0 0.0
    %1506 = vmatpush1.msra.mxu0 %v1484
    %1507 = vmatprep.subr.mxu0 0.0
    %1508 = vmatpush1.msra.mxu0 %v1485
    %1509 = vmatprep.subr.mxu0 0.0
    %1510 = vmatpush1.msra.mxu0 %v1486
    %1511 = vmatprep.subr.mxu0 0.0
    %1512 = vmatpush1.msra.mxu0 0.0
    %1513 = vmatprep.subr.mxu0 0.0
    %1514 = vmatpush1.msra.mxu0 0.0
    %1515 = vmatprep.subr.mxu0 0.0
    %1516 = vmatpush1.msra.mxu0 0.0
    %1517 = vmatprep.subr.mxu0 0.0
    %1518 = vmatpush1.msra.mxu0 0.0
    %1519 = vmatprep.subr.mxu0 0.0
    %1520 = vmatpush1.msra.mxu0 0.0
    %1521 = vmatprep.subr.mxu0 0.0
    %1522 = vmatpush1.msra.mxu0 0.0
    %1523 = vmatprep.subr.mxu0 0.0
    %1524 = vmatpush1.msra.mxu0 0.0
    %1525 = vmatprep.subr.mxu0 0.0
    %1526 = vmatpush1.msra.mxu0 0.0
    %1527 = vmatprep.subr.mxu0 0.0
    %1528 = vmatpush1.msra.mxu0 0.0
    %1529 = vmatprep.subr.mxu0 0.0
    %1530 = vmatpush1.msra.mxu0 0.0
    %1531 = vmatprep.subr.mxu0 0.0
    %1532 = vmatpush1.msra.mxu0 0.0
    %1533 = vmatprep.subr.mxu0 0.0
    %1534 = vmatpush1.msra.mxu0 0.0
    %1535 = vmatprep.subr.mxu0 0.0
    %1536 = vmatpush1.msra.mxu0 0.0
    %1537 = vmatprep.subr.mxu0 0.0
    %1538 = vmatpush1.msra.mxu0 0.0
    %1539 = vmatprep.subr.mxu0 0.0
    %1540 = vmatpush1.msra.mxu0 0.0
    %1541 = vmatprep.subr.mxu0 0.0
    %1542 = vmatpush1.msra.mxu0 0.0
    %1543 = vmatprep.subr.mxu0 0.0
    %1544 = vmatpush1.msra.mxu0 0.0
    %1545 = vmatprep.subr.mxu0 0.0
    %1546 = vmatpush1.msra.mxu0 0.0
    %1547 = vmatprep.subr.mxu0 0.0
    %1548 = vmatpush1.msra.mxu0 0.0
    %1549 = vmatprep.subr.mxu0 0.0
    %1550 = vmatpush1.msra.mxu0 0.0
    %1551 = vmatprep.subr.mxu0 0.0
    %1552 = vmatpush1.msra.mxu0 0.0
    %1553 = vmatprep.subr.mxu0 0.0
    %1554 = vmatpush1.msra.mxu0 0.0
    %1555 = vmatprep.subr.mxu0 0.0
    %1556 = vmatpush1.msra.mxu0 0.0
    %1557 = vmatprep.subr.mxu0 0.0
    %1558 = vmatpush1.msra.mxu0 0.0
    %1559 = vmatprep.subr.mxu0 0.0
    %1560 = vmatpush1.msra.mxu0 0.0
    %1561 = vmatprep.subr.mxu0 0.0
    %1562 = vmatpush1.msra.mxu0 0.0
    %1563 = vmatprep.subr.mxu0 0.0
    %1564 = vmatpush1.msra.mxu0 0.0
    %1565 = vmatprep.subr.mxu0 0.0
    %1566 = vmatpush1.msra.mxu0 0.0
    %1567 = vmatprep.mubr.f32.mxu0 0.0
    %1568 = vmatmul.mubr.f32.gmra.mrb[0].mxu0 %v1492
    %v1569 = vpop.f32.mrb[0].mxu0
    %v1570 = vadd.f32 %v1490, %v1569
    %v1571 = vpop.f32.mrb[0].mxu0
    %1572 = vmatprep.mubr.f32.mxu0 0.0
    %1573 = vmatmul.mubr.f32.gmra.mrb[0].mxu0 %v1495
    %v1574 = vpop.f32.mrb[0].mxu0
    %v1575 = vadd.f32 %v1490, %v1574
    %v1576 = vpop.f32.mrb[0].mxu0
    %1577 = vmatprep.mubr.f32.mxu0 0.0
    %1578 = vmatmul.mubr.f32.gmra.mrb[0].mxu0 %v1498
    %v1579 = vpop.f32.mrb[0].mxu0
    %v1580 = vadd.f32 %v1490, %v1579
    %v1581 = vpop.f32.mrb[0].mxu0
    %1582 = vmatprep.mubr.f32.mxu0 0.0
    %1583 = vmatmul.mubr.f32.gmra.mrb[0].mxu0 %v1501
    %v1584 = vpop.f32.mrb[0].mxu0
    %v1585 = vadd.f32 %v1490, %v1584
    %v1586 = vpop.f32.mrb[0].mxu0
    %1587 = vdwg.mxu0
    %v1588 = vmax.f32 %v1570, 0.0
    %v1589 = vmax.f32 %v1575, 0.0
    %v1590 = vmax.f32 %v1580, 0.0
    %v1591 = vmax.f32 %v1585, 0.0
    %v1592 = vxor.u32 %v1570, 2147483648
    %v1593 = vxor.u32 %v1575, 2147483648
    %v1594 = vxor.u32 %v1580, 2147483648
    %v1595 = vxor.u32 %v1585, 2147483648
    %v1596 = vmul.f32 %v1592, 1.442695
    %v1597 = vpow.pop %v1596
    %v1598 = vmul.f32 %v1593, 1.442695
    %v1599 = vpow.pop %v1598
    %v1600 = vmul.f32 %v1594, 1.442695
    %v1601 = vpow.pop %v1600
    %v1602 = vmul.f32 %v1595, 1.442695
    %v1603 = vpow.pop %v1602
    %v1604 = vadd.f32 %v1597, 1.0
    %v1605 = vadd.f32 %v1599, 1.0
    %v1606 = vadd.f32 %v1601, 1.0
    %v1607 = vadd.f32 %v1603, 1.0
    %v1608 = vrcp.pop %v1604
    %v1609 = vmul.f32 1.0, %v1608
    %v1610 = vrcp.pop %v1605
    %v1611 = vmul.f32 1.0, %v1610
    %v1612 = vrcp.pop %v1606
    %v1613 = vmul.f32 1.0, %v1612
    %v1614 = vrcp.pop %v1607
    %v1615 = vmul.f32 1.0, %v1614
    %1620 = vrot.lane.b32.xlu0 %v1609, 96
    %v1621 = vpop.permute.xlu0 %1620
    %1622 = vrot.lane.b32.xlu0 %v1611, 96
    %v1623 = vpop.permute.xlu0 %1622
    %1624 = vrot.lane.b32.xlu0 %v1613, 96
    %v1625 = vpop.permute.xlu0 %1624
    %1626 = vrot.lane.b32.xlu0 %v1615, 96
    %v1627 = vpop.permute.xlu0 %1626
    %v1632 = vmul.f32 %v1588, %v1621
    %v1633 = vmul.f32 %v1589, %v1623
    %v1634 = vmul.f32 %v1590, %v1625
    %v1635 = vmul.f32 %v1591, %v1627
    %v1636 = vsub.f32 1.0, %v1609
    %v1637 = vsub.f32 1.0, %v1611
    %v1638 = vsub.f32 1.0, %v1613
    %v1639 = vsub.f32 1.0, %v1615
    %1644 = vrot.lane.b32.xlu0 %v1636, 96
    %v1645 = vpop.permute.xlu0 %1644
    %1646 = vrot.lane.b32.xlu0 %v1637, 96
    %v1647 = vpop.permute.xlu0 %1646
    %1648 = vrot.lane.b32.xlu0 %v1638, 96
    %v1649 = vpop.permute.xlu0 %1648
    %1650 = vrot.lane.b32.xlu0 %v1639, 96
    %v1651 = vpop.permute.xlu0 %1650
    %v1656 = vmul.f32 %v1478, %v1645
    %v1657 = vmul.f32 %v1479, %v1647
    %v1658 = vmul.f32 %v1480, %v1649
    %v1659 = vmul.f32 %v1481, %v1651
    %v1660 = vadd.f32 %v1632, %v1656
    %v1661 = vadd.f32 %v1633, %v1657
    %v1662 = vadd.f32 %v1634, %v1658
    %v1663 = vadd.f32 %v1635, %v1659
    %s1664 = scalar_lea.vmem %s5, 96
    %v1665 = vld [vmem:[%s1664] sm:$0xff]
    %v1666 = vld [vmem:[%s1664 + $0x8] sm:$0xff]
    %v1667 = vld [vmem:[%s1664 + $0x10] sm:$0xff]
    %v1668 = vld [vmem:[%s1664 + $0x18] sm:$0xff]
    %v1669 = vlaneseq
    %v1670 = vshrl.u32 %v1669, 7
    %v1671 = vsub.s32 0, %v1670
    %v1672 = vrot.slane %v35, %v1671
    %v1674 = vsel %vm241, %v1660, 0
    %v1677 = vsel %vm241, %v1661, 0
    %v1680 = vsel %vm241, %v1662, 0
    %v1683 = vsel %vm241, %v1663, 0
    %1685 = vmatprep.subr.mxu0 0.0
    %1686 = vmatpush1.msra.mxu0 %v1665
    %1687 = vmatprep.subr.mxu0 0.0
    %1688 = vmatpush1.msra.mxu0 %v1666
    %1689 = vmatprep.subr.mxu0 0.0
    %1690 = vmatpush1.msra.mxu0 %v1667
    %1691 = vmatprep.subr.mxu0 0.0
    %1692 = vmatpush1.msra.mxu0 %v1668
    %1693 = vmatprep.subr.mxu0 0.0
    %1694 = vmatpush1.msra.mxu0 0.0
    %1695 = vmatprep.subr.mxu0 0.0
    %1696 = vmatpush1.msra.mxu0 0.0
    %1697 = vmatprep.subr.mxu0 0.0
    %1698 = vmatpush1.msra.mxu0 0.0
    %1699 = vmatprep.subr.mxu0 0.0
    %1700 = vmatpush1.msra.mxu0 0.0
    %1701 = vmatprep.subr.mxu0 0.0
    %1702 = vmatpush1.msra.mxu0 0.0
    %1703 = vmatprep.subr.mxu0 0.0
    %1704 = vmatpush1.msra.mxu0 0.0
    %1705 = vmatprep.subr.mxu0 0.0
    %1706 = vmatpush1.msra.mxu0 0.0
    %1707 = vmatprep.subr.mxu0 0.0
    %1708 = vmatpush1.msra.mxu0 0.0
    %1709 = vmatprep.subr.mxu0 0.0
    %1710 = vmatpush1.msra.mxu0 0.0
    %1711 = vmatprep.subr.mxu0 0.0
    %1712 = vmatpush1.msra.mxu0 0.0
    %1713 = vmatprep.subr.mxu0 0.0
    %1714 = vmatpush1.msra.mxu0 0.0
    %1715 = vmatprep.subr.mxu0 0.0
    %1716 = vmatpush1.msra.mxu0 0.0
    %1717 = vmatprep.subr.mxu0 0.0
    %1718 = vmatpush1.msra.mxu0 0.0
    %1719 = vmatprep.subr.mxu0 0.0
    %1720 = vmatpush1.msra.mxu0 0.0
    %1721 = vmatprep.subr.mxu0 0.0
    %1722 = vmatpush1.msra.mxu0 0.0
    %1723 = vmatprep.subr.mxu0 0.0
    %1724 = vmatpush1.msra.mxu0 0.0
    %1725 = vmatprep.subr.mxu0 0.0
    %1726 = vmatpush1.msra.mxu0 0.0
    %1727 = vmatprep.subr.mxu0 0.0
    %1728 = vmatpush1.msra.mxu0 0.0
    %1729 = vmatprep.subr.mxu0 0.0
    %1730 = vmatpush1.msra.mxu0 0.0
    %1731 = vmatprep.subr.mxu0 0.0
    %1732 = vmatpush1.msra.mxu0 0.0
    %1733 = vmatprep.subr.mxu0 0.0
    %1734 = vmatpush1.msra.mxu0 0.0
    %1735 = vmatprep.subr.mxu0 0.0
    %1736 = vmatpush1.msra.mxu0 0.0
    %1737 = vmatprep.subr.mxu0 0.0
    %1738 = vmatpush1.msra.mxu0 0.0
    %1739 = vmatprep.subr.mxu0 0.0
    %1740 = vmatpush1.msra.mxu0 0.0
    %1741 = vmatprep.subr.mxu0 0.0
    %1742 = vmatpush1.msra.mxu0 0.0
    %1743 = vmatprep.subr.mxu0 0.0
    %1744 = vmatpush1.msra.mxu0 0.0
    %1745 = vmatprep.subr.mxu0 0.0
    %1746 = vmatpush1.msra.mxu0 0.0
    %1747 = vmatprep.subr.mxu0 0.0
    %1748 = vmatpush1.msra.mxu0 0.0
    %1749 = vmatprep.mubr.f32.mxu0 0.0
    %1750 = vmatmul.mubr.f32.gmra.mrb[0].mxu0 %v1674
    %v1751 = vpop.f32.mrb[0].mxu0
    %v1752 = vadd.f32 %v1672, %v1751
    %v1753 = vpop.f32.mrb[0].mxu0
    %1754 = vmatprep.mubr.f32.mxu0 0.0
    %1755 = vmatmul.mubr.f32.gmra.mrb[0].mxu0 %v1677
    %v1756 = vpop.f32.mrb[0].mxu0
    %v1757 = vadd.f32 %v1672, %v1756
    %v1758 = vpop.f32.mrb[0].mxu0
    %1759 = vmatprep.mubr.f32.mxu0 0.0
    %1760 = vmatmul.mubr.f32.gmra.mrb[0].mxu0 %v1680
    %v1761 = vpop.f32.mrb[0].mxu0
    %v1762 = vadd.f32 %v1672, %v1761
    %v1763 = vpop.f32.mrb[0].mxu0
    %1764 = vmatprep.mubr.f32.mxu0 0.0
    %1765 = vmatmul.mubr.f32.gmra.mrb[0].mxu0 %v1683
    %v1766 = vpop.f32.mrb[0].mxu0
    %v1767 = vadd.f32 %v1672, %v1766
    %v1768 = vpop.f32.mrb[0].mxu0
    %1769 = vdwg.mxu0
    %v1770 = vmax.f32 %v1752, 0.0
    %v1771 = vmax.f32 %v1757, 0.0
    %v1772 = vmax.f32 %v1762, 0.0
    %v1773 = vmax.f32 %v1767, 0.0
    %v1774 = vxor.u32 %v1752, 2147483648
    %v1775 = vxor.u32 %v1757, 2147483648
    %v1776 = vxor.u32 %v1762, 2147483648
    %v1777 = vxor.u32 %v1767, 2147483648
    %v1778 = vmul.f32 %v1774, 1.442695
    %v1779 = vpow.pop %v1778
    %v1780 = vmul.f32 %v1775, 1.442695
    %v1781 = vpow.pop %v1780
    %v1782 = vmul.f32 %v1776, 1.442695
    %v1783 = vpow.pop %v1782
    %v1784 = vmul.f32 %v1777, 1.442695
    %v1785 = vpow.pop %v1784
    %v1786 = vadd.f32 %v1779, 1.0
    %v1787 = vadd.f32 %v1781, 1.0
    %v1788 = vadd.f32 %v1783, 1.0
    %v1789 = vadd.f32 %v1785, 1.0
    %v1790 = vrcp.pop %v1786
    %v1791 = vmul.f32 1.0, %v1790
    %v1792 = vrcp.pop %v1787
    %v1793 = vmul.f32 1.0, %v1792
    %v1794 = vrcp.pop %v1788
    %v1795 = vmul.f32 1.0, %v1794
    %v1796 = vrcp.pop %v1789
    %v1797 = vmul.f32 1.0, %v1796
    %1802 = vrot.lane.b32.xlu0 %v1791, 96
    %v1803 = vpop.permute.xlu0 %1802
    %1804 = vrot.lane.b32.xlu0 %v1793, 96
    %v1805 = vpop.permute.xlu0 %1804
    %1806 = vrot.lane.b32.xlu0 %v1795, 96
    %v1807 = vpop.permute.xlu0 %1806
    %1808 = vrot.lane.b32.xlu0 %v1797, 96
    %v1809 = vpop.permute.xlu0 %1808
    %v1814 = vmul.f32 %v1770, %v1803
    %v1815 = vmul.f32 %v1771, %v1805
    %v1816 = vmul.f32 %v1772, %v1807
    %v1817 = vmul.f32 %v1773, %v1809
    %v1818 = vsub.f32 1.0, %v1791
    %v1819 = vsub.f32 1.0, %v1793
    %v1820 = vsub.f32 1.0, %v1795
    %v1821 = vsub.f32 1.0, %v1797
    %1826 = vrot.lane.b32.xlu0 %v1818, 96
    %v1827 = vpop.permute.xlu0 %1826
    %1828 = vrot.lane.b32.xlu0 %v1819, 96
    %v1829 = vpop.permute.xlu0 %1828
    %1830 = vrot.lane.b32.xlu0 %v1820, 96
    %v1831 = vpop.permute.xlu0 %1830
    %1832 = vrot.lane.b32.xlu0 %v1821, 96
    %v1833 = vpop.permute.xlu0 %1832
    %v1838 = vmul.f32 %v1660, %v1827
    %v1839 = vmul.f32 %v1661, %v1829
    %v1840 = vmul.f32 %v1662, %v1831
    %v1841 = vmul.f32 %v1663, %v1833
    %v1842 = vadd.f32 %v1814, %v1838
    %v1843 = vadd.f32 %v1815, %v1839
    %v1844 = vadd.f32 %v1816, %v1840
    %v1845 = vadd.f32 %v1817, %v1841
    %v1846 = vld [vmem:[%s6] sm:$0xff]
    %v1847 = vld [vmem:[%s6 + $0x8] sm:$0xff]
    %v1848 = vld [vmem:[%s6 + $0x10] sm:$0xff]
    %v1849 = vld [vmem:[%s6 + $0x18] sm:$0xff]
    %v1850 = vld [vmem:[%s6 + $0x20] sm:$0xff]
    %v1851 = vld [vmem:[%s6 + $0x28] sm:$0xff]
    %v1852 = vld [vmem:[%s6 + $0x30] sm:$0xff]
    %v1853 = vld [vmem:[%s6 + $0x38] sm:$0xff]
    %v1854 = vlaneseq
    %v1855 = vshrl.u32 %v1854, 7
    %v1856 = vsub.s32 1, %v1855
    %v1857 = vrot.slane %v35, %v1856
    %v1858 = vlaneseq
    %v1859 = vshrl.u32 %v1858, 7
    %v1860 = vsub.s32 1, %v1859
    %v1861 = vrot.slane %v36, %v1860
    %v1863 = vsel %vm241, %v1842, 0
    %v1866 = vsel %vm241, %v1843, 0
    %v1869 = vsel %vm241, %v1844, 0
    %v1872 = vsel %vm241, %v1845, 0
    %1874 = vmatprep.subr.mxu0 %v1847
    %1875 = vmatpush1.msra.mxu0 %v1846
    %1876 = vmatprep.subr.mxu0 %v1849
    %1877 = vmatpush1.msra.mxu0 %v1848
    %1878 = vmatprep.subr.mxu0 %v1851
    %1879 = vmatpush1.msra.mxu0 %v1850
    %1880 = vmatprep.subr.mxu0 %v1853
    %1881 = vmatpush1.msra.mxu0 %v1852
    %1882 = vmatprep.subr.mxu0 0.0
    %1883 = vmatpush1.msra.mxu0 0.0
    %1884 = vmatprep.subr.mxu0 0.0
    %1885 = vmatpush1.msra.mxu0 0.0
    %1886 = vmatprep.subr.mxu0 0.0
    %1887 = vmatpush1.msra.mxu0 0.0
    %1888 = vmatprep.subr.mxu0 0.0
    %1889 = vmatpush1.msra.mxu0 0.0
    %1890 = vmatprep.subr.mxu0 0.0
    %1891 = vmatpush1.msra.mxu0 0.0
    %1892 = vmatprep.subr.mxu0 0.0
    %1893 = vmatpush1.msra.mxu0 0.0
    %1894 = vmatprep.subr.mxu0 0.0
    %1895 = vmatpush1.msra.mxu0 0.0
    %1896 = vmatprep.subr.mxu0 0.0
    %1897 = vmatpush1.msra.mxu0 0.0
    %1898 = vmatprep.subr.mxu0 0.0
    %1899 = vmatpush1.msra.mxu0 0.0
    %1900 = vmatprep.subr.mxu0 0.0
    %1901 = vmatpush1.msra.mxu0 0.0
    %1902 = vmatprep.subr.mxu0 0.0
    %1903 = vmatpush1.msra.mxu0 0.0
    %1904 = vmatprep.subr.mxu0 0.0
    %1905 = vmatpush1.msra.mxu0 0.0
    %1906 = vmatprep.subr.mxu0 0.0
    %1907 = vmatpush1.msra.mxu0 0.0
    %1908 = vmatprep.subr.mxu0 0.0
    %1909 = vmatpush1.msra.mxu0 0.0
    %1910 = vmatprep.subr.mxu0 0.0
    %1911 = vmatpush1.msra.mxu0 0.0
    %1912 = vmatprep.subr.mxu0 0.0
    %1913 = vmatpush1.msra.mxu0 0.0
    %1914 = vmatprep.subr.mxu0 0.0
    %1915 = vmatpush1.msra.mxu0 0.0
    %1916 = vmatprep.subr.mxu0 0.0
    %1917 = vmatpush1.msra.mxu0 0.0
    %1918 = vmatprep.subr.mxu0 0.0
    %1919 = vmatpush1.msra.mxu0 0.0
    %1920 = vmatprep.subr.mxu0 0.0
    %1921 = vmatpush1.msra.mxu0 0.0
    %1922 = vmatprep.subr.mxu0 0.0
    %1923 = vmatpush1.msra.mxu0 0.0
    %1924 = vmatprep.subr.mxu0 0.0
    %1925 = vmatpush1.msra.mxu0 0.0
    %1926 = vmatprep.subr.mxu0 0.0
    %1927 = vmatpush1.msra.mxu0 0.0
    %1928 = vmatprep.subr.mxu0 0.0
    %1929 = vmatpush1.msra.mxu0 0.0
    %1930 = vmatprep.subr.mxu0 0.0
    %1931 = vmatpush1.msra.mxu0 0.0
    %1932 = vmatprep.subr.mxu0 0.0
    %1933 = vmatpush1.msra.mxu0 0.0
    %1934 = vmatprep.subr.mxu0 0.0
    %1935 = vmatpush1.msra.mxu0 0.0
    %1936 = vmatprep.subr.mxu0 0.0
    %1937 = vmatpush1.msra.mxu0 0.0
    %1938 = vmatprep.mubr.f32.mxu0 0.0
    %1939 = vmatmul.mubr.f32.gmra.mrb[0].mxu0 %v1863
    %v1940 = vpop.f32.mrb[0].mxu0
    %v1941 = vadd.f32 %v1857, %v1940
    %v1942 = vpop.f32.mrb[0].mxu0
    %v1943 = vadd.f32 %v1861, %v1942
    %1944 = vmatprep.mubr.f32.mxu0 0.0
    %1945 = vmatmul.mubr.f32.gmra.mrb[0].mxu0 %v1866
    %v1946 = vpop.f32.mrb[0].mxu0
    %v1947 = vadd.f32 %v1857, %v1946
    %v1948 = vpop.f32.mrb[0].mxu0
    %v1949 = vadd.f32 %v1861, %v1948
    %1950 = vmatprep.mubr.f32.mxu0 0.0
    %1951 = vmatmul.mubr.f32.gmra.mrb[0].mxu0 %v1869
    %v1952 = vpop.f32.mrb[0].mxu0
    %v1953 = vadd.f32 %v1857, %v1952
    %v1954 = vpop.f32.mrb[0].mxu0
    %v1955 = vadd.f32 %v1861, %v1954
    %1956 = vmatprep.mubr.f32.mxu0 0.0
    %1957 = vmatmul.mubr.f32.gmra.mrb[0].mxu0 %v1872
    %v1958 = vpop.f32.mrb[0].mxu0
    %v1959 = vadd.f32 %v1857, %v1958
    %v1960 = vpop.f32.mrb[0].mxu0
    %v1961 = vadd.f32 %v1861, %v1960
    %1962 = vdwg.mxu0
    %vm1963 = vcmp.lt.s32.totalorder %v48, 2
    %v1964 = vsel %vm1963, 1, 0
    %v1965 = vcvt.s32.f32 %v1964
    %v1966 = vsub.f32 1.0, %v1965
    %v1967 = vld [vmem:[%s7] sm:$0xff]
    %v1968 = vld [vmem:[%s7 + $0x8] sm:$0xff]
    %v1969 = vld [vmem:[%s7 + $0x10] sm:$0xff]
    %v1970 = vld [vmem:[%s7 + $0x18] sm:$0xff]
    %v1971 = vld [vmem:[%s7 + $0x20] sm:$0xff]
    %v1972 = vld [vmem:[%s7 + $0x28] sm:$0xff]
    %v1973 = vld [vmem:[%s7 + $0x30] sm:$0xff]
    %v1974 = vld [vmem:[%s7 + $0x38] sm:$0xff]
    %v1976 = vrot.slane %v1953, 7
    %v1980 = vrot.slane %v1947, 5
    %v1981 = vrot.slane %v1949, 5
    %1982 = vrot.lane.b32.xlu0 %v1980, 32
    %v1983 = vpop.permute.xlu0 %1982
    %1984 = vrot.lane.b32.xlu0 %v1981, 32
    %v1985 = vpop.permute.xlu0 %1984
    %v1986 = vsel %vm241, %v1983, %v1985
    %v1990 = vrot.slane %v1959, 4
    %v1991 = vrot.slane %v1961, 4
    %1992 = vrot.lane.b32.xlu0 %v1990, 32
    %v1993 = vpop.permute.xlu0 %1992
    %1994 = vrot.lane.b32.xlu0 %v1991, 32
    %v1995 = vpop.permute.xlu0 %1994
    %v1996 = vsel %vm241, %v1993, %v1995
    %v1998 = vsel %vm147, %v1941, %v1976
    %v1999 = vsel %vm45, %v1998, %v1986
    %vm2000 = vcmask 1042432
    %v2001 = vsel %vm2000, %v1999, %v1996
    %v2002 = vadd.f32 %v2001, %v46
    %v2003 = vxor.u32 %v2002, 2147483648
    %v2004 = vmul.f32 %v2003, 1.442695
    %v2005 = vpow.pop %v2004
    %v2006 = vadd.f32 %v2005, 1.0
    %v2007 = vrcp.pop %v2006
    %v2008 = vmul.f32 1.0, %v2007
    %2010 = vrot.lane.b32.xlu0 %v46, 64
    %v2011 = vpop.permute.xlu0 %2010
    %v2013 = vmul.f32 %v2008, %v2011
    %2015 = vrot.lane.b32.xlu0 %v2013, 64
    %v2016 = vpop.permute.xlu0 %2015
    %v2018 = vadd.f32 %v2001, %v2016
    %v2019 = vtanh.pop %v2018
    %v2020 = vsub.f32 1.0, %v2008
    %2022 = vrot.lane.b32.xlu0 %v2019, 96
    %v2023 = vpop.permute.xlu0 %2022
    %v2025 = vmul.f32 %v2020, %v2023
    %v2026 = vmul.f32 %v2008, 0.0
    %v2027 = vadd.f32 %v2025, %v2026
    %v2028 = vmul.f32 %v2027, %v1965
    %v2029 = vmul.f32 %v2027, %v1966
    %2031 = vrot.lane.b32.xlu0 %v2028, 96
    %v2032 = vpop.permute.xlu0 %2031
    %v2034 = vsel %vm241, %v2032, %v2029
    %v2036 = vrot.slane %v1941, 1
    %v2038 = vrot.slane %v1947, 4
    %v2039 = vrot.slane %v1949, 4
    %2040 = vrot.lane.b32.xlu0 %v2038, 32
    %v2041 = vpop.permute.xlu0 %2040
    %2042 = vrot.lane.b32.xlu0 %v2039, 32
    %v2043 = vpop.permute.xlu0 %2042
    %v2044 = vsel %vm241, %v2041, %v2043
    %v2046 = vrot.slane %v1959, 3
    %v2047 = vrot.slane %v1961, 3
    %2048 = vrot.lane.b32.xlu0 %v2046, 32
    %v2049 = vpop.permute.xlu0 %2048
    %2050 = vrot.lane.b32.xlu0 %v2047, 32
    %v2051 = vpop.permute.xlu0 %2050
    %v2052 = vsel %vm241, %v2049, %v2051
    %v2054 = vsel %vm147, %v2036, %v1953
    %v2055 = vsel %vm45, %v2054, %v2044
    %v2056 = vsel %vm2000, %v2055, %v2052
    %v2058 = vsel %vm246, %v2034, 0
    %2060 = vmatprep.subr.mxu0 0.0
    %2061 = vmatpush1.msra.mxu0 %v1967
    %2062 = vmatprep.subr.mxu0 0.0
    %2063 = vmatpush1.msra.mxu0 %v1968
    %2064 = vmatprep.subr.mxu0 0.0
    %2065 = vmatpush1.msra.mxu0 %v1969
    %2066 = vmatprep.subr.mxu0 0.0
    %2067 = vmatpush1.msra.mxu0 %v1970
    %2068 = vmatprep.subr.mxu0 0.0
    %2069 = vmatpush1.msra.mxu0 %v1971
    %2070 = vmatprep.subr.mxu0 0.0
    %2071 = vmatpush1.msra.mxu0 %v1972
    %2072 = vmatprep.subr.mxu0 0.0
    %2073 = vmatpush1.msra.mxu0 %v1973
    %2074 = vmatprep.subr.mxu0 0.0
    %2075 = vmatpush1.msra.mxu0 %v1974
    %2076 = vmatprep.subr.mxu0 0.0
    %2077 = vmatpush1.msra.mxu0 0.0
    %2078 = vmatprep.subr.mxu0 0.0
    %2079 = vmatpush1.msra.mxu0 0.0
    %2080 = vmatprep.subr.mxu0 0.0
    %2081 = vmatpush1.msra.mxu0 0.0
    %2082 = vmatprep.subr.mxu0 0.0
    %2083 = vmatpush1.msra.mxu0 0.0
    %2084 = vmatprep.subr.mxu0 0.0
    %2085 = vmatpush1.msra.mxu0 0.0
    %2086 = vmatprep.subr.mxu0 0.0
    %2087 = vmatpush1.msra.mxu0 0.0
    %2088 = vmatprep.subr.mxu0 0.0
    %2089 = vmatpush1.msra.mxu0 0.0
    %2090 = vmatprep.subr.mxu0 0.0
    %2091 = vmatpush1.msra.mxu0 0.0
    %2092 = vmatprep.subr.mxu0 0.0
    %2093 = vmatpush1.msra.mxu0 0.0
    %2094 = vmatprep.subr.mxu0 0.0
    %2095 = vmatpush1.msra.mxu0 0.0
    %2096 = vmatprep.subr.mxu0 0.0
    %2097 = vmatpush1.msra.mxu0 0.0
    %2098 = vmatprep.subr.mxu0 0.0
    %2099 = vmatpush1.msra.mxu0 0.0
    %2100 = vmatprep.subr.mxu0 0.0
    %2101 = vmatpush1.msra.mxu0 0.0
    %2102 = vmatprep.subr.mxu0 0.0
    %2103 = vmatpush1.msra.mxu0 0.0
    %2104 = vmatprep.subr.mxu0 0.0
    %2105 = vmatpush1.msra.mxu0 0.0
    %2106 = vmatprep.subr.mxu0 0.0
    %2107 = vmatpush1.msra.mxu0 0.0
    %2108 = vmatprep.subr.mxu0 0.0
    %2109 = vmatpush1.msra.mxu0 0.0
    %2110 = vmatprep.subr.mxu0 0.0
    %2111 = vmatpush1.msra.mxu0 0.0
    %2112 = vmatprep.subr.mxu0 0.0
    %2113 = vmatpush1.msra.mxu0 0.0
    %2114 = vmatprep.subr.mxu0 0.0
    %2115 = vmatpush1.msra.mxu0 0.0
    %2116 = vmatprep.subr.mxu0 0.0
    %2117 = vmatpush1.msra.mxu0 0.0
    %2118 = vmatprep.subr.mxu0 0.0
    %2119 = vmatpush1.msra.mxu0 0.0
    %2120 = vmatprep.subr.mxu0 0.0
    %2121 = vmatpush1.msra.mxu0 0.0
    %2122 = vmatprep.subr.mxu0 0.0
    %2123 = vmatpush1.msra.mxu0 0.0
    %2124 = vmatprep.mubr.f32.mxu0 0.0
    %2125 = vmatmul.mubr.f32.gmra.mrb[0].mxu0 %v2058
    %v2126 = vpop.f32.mrb[0].mxu0
    %v2127 = vadd.f32 %v46, %v2126
    %v2128 = vpop.f32.mrb[0].mxu0
    %2129 = vdwg.mxu0
    %2130 = vrot.lane.b32.xlu0 %v2034, 96
    %v2131 = vpop.permute.xlu0 %2130
    %v2133 = vadd.f32 %v2034, %v2131
    %v2134 = vadd.f32 %v2056, %v2127
    %v2135 = vxor.u32 %v2134, 2147483648
    %v2136 = vmul.f32 %v2135, 1.442695
    %v2137 = vpow.pop %v2136
    %v2138 = vadd.f32 %v2137, 1.0
    %v2139 = vrcp.pop %v2138
    %v2140 = vmul.f32 1.0, %v2139
    %2142 = vrot.lane.b32.xlu0 %v2127, 64
    %v2143 = vpop.permute.xlu0 %2142
    %v2145 = vmul.f32 %v2140, %v2143
    %2147 = vrot.lane.b32.xlu0 %v2145, 64
    %v2148 = vpop.permute.xlu0 %2147
    %v2150 = vadd.f32 %v2056, %v2148
    %v2151 = vtanh.pop %v2150
    %v2152 = vsub.f32 1.0, %v2140
    %2154 = vrot.lane.b32.xlu0 %v2151, 96
    %v2155 = vpop.permute.xlu0 %2154
    %v2157 = vmul.f32 %v2152, %v2155
    %2159 = vrot.lane.b32.xlu0 %v2133, 32
    %v2160 = vpop.permute.xlu0 %2159
    %v2162 = vmul.f32 %v2140, %v2160
    %v2163 = vadd.f32 %v2157, %v2162
    %v2164 = vmul.f32 %v2163, %v1965
    %v2165 = vmul.f32 %v2163, %v1966
    %2167 = vrot.lane.b32.xlu0 %v2164, 96
    %v2168 = vpop.permute.xlu0 %2167
    %v2170 = vsel %vm241, %v2168, %v2165
    %v2171 = vrot.slane %v1941, 2
    %v2173 = vrot.slane %v1953, 1
    %v2175 = vrot.slane %v1947, 3
    %v2176 = vrot.slane %v1949, 3
    %2177 = vrot.lane.b32.xlu0 %v2175, 32
    %v2178 = vpop.permute.xlu0 %2177
    %2179 = vrot.lane.b32.xlu0 %v2176, 32
    %v2180 = vpop.permute.xlu0 %2179
    %v2181 = vsel %vm241, %v2178, %v2180
    %v2183 = vrot.slane %v1959, 2
    %v2184 = vrot.slane %v1961, 2
    %2185 = vrot.lane.b32.xlu0 %v2183, 32
    %v2186 = vpop.permute.xlu0 %2185
    %2187 = vrot.lane.b32.xlu0 %v2184, 32
    %v2188 = vpop.permute.xlu0 %2187
    %v2189 = vsel %vm241, %v2186, %v2188
    %v2191 = vsel %vm147, %v2171, %v2173
    %v2192 = vsel %vm45, %v2191, %v2181
    %v2193 = vsel %vm2000, %v2192, %v2189
    %v2195 = vsel %vm246, %v2170, 0
    %2197 = vmatprep.subr.mxu0 0.0
    %2198 = vmatpush1.msra.mxu0 %v1967
    %2199 = vmatprep.subr.mxu0 0.0
    %2200 = vmatpush1.msra.mxu0 %v1968
    %2201 = vmatprep.subr.mxu0 0.0
    %2202 = vmatpush1.msra.mxu0 %v1969
    %2203 = vmatprep.subr.mxu0 0.0
    %2204 = vmatpush1.msra.mxu0 %v1970
    %2205 = vmatprep.subr.mxu0 0.0
    %2206 = vmatpush1.msra.mxu0 %v1971
    %2207 = vmatprep.subr.mxu0 0.0
    %2208 = vmatpush1.msra.mxu0 %v1972
    %2209 = vmatprep.subr.mxu0 0.0
    %2210 = vmatpush1.msra.mxu0 %v1973
    %2211 = vmatprep.subr.mxu0 0.0
    %2212 = vmatpush1.msra.mxu0 %v1974
    %2213 = vmatprep.subr.mxu0 0.0
    %2214 = vmatpush1.msra.mxu0 0.0
    %2215 = vmatprep.subr.mxu0 0.0
    %2216 = vmatpush1.msra.mxu0 0.0
    %2217 = vmatprep.subr.mxu0 0.0
    %2218 = vmatpush1.msra.mxu0 0.0
    %2219 = vmatprep.subr.mxu0 0.0
    %2220 = vmatpush1.msra.mxu0 0.0
    %2221 = vmatprep.subr.mxu0 0.0
    %2222 = vmatpush1.msra.mxu0 0.0
    %2223 = vmatprep.subr.mxu0 0.0
    %2224 = vmatpush1.msra.mxu0 0.0
    %2225 = vmatprep.subr.mxu0 0.0
    %2226 = vmatpush1.msra.mxu0 0.0
    %2227 = vmatprep.subr.mxu0 0.0
    %2228 = vmatpush1.msra.mxu0 0.0
    %2229 = vmatprep.subr.mxu0 0.0
    %2230 = vmatpush1.msra.mxu0 0.0
    %2231 = vmatprep.subr.mxu0 0.0
    %2232 = vmatpush1.msra.mxu0 0.0
    %2233 = vmatprep.subr.mxu0 0.0
    %2234 = vmatpush1.msra.mxu0 0.0
    %2235 = vmatprep.subr.mxu0 0.0
    %2236 = vmatpush1.msra.mxu0 0.0
    %2237 = vmatprep.subr.mxu0 0.0
    %2238 = vmatpush1.msra.mxu0 0.0
    %2239 = vmatprep.subr.mxu0 0.0
    %2240 = vmatpush1.msra.mxu0 0.0
    %2241 = vmatprep.subr.mxu0 0.0
    %2242 = vmatpush1.msra.mxu0 0.0
    %2243 = vmatprep.subr.mxu0 0.0
    %2244 = vmatpush1.msra.mxu0 0.0
    %2245 = vmatprep.subr.mxu0 0.0
    %2246 = vmatpush1.msra.mxu0 0.0
    %2247 = vmatprep.subr.mxu0 0.0
    %2248 = vmatpush1.msra.mxu0 0.0
    %2249 = vmatprep.subr.mxu0 0.0
    %2250 = vmatpush1.msra.mxu0 0.0
    %2251 = vmatprep.subr.mxu0 0.0
    %2252 = vmatpush1.msra.mxu0 0.0
    %2253 = vmatprep.subr.mxu0 0.0
    %2254 = vmatpush1.msra.mxu0 0.0
    %2255 = vmatprep.subr.mxu0 0.0
    %2256 = vmatpush1.msra.mxu0 0.0
    %2257 = vmatprep.subr.mxu0 0.0
    %2258 = vmatpush1.msra.mxu0 0.0
    %2259 = vmatprep.subr.mxu0 0.0
    %2260 = vmatpush1.msra.mxu0 0.0
    %2261 = vmatprep.mubr.f32.mxu0 0.0
    %2262 = vmatmul.mubr.f32.gmra.mrb[0].mxu0 %v2195
    %v2263 = vpop.f32.mrb[0].mxu0
    %v2264 = vadd.f32 %v46, %v2263
    %v2265 = vpop.f32.mrb[0].mxu0
    %2266 = vdwg.mxu0
    %2267 = vrot.lane.b32.xlu0 %v2170, 96
    %v2268 = vpop.permute.xlu0 %2267
    %v2270 = vadd.f32 %v2170, %v2268
    %v2271 = vadd.f32 %v2193, %v2264
    %v2272 = vxor.u32 %v2271, 2147483648
    %v2273 = vmul.f32 %v2272, 1.442695
    %v2274 = vpow.pop %v2273
    %v2275 = vadd.f32 %v2274, 1.0
    %v2276 = vrcp.pop %v2275
    %v2277 = vmul.f32 1.0, %v2276
    %2279 = vrot.lane.b32.xlu0 %v2264, 64
    %v2280 = vpop.permute.xlu0 %2279
    %v2282 = vmul.f32 %v2277, %v2280
    %2284 = vrot.lane.b32.xlu0 %v2282, 64
    %v2285 = vpop.permute.xlu0 %2284
    %v2287 = vadd.f32 %v2193, %v2285
    %v2288 = vtanh.pop %v2287
    %v2289 = vsub.f32 1.0, %v2277
    %2291 = vrot.lane.b32.xlu0 %v2288, 96
    %v2292 = vpop.permute.xlu0 %2291
    %v2294 = vmul.f32 %v2289, %v2292
    %2296 = vrot.lane.b32.xlu0 %v2270, 32
    %v2297 = vpop.permute.xlu0 %2296
    %v2299 = vmul.f32 %v2277, %v2297
    %v2300 = vadd.f32 %v2294, %v2299
    %v2301 = vmul.f32 %v2300, %v1965
    %v2302 = vmul.f32 %v2300, %v1966
    %2304 = vrot.lane.b32.xlu0 %v2301, 96
    %v2305 = vpop.permute.xlu0 %2304
    %v2307 = vsel %vm241, %v2305, %v2302
    %v2308 = vrot.slane %v1941, 3
    %v2310 = vrot.slane %v1953, 2
    %v2312 = vrot.slane %v1947, 2
    %v2313 = vrot.slane %v1949, 2
    %2314 = vrot.lane.b32.xlu0 %v2312, 32
    %v2315 = vpop.permute.xlu0 %2314
    %2316 = vrot.lane.b32.xlu0 %v2313, 32
    %v2317 = vpop.permute.xlu0 %2316
    %v2318 = vsel %vm241, %v2315, %v2317
    %v2320 = vrot.slane %v1959, 1
    %v2321 = vrot.slane %v1961, 1
    %2322 = vrot.lane.b32.xlu0 %v2320, 32
    %v2323 = vpop.permute.xlu0 %2322
    %2324 = vrot.lane.b32.xlu0 %v2321, 32
    %v2325 = vpop.permute.xlu0 %2324
    %v2326 = vsel %vm241, %v2323, %v2325
    %v2328 = vsel %vm147, %v2308, %v2310
    %v2329 = vsel %vm45, %v2328, %v2318
    %v2330 = vsel %vm2000, %v2329, %v2326
    %v2332 = vsel %vm246, %v2307, 0
    %2334 = vmatprep.subr.mxu0 0.0
    %2335 = vmatpush1.msra.mxu0 %v1967
    %2336 = vmatprep.subr.mxu0 0.0
    %2337 = vmatpush1.msra.mxu0 %v1968
    %2338 = vmatprep.subr.mxu0 0.0
    %2339 = vmatpush1.msra.mxu0 %v1969
    %2340 = vmatprep.subr.mxu0 0.0
    %2341 = vmatpush1.msra.mxu0 %v1970
    %2342 = vmatprep.subr.mxu0 0.0
    %2343 = vmatpush1.msra.mxu0 %v1971
    %2344 = vmatprep.subr.mxu0 0.0
    %2345 = vmatpush1.msra.mxu0 %v1972
    %2346 = vmatprep.subr.mxu0 0.0
    %2347 = vmatpush1.msra.mxu0 %v1973
    %2348 = vmatprep.subr.mxu0 0.0
    %2349 = vmatpush1.msra.mxu0 %v1974
    %2350 = vmatprep.subr.mxu0 0.0
    %2351 = vmatpush1.msra.mxu0 0.0
    %2352 = vmatprep.subr.mxu0 0.0
    %2353 = vmatpush1.msra.mxu0 0.0
    %2354 = vmatprep.subr.mxu0 0.0
    %2355 = vmatpush1.msra.mxu0 0.0
    %2356 = vmatprep.subr.mxu0 0.0
    %2357 = vmatpush1.msra.mxu0 0.0
    %2358 = vmatprep.subr.mxu0 0.0
    %2359 = vmatpush1.msra.mxu0 0.0
    %2360 = vmatprep.subr.mxu0 0.0
    %2361 = vmatpush1.msra.mxu0 0.0
    %2362 = vmatprep.subr.mxu0 0.0
    %2363 = vmatpush1.msra.mxu0 0.0
    %2364 = vmatprep.subr.mxu0 0.0
    %2365 = vmatpush1.msra.mxu0 0.0
    %2366 = vmatprep.subr.mxu0 0.0
    %2367 = vmatpush1.msra.mxu0 0.0
    %2368 = vmatprep.subr.mxu0 0.0
    %2369 = vmatpush1.msra.mxu0 0.0
    %2370 = vmatprep.subr.mxu0 0.0
    %2371 = vmatpush1.msra.mxu0 0.0
    %2372 = vmatprep.subr.mxu0 0.0
    %2373 = vmatpush1.msra.mxu0 0.0
    %2374 = vmatprep.subr.mxu0 0.0
    %2375 = vmatpush1.msra.mxu0 0.0
    %2376 = vmatprep.subr.mxu0 0.0
    %2377 = vmatpush1.msra.mxu0 0.0
    %2378 = vmatprep.subr.mxu0 0.0
    %2379 = vmatpush1.msra.mxu0 0.0
    %2380 = vmatprep.subr.mxu0 0.0
    %2381 = vmatpush1.msra.mxu0 0.0
    %2382 = vmatprep.subr.mxu0 0.0
    %2383 = vmatpush1.msra.mxu0 0.0
    %2384 = vmatprep.subr.mxu0 0.0
    %2385 = vmatpush1.msra.mxu0 0.0
    %2386 = vmatprep.subr.mxu0 0.0
    %2387 = vmatpush1.msra.mxu0 0.0
    %2388 = vmatprep.subr.mxu0 0.0
    %2389 = vmatpush1.msra.mxu0 0.0
    %2390 = vmatprep.subr.mxu0 0.0
    %2391 = vmatpush1.msra.mxu0 0.0
    %2392 = vmatprep.subr.mxu0 0.0
    %2393 = vmatpush1.msra.mxu0 0.0
    %2394 = vmatprep.subr.mxu0 0.0
    %2395 = vmatpush1.msra.mxu0 0.0
    %2396 = vmatprep.subr.mxu0 0.0
    %2397 = vmatpush1.msra.mxu0 0.0
    %2398 = vmatprep.mubr.f32.mxu0 0.0
    %2399 = vmatmul.mubr.f32.gmra.mrb[0].mxu0 %v2332
    %v2400 = vpop.f32.mrb[0].mxu0
    %v2401 = vadd.f32 %v46, %v2400
    %v2402 = vpop.f32.mrb[0].mxu0
    %2403 = vdwg.mxu0
    %2404 = vrot.lane.b32.xlu0 %v2307, 96
    %v2405 = vpop.permute.xlu0 %2404
    %v2407 = vadd.f32 %v2307, %v2405
    %v2408 = vadd.f32 %v2330, %v2401
    %v2409 = vxor.u32 %v2408, 2147483648
    %v2410 = vmul.f32 %v2409, 1.442695
    %v2411 = vpow.pop %v2410
    %v2412 = vadd.f32 %v2411, 1.0
    %v2413 = vrcp.pop %v2412
    %v2414 = vmul.f32 1.0, %v2413
    %2416 = vrot.lane.b32.xlu0 %v2401, 64
    %v2417 = vpop.permute.xlu0 %2416
    %v2419 = vmul.f32 %v2414, %v2417
    %2421 = vrot.lane.b32.xlu0 %v2419, 64
    %v2422 = vpop.permute.xlu0 %2421
    %v2424 = vadd.f32 %v2330, %v2422
    %v2425 = vtanh.pop %v2424
    %v2426 = vsub.f32 1.0, %v2414
    %2428 = vrot.lane.b32.xlu0 %v2425, 96
    %v2429 = vpop.permute.xlu0 %2428
    %v2431 = vmul.f32 %v2426, %v2429
    %2433 = vrot.lane.b32.xlu0 %v2407, 32
    %v2434 = vpop.permute.xlu0 %2433
    %v2436 = vmul.f32 %v2414, %v2434
    %v2437 = vadd.f32 %v2431, %v2436
    %v2438 = vmul.f32 %v2437, %v1965
    %v2439 = vmul.f32 %v2437, %v1966
    %2441 = vrot.lane.b32.xlu0 %v2438, 96
    %v2442 = vpop.permute.xlu0 %2441
    %v2444 = vsel %vm241, %v2442, %v2439
    %v2445 = vrot.slane %v1941, 4
    %v2447 = vrot.slane %v1953, 3
    %v2449 = vrot.slane %v1947, 1
    %v2450 = vrot.slane %v1949, 1
    %2451 = vrot.lane.b32.xlu0 %v2449, 32
    %v2452 = vpop.permute.xlu0 %2451
    %2453 = vrot.lane.b32.xlu0 %v2450, 32
    %v2454 = vpop.permute.xlu0 %2453
    %v2455 = vsel %vm241, %v2452, %v2454
    %2457 = vrot.lane.b32.xlu0 %v1959, 32
    %v2458 = vpop.permute.xlu0 %2457
    %2459 = vrot.lane.b32.xlu0 %v1961, 32
    %v2460 = vpop.permute.xlu0 %2459
    %v2461 = vsel %vm241, %v2458, %v2460
    %v2463 = vsel %vm147, %v2445, %v2447
    %v2464 = vsel %vm45, %v2463, %v2455
    %v2465 = vsel %vm2000, %v2464, %v2461
    %v2467 = vsel %vm246, %v2444, 0
    %2469 = vmatprep.subr.mxu0 0.0
    %2470 = vmatpush1.msra.mxu0 %v1967
    %2471 = vmatprep.subr.mxu0 0.0
    %2472 = vmatpush1.msra.mxu0 %v1968
    %2473 = vmatprep.subr.mxu0 0.0
    %2474 = vmatpush1.msra.mxu0 %v1969
    %2475 = vmatprep.subr.mxu0 0.0
    %2476 = vmatpush1.msra.mxu0 %v1970
    %2477 = vmatprep.subr.mxu0 0.0
    %2478 = vmatpush1.msra.mxu0 %v1971
    %2479 = vmatprep.subr.mxu0 0.0
    %2480 = vmatpush1.msra.mxu0 %v1972
    %2481 = vmatprep.subr.mxu0 0.0
    %2482 = vmatpush1.msra.mxu0 %v1973
    %2483 = vmatprep.subr.mxu0 0.0
    %2484 = vmatpush1.msra.mxu0 %v1974
    %2485 = vmatprep.subr.mxu0 0.0
    %2486 = vmatpush1.msra.mxu0 0.0
    %2487 = vmatprep.subr.mxu0 0.0
    %2488 = vmatpush1.msra.mxu0 0.0
    %2489 = vmatprep.subr.mxu0 0.0
    %2490 = vmatpush1.msra.mxu0 0.0
    %2491 = vmatprep.subr.mxu0 0.0
    %2492 = vmatpush1.msra.mxu0 0.0
    %2493 = vmatprep.subr.mxu0 0.0
    %2494 = vmatpush1.msra.mxu0 0.0
    %2495 = vmatprep.subr.mxu0 0.0
    %2496 = vmatpush1.msra.mxu0 0.0
    %2497 = vmatprep.subr.mxu0 0.0
    %2498 = vmatpush1.msra.mxu0 0.0
    %2499 = vmatprep.subr.mxu0 0.0
    %2500 = vmatpush1.msra.mxu0 0.0
    %2501 = vmatprep.subr.mxu0 0.0
    %2502 = vmatpush1.msra.mxu0 0.0
    %2503 = vmatprep.subr.mxu0 0.0
    %2504 = vmatpush1.msra.mxu0 0.0
    %2505 = vmatprep.subr.mxu0 0.0
    %2506 = vmatpush1.msra.mxu0 0.0
    %2507 = vmatprep.subr.mxu0 0.0
    %2508 = vmatpush1.msra.mxu0 0.0
    %2509 = vmatprep.subr.mxu0 0.0
    %2510 = vmatpush1.msra.mxu0 0.0
    %2511 = vmatprep.subr.mxu0 0.0
    %2512 = vmatpush1.msra.mxu0 0.0
    %2513 = vmatprep.subr.mxu0 0.0
    %2514 = vmatpush1.msra.mxu0 0.0
    %2515 = vmatprep.subr.mxu0 0.0
    %2516 = vmatpush1.msra.mxu0 0.0
    %2517 = vmatprep.subr.mxu0 0.0
    %2518 = vmatpush1.msra.mxu0 0.0
    %2519 = vmatprep.subr.mxu0 0.0
    %2520 = vmatpush1.msra.mxu0 0.0
    %2521 = vmatprep.subr.mxu0 0.0
    %2522 = vmatpush1.msra.mxu0 0.0
    %2523 = vmatprep.subr.mxu0 0.0
    %2524 = vmatpush1.msra.mxu0 0.0
    %2525 = vmatprep.subr.mxu0 0.0
    %2526 = vmatpush1.msra.mxu0 0.0
    %2527 = vmatprep.subr.mxu0 0.0
    %2528 = vmatpush1.msra.mxu0 0.0
    %2529 = vmatprep.subr.mxu0 0.0
    %2530 = vmatpush1.msra.mxu0 0.0
    %2531 = vmatprep.subr.mxu0 0.0
    %2532 = vmatpush1.msra.mxu0 0.0
    %2533 = vmatprep.mubr.f32.mxu0 0.0
    %2534 = vmatmul.mubr.f32.gmra.mrb[0].mxu0 %v2467
    %v2535 = vpop.f32.mrb[0].mxu0
    %v2536 = vadd.f32 %v46, %v2535
    %v2537 = vpop.f32.mrb[0].mxu0
    %2538 = vdwg.mxu0
    %2539 = vrot.lane.b32.xlu0 %v2444, 96
    %v2540 = vpop.permute.xlu0 %2539
    %v2542 = vadd.f32 %v2444, %v2540
    %v2543 = vadd.f32 %v2465, %v2536
    %v2544 = vxor.u32 %v2543, 2147483648
    %v2545 = vmul.f32 %v2544, 1.442695
    %v2546 = vpow.pop %v2545
    %v2547 = vadd.f32 %v2546, 1.0
    %v2548 = vrcp.pop %v2547
    %v2549 = vmul.f32 1.0, %v2548
    %2551 = vrot.lane.b32.xlu0 %v2536, 64
    %v2552 = vpop.permute.xlu0 %2551
    %v2554 = vmul.f32 %v2549, %v2552
    %2556 = vrot.lane.b32.xlu0 %v2554, 64
    %v2557 = vpop.permute.xlu0 %2556
    %v2559 = vadd.f32 %v2465, %v2557
    %v2560 = vtanh.pop %v2559
    %v2561 = vsub.f32 1.0, %v2549
    %2563 = vrot.lane.b32.xlu0 %v2560, 96
    %v2564 = vpop.permute.xlu0 %2563
    %v2566 = vmul.f32 %v2561, %v2564
    %2568 = vrot.lane.b32.xlu0 %v2542, 32
    %v2569 = vpop.permute.xlu0 %2568
    %v2571 = vmul.f32 %v2549, %v2569
    %v2572 = vadd.f32 %v2566, %v2571
    %v2573 = vmul.f32 %v2572, %v1965
    %v2574 = vmul.f32 %v2572, %v1966
    %2576 = vrot.lane.b32.xlu0 %v2573, 96
    %v2577 = vpop.permute.xlu0 %2576
    %v2579 = vsel %vm241, %v2577, %v2574
    %v2580 = vrot.slane %v1941, 5
    %v2582 = vrot.slane %v1953, 4
    %2584 = vrot.lane.b32.xlu0 %v1947, 32
    %v2585 = vpop.permute.xlu0 %2584
    %2586 = vrot.lane.b32.xlu0 %v1949, 32
    %v2587 = vpop.permute.xlu0 %2586
    %v2588 = vsel %vm241, %v2585, %v2587
    %v2590 = vrot.slane %v1959, 7
    %v2591 = vrot.slane %v1961, 7
    %2592 = vrot.lane.b32.xlu0 %v2590, 32
    %v2593 = vpop.permute.xlu0 %2592
    %2594 = vrot.lane.b32.xlu0 %v2591, 32
    %v2595 = vpop.permute.xlu0 %2594
    %v2596 = vsel %vm241, %v2593, %v2595
    %v2598 = vsel %vm147, %v2580, %v2582
    %v2599 = vsel %vm45, %v2598, %v2588
    %v2600 = vsel %vm2000, %v2599, %v2596
    %v2602 = vsel %vm246, %v2579, 0
    %2604 = vmatprep.subr.mxu0 0.0
    %2605 = vmatpush1.msra.mxu0 %v1967
    %2606 = vmatprep.subr.mxu0 0.0
    %2607 = vmatpush1.msra.mxu0 %v1968
    %2608 = vmatprep.subr.mxu0 0.0
    %2609 = vmatpush1.msra.mxu0 %v1969
    %2610 = vmatprep.subr.mxu0 0.0
    %2611 = vmatpush1.msra.mxu0 %v1970
    %2612 = vmatprep.subr.mxu0 0.0
    %2613 = vmatpush1.msra.mxu0 %v1971
    %2614 = vmatprep.subr.mxu0 0.0
    %2615 = vmatpush1.msra.mxu0 %v1972
    %2616 = vmatprep.subr.mxu0 0.0
    %2617 = vmatpush1.msra.mxu0 %v1973
    %2618 = vmatprep.subr.mxu0 0.0
    %2619 = vmatpush1.msra.mxu0 %v1974
    %2620 = vmatprep.subr.mxu0 0.0
    %2621 = vmatpush1.msra.mxu0 0.0
    %2622 = vmatprep.subr.mxu0 0.0
    %2623 = vmatpush1.msra.mxu0 0.0
    %2624 = vmatprep.subr.mxu0 0.0
    %2625 = vmatpush1.msra.mxu0 0.0
    %2626 = vmatprep.subr.mxu0 0.0
    %2627 = vmatpush1.msra.mxu0 0.0
    %2628 = vmatprep.subr.mxu0 0.0
    %2629 = vmatpush1.msra.mxu0 0.0
    %2630 = vmatprep.subr.mxu0 0.0
    %2631 = vmatpush1.msra.mxu0 0.0
    %2632 = vmatprep.subr.mxu0 0.0
    %2633 = vmatpush1.msra.mxu0 0.0
    %2634 = vmatprep.subr.mxu0 0.0
    %2635 = vmatpush1.msra.mxu0 0.0
    %2636 = vmatprep.subr.mxu0 0.0
    %2637 = vmatpush1.msra.mxu0 0.0
    %2638 = vmatprep.subr.mxu0 0.0
    %2639 = vmatpush1.msra.mxu0 0.0
    %2640 = vmatprep.subr.mxu0 0.0
    %2641 = vmatpush1.msra.mxu0 0.0
    %2642 = vmatprep.subr.mxu0 0.0
    %2643 = vmatpush1.msra.mxu0 0.0
    %2644 = vmatprep.subr.mxu0 0.0
    %2645 = vmatpush1.msra.mxu0 0.0
    %2646 = vmatprep.subr.mxu0 0.0
    %2647 = vmatpush1.msra.mxu0 0.0
    %2648 = vmatprep.subr.mxu0 0.0
    %2649 = vmatpush1.msra.mxu0 0.0
    %2650 = vmatprep.subr.mxu0 0.0
    %2651 = vmatpush1.msra.mxu0 0.0
    %2652 = vmatprep.subr.mxu0 0.0
    %2653 = vmatpush1.msra.mxu0 0.0
    %2654 = vmatprep.subr.mxu0 0.0
    %2655 = vmatpush1.msra.mxu0 0.0
    %2656 = vmatprep.subr.mxu0 0.0
    %2657 = vmatpush1.msra.mxu0 0.0
    %2658 = vmatprep.subr.mxu0 0.0
    %2659 = vmatpush1.msra.mxu0 0.0
    %2660 = vmatprep.subr.mxu0 0.0
    %2661 = vmatpush1.msra.mxu0 0.0
    %2662 = vmatprep.subr.mxu0 0.0
    %2663 = vmatpush1.msra.mxu0 0.0
    %2664 = vmatprep.subr.mxu0 0.0
    %2665 = vmatpush1.msra.mxu0 0.0
    %2666 = vmatprep.subr.mxu0 0.0
    %2667 = vmatpush1.msra.mxu0 0.0
    %2668 = vmatprep.mubr.f32.mxu0 0.0
    %2669 = vmatmul.mubr.f32.gmra.mrb[0].mxu0 %v2602
    %v2670 = vpop.f32.mrb[0].mxu0
    %v2671 = vadd.f32 %v46, %v2670
    %v2672 = vpop.f32.mrb[0].mxu0
    %2673 = vdwg.mxu0
    %2674 = vrot.lane.b32.xlu0 %v2579, 96
    %v2675 = vpop.permute.xlu0 %2674
    %v2677 = vadd.f32 %v2579, %v2675
    %v2678 = vadd.f32 %v2600, %v2671
    %v2679 = vxor.u32 %v2678, 2147483648
    %v2680 = vmul.f32 %v2679, 1.442695
    %v2681 = vpow.pop %v2680
    %v2682 = vadd.f32 %v2681, 1.0
    %v2683 = vrcp.pop %v2682
    %v2684 = vmul.f32 1.0, %v2683
    %2686 = vrot.lane.b32.xlu0 %v2671, 64
    %v2687 = vpop.permute.xlu0 %2686
    %v2689 = vmul.f32 %v2684, %v2687
    %2691 = vrot.lane.b32.xlu0 %v2689, 64
    %v2692 = vpop.permute.xlu0 %2691
    %v2694 = vadd.f32 %v2600, %v2692
    %v2695 = vtanh.pop %v2694
    %v2696 = vsub.f32 1.0, %v2684
    %2698 = vrot.lane.b32.xlu0 %v2695, 96
    %v2699 = vpop.permute.xlu0 %2698
    %v2701 = vmul.f32 %v2696, %v2699
    %2703 = vrot.lane.b32.xlu0 %v2677, 32
    %v2704 = vpop.permute.xlu0 %2703
    %v2706 = vmul.f32 %v2684, %v2704
    %v2707 = vadd.f32 %v2701, %v2706
    %v2708 = vmul.f32 %v2707, %v1965
    %v2709 = vmul.f32 %v2707, %v1966
    %2711 = vrot.lane.b32.xlu0 %v2708, 96
    %v2712 = vpop.permute.xlu0 %2711
    %v2714 = vsel %vm241, %v2712, %v2709
    %v2715 = vrot.slane %v1941, 6
    %v2717 = vrot.slane %v1953, 5
    %v2719 = vrot.slane %v1947, 7
    %v2720 = vrot.slane %v1949, 7
    %2721 = vrot.lane.b32.xlu0 %v2719, 32
    %v2722 = vpop.permute.xlu0 %2721
    %2723 = vrot.lane.b32.xlu0 %v2720, 32
    %v2724 = vpop.permute.xlu0 %2723
    %v2725 = vsel %vm241, %v2722, %v2724
    %v2727 = vrot.slane %v1959, 6
    %v2728 = vrot.slane %v1961, 6
    %2729 = vrot.lane.b32.xlu0 %v2727, 32
    %v2730 = vpop.permute.xlu0 %2729
    %2731 = vrot.lane.b32.xlu0 %v2728, 32
    %v2732 = vpop.permute.xlu0 %2731
    %v2733 = vsel %vm241, %v2730, %v2732
    %v2735 = vsel %vm147, %v2715, %v2717
    %v2736 = vsel %vm45, %v2735, %v2725
    %v2737 = vsel %vm2000, %v2736, %v2733
    %v2739 = vsel %vm246, %v2714, 0
    %2741 = vmatprep.subr.mxu0 0.0
    %2742 = vmatpush1.msra.mxu0 %v1967
    %2743 = vmatprep.subr.mxu0 0.0
    %2744 = vmatpush1.msra.mxu0 %v1968
    %2745 = vmatprep.subr.mxu0 0.0
    %2746 = vmatpush1.msra.mxu0 %v1969
    %2747 = vmatprep.subr.mxu0 0.0
    %2748 = vmatpush1.msra.mxu0 %v1970
    %2749 = vmatprep.subr.mxu0 0.0
    %2750 = vmatpush1.msra.mxu0 %v1971
    %2751 = vmatprep.subr.mxu0 0.0
    %2752 = vmatpush1.msra.mxu0 %v1972
    %2753 = vmatprep.subr.mxu0 0.0
    %2754 = vmatpush1.msra.mxu0 %v1973
    %2755 = vmatprep.subr.mxu0 0.0
    %2756 = vmatpush1.msra.mxu0 %v1974
    %2757 = vmatprep.subr.mxu0 0.0
    %2758 = vmatpush1.msra.mxu0 0.0
    %2759 = vmatprep.subr.mxu0 0.0
    %2760 = vmatpush1.msra.mxu0 0.0
    %2761 = vmatprep.subr.mxu0 0.0
    %2762 = vmatpush1.msra.mxu0 0.0
    %2763 = vmatprep.subr.mxu0 0.0
    %2764 = vmatpush1.msra.mxu0 0.0
    %2765 = vmatprep.subr.mxu0 0.0
    %2766 = vmatpush1.msra.mxu0 0.0
    %2767 = vmatprep.subr.mxu0 0.0
    %2768 = vmatpush1.msra.mxu0 0.0
    %2769 = vmatprep.subr.mxu0 0.0
    %2770 = vmatpush1.msra.mxu0 0.0
    %2771 = vmatprep.subr.mxu0 0.0
    %2772 = vmatpush1.msra.mxu0 0.0
    %2773 = vmatprep.subr.mxu0 0.0
    %2774 = vmatpush1.msra.mxu0 0.0
    %2775 = vmatprep.subr.mxu0 0.0
    %2776 = vmatpush1.msra.mxu0 0.0
    %2777 = vmatprep.subr.mxu0 0.0
    %2778 = vmatpush1.msra.mxu0 0.0
    %2779 = vmatprep.subr.mxu0 0.0
    %2780 = vmatpush1.msra.mxu0 0.0
    %2781 = vmatprep.subr.mxu0 0.0
    %2782 = vmatpush1.msra.mxu0 0.0
    %2783 = vmatprep.subr.mxu0 0.0
    %2784 = vmatpush1.msra.mxu0 0.0
    %2785 = vmatprep.subr.mxu0 0.0
    %2786 = vmatpush1.msra.mxu0 0.0
    %2787 = vmatprep.subr.mxu0 0.0
    %2788 = vmatpush1.msra.mxu0 0.0
    %2789 = vmatprep.subr.mxu0 0.0
    %2790 = vmatpush1.msra.mxu0 0.0
    %2791 = vmatprep.subr.mxu0 0.0
    %2792 = vmatpush1.msra.mxu0 0.0
    %2793 = vmatprep.subr.mxu0 0.0
    %2794 = vmatpush1.msra.mxu0 0.0
    %2795 = vmatprep.subr.mxu0 0.0
    %2796 = vmatpush1.msra.mxu0 0.0
    %2797 = vmatprep.subr.mxu0 0.0
    %2798 = vmatpush1.msra.mxu0 0.0
    %2799 = vmatprep.subr.mxu0 0.0
    %2800 = vmatpush1.msra.mxu0 0.0
    %2801 = vmatprep.subr.mxu0 0.0
    %2802 = vmatpush1.msra.mxu0 0.0
    %2803 = vmatprep.subr.mxu0 0.0
    %2804 = vmatpush1.msra.mxu0 0.0
    %2805 = vmatprep.mubr.f32.mxu0 0.0
    %2806 = vmatmul.mubr.f32.gmra.mrb[0].mxu0 %v2739
    %v2807 = vpop.f32.mrb[0].mxu0
    %v2808 = vadd.f32 %v46, %v2807
    %v2809 = vpop.f32.mrb[0].mxu0
    %2810 = vdwg.mxu0
    %2811 = vrot.lane.b32.xlu0 %v2714, 96
    %v2812 = vpop.permute.xlu0 %2811
    %v2814 = vadd.f32 %v2714, %v2812
    %v2815 = vadd.f32 %v2737, %v2808
    %v2816 = vxor.u32 %v2815, 2147483648
    %v2817 = vmul.f32 %v2816, 1.442695
    %v2818 = vpow.pop %v2817
    %v2819 = vadd.f32 %v2818, 1.0
    %v2820 = vrcp.pop %v2819
    %v2821 = vmul.f32 1.0, %v2820
    %2823 = vrot.lane.b32.xlu0 %v2808, 64
    %v2824 = vpop.permute.xlu0 %2823
    %v2826 = vmul.f32 %v2821, %v2824
    %2828 = vrot.lane.b32.xlu0 %v2826, 64
    %v2829 = vpop.permute.xlu0 %2828
    %v2831 = vadd.f32 %v2737, %v2829
    %v2832 = vtanh.pop %v2831
    %v2833 = vsub.f32 1.0, %v2821
    %2835 = vrot.lane.b32.xlu0 %v2832, 96
    %v2836 = vpop.permute.xlu0 %2835
    %v2838 = vmul.f32 %v2833, %v2836
    %2840 = vrot.lane.b32.xlu0 %v2814, 32
    %v2841 = vpop.permute.xlu0 %2840
    %v2843 = vmul.f32 %v2821, %v2841
    %v2844 = vadd.f32 %v2838, %v2843
    %v2845 = vmul.f32 %v2844, %v1965
    %v2846 = vmul.f32 %v2844, %v1966
    %2848 = vrot.lane.b32.xlu0 %v2845, 96
    %v2849 = vpop.permute.xlu0 %2848
    %v2851 = vsel %vm241, %v2849, %v2846
    %v2852 = vrot.slane %v1941, 7
    %v2854 = vrot.slane %v1953, 6
    %v2856 = vrot.slane %v1947, 6
    %v2857 = vrot.slane %v1949, 6
    %2858 = vrot.lane.b32.xlu0 %v2856, 32
    %v2859 = vpop.permute.xlu0 %2858
    %2860 = vrot.lane.b32.xlu0 %v2857, 32
    %v2861 = vpop.permute.xlu0 %2860
    %v2862 = vsel %vm241, %v2859, %v2861
    %v2864 = vrot.slane %v1959, 5
    %v2865 = vrot.slane %v1961, 5
    %2866 = vrot.lane.b32.xlu0 %v2864, 32
    %v2867 = vpop.permute.xlu0 %2866
    %2868 = vrot.lane.b32.xlu0 %v2865, 32
    %v2869 = vpop.permute.xlu0 %2868
    %v2870 = vsel %vm241, %v2867, %v2869
    %v2872 = vsel %vm147, %v2852, %v2854
    %v2873 = vsel %vm45, %v2872, %v2862
    %v2874 = vsel %vm2000, %v2873, %v2870
    %v2876 = vsel %vm246, %v2851, 0
    %2878 = vmatprep.subr.mxu0 0.0
    %2879 = vmatpush1.msra.mxu0 %v1967
    %2880 = vmatprep.subr.mxu0 0.0
    %2881 = vmatpush1.msra.mxu0 %v1968
    %2882 = vmatprep.subr.mxu0 0.0
    %2883 = vmatpush1.msra.mxu0 %v1969
    %2884 = vmatprep.subr.mxu0 0.0
    %2885 = vmatpush1.msra.mxu0 %v1970
    %2886 = vmatprep.subr.mxu0 0.0
    %2887 = vmatpush1.msra.mxu0 %v1971
    %2888 = vmatprep.subr.mxu0 0.0
    %2889 = vmatpush1.msra.mxu0 %v1972
    %2890 = vmatprep.subr.mxu0 0.0
    %2891 = vmatpush1.msra.mxu0 %v1973
    %2892 = vmatprep.subr.mxu0 0.0
    %2893 = vmatpush1.msra.mxu0 %v1974
    %2894 = vmatprep.subr.mxu0 0.0
    %2895 = vmatpush1.msra.mxu0 0.0
    %2896 = vmatprep.subr.mxu0 0.0
    %2897 = vmatpush1.msra.mxu0 0.0
    %2898 = vmatprep.subr.mxu0 0.0
    %2899 = vmatpush1.msra.mxu0 0.0
    %2900 = vmatprep.subr.mxu0 0.0
    %2901 = vmatpush1.msra.mxu0 0.0
    %2902 = vmatprep.subr.mxu0 0.0
    %2903 = vmatpush1.msra.mxu0 0.0
    %2904 = vmatprep.subr.mxu0 0.0
    %2905 = vmatpush1.msra.mxu0 0.0
    %2906 = vmatprep.subr.mxu0 0.0
    %2907 = vmatpush1.msra.mxu0 0.0
    %2908 = vmatprep.subr.mxu0 0.0
    %2909 = vmatpush1.msra.mxu0 0.0
    %2910 = vmatprep.subr.mxu0 0.0
    %2911 = vmatpush1.msra.mxu0 0.0
    %2912 = vmatprep.subr.mxu0 0.0
    %2913 = vmatpush1.msra.mxu0 0.0
    %2914 = vmatprep.subr.mxu0 0.0
    %2915 = vmatpush1.msra.mxu0 0.0
    %2916 = vmatprep.subr.mxu0 0.0
    %2917 = vmatpush1.msra.mxu0 0.0
    %2918 = vmatprep.subr.mxu0 0.0
    %2919 = vmatpush1.msra.mxu0 0.0
    %2920 = vmatprep.subr.mxu0 0.0
    %2921 = vmatpush1.msra.mxu0 0.0
    %2922 = vmatprep.subr.mxu0 0.0
    %2923 = vmatpush1.msra.mxu0 0.0
    %2924 = vmatprep.subr.mxu0 0.0
    %2925 = vmatpush1.msra.mxu0 0.0
    %2926 = vmatprep.subr.mxu0 0.0
    %2927 = vmatpush1.msra.mxu0 0.0
    %2928 = vmatprep.subr.mxu0 0.0
    %2929 = vmatpush1.msra.mxu0 0.0
    %2930 = vmatprep.subr.mxu0 0.0
    %2931 = vmatpush1.msra.mxu0 0.0
    %2932 = vmatprep.subr.mxu0 0.0
    %2933 = vmatpush1.msra.mxu0 0.0
    %2934 = vmatprep.subr.mxu0 0.0
    %2935 = vmatpush1.msra.mxu0 0.0
    %2936 = vmatprep.subr.mxu0 0.0
    %2937 = vmatpush1.msra.mxu0 0.0
    %2938 = vmatprep.subr.mxu0 0.0
    %2939 = vmatpush1.msra.mxu0 0.0
    %2940 = vmatprep.subr.mxu0 0.0
    %2941 = vmatpush1.msra.mxu0 0.0
    %2942 = vmatprep.mubr.f32.mxu0 0.0
    %2943 = vmatmul.mubr.f32.gmra.mrb[0].mxu0 %v2876
    %v2944 = vpop.f32.mrb[0].mxu0
    %v2945 = vadd.f32 %v46, %v2944
    %v2946 = vpop.f32.mrb[0].mxu0
    %2947 = vdwg.mxu0
    %2948 = vrot.lane.b32.xlu0 %v2851, 96
    %v2949 = vpop.permute.xlu0 %2948
    %v2951 = vadd.f32 %v2851, %v2949
    %v2952 = vadd.f32 %v2874, %v2945
    %v2953 = vxor.u32 %v2952, 2147483648
    %v2954 = vmul.f32 %v2953, 1.442695
    %v2955 = vpow.pop %v2954
    %v2956 = vadd.f32 %v2955, 1.0
    %v2957 = vrcp.pop %v2956
    %v2958 = vmul.f32 1.0, %v2957
    %2960 = vrot.lane.b32.xlu0 %v2945, 64
    %v2961 = vpop.permute.xlu0 %2960
    %v2963 = vmul.f32 %v2958, %v2961
    %2965 = vrot.lane.b32.xlu0 %v2963, 64
    %v2966 = vpop.permute.xlu0 %2965
    %v2968 = vadd.f32 %v2874, %v2966
    %v2969 = vtanh.pop %v2968
    %v2970 = vsub.f32 1.0, %v2958
    %2972 = vrot.lane.b32.xlu0 %v2969, 96
    %v2973 = vpop.permute.xlu0 %2972
    %v2975 = vmul.f32 %v2970, %v2973
    %2977 = vrot.lane.b32.xlu0 %v2951, 32
    %v2978 = vpop.permute.xlu0 %2977
    %v2980 = vmul.f32 %v2958, %v2978
    %v2981 = vadd.f32 %v2975, %v2980
    %v2982 = vmul.f32 %v2981, %v1965
    %v2983 = vmul.f32 %v2981, %v1966
    %2985 = vrot.lane.b32.xlu0 %v2982, 96
    %v2986 = vpop.permute.xlu0 %2985
    %v2988 = vsel %vm241, %v2986, %v2983
    %v2991 = vrot.slane %v1943, 5
    %2992 = vrot.lane.b32.xlu0 %v2580, 32
    %v2993 = vpop.permute.xlu0 %2992
    %2994 = vrot.lane.b32.xlu0 %v2991, 32
    %v2995 = vpop.permute.xlu0 %2994
    %v2996 = vsel %vm241, %v2993, %v2995
    %v2999 = vrot.slane %v1955, 4
    %3000 = vrot.lane.b32.xlu0 %v2582, 32
    %v3001 = vpop.permute.xlu0 %3000
    %3002 = vrot.lane.b32.xlu0 %v2999, 32
    %v3003 = vpop.permute.xlu0 %3002
    %v3004 = vsel %vm241, %v3001, %v3003
    %v3006 = vsel %vm147, %v1947, %v2590
    %v3007 = vsel %vm45, %v3006, %v2996
    %v3008 = vsel %vm2000, %v3007, %v3004
    %v3010 = vsel %vm246, %v2988, 0
    %3012 = vmatprep.subr.mxu0 0.0
    %3013 = vmatpush1.msra.mxu0 %v1967
    %3014 = vmatprep.subr.mxu0 0.0
    %3015 = vmatpush1.msra.mxu0 %v1968
    %3016 = vmatprep.subr.mxu0 0.0
    %3017 = vmatpush1.msra.mxu0 %v1969
    %3018 = vmatprep.subr.mxu0 0.0
    %3019 = vmatpush1.msra.mxu0 %v1970
    %3020 = vmatprep.subr.mxu0 0.0
    %3021 = vmatpush1.msra.mxu0 %v1971
    %3022 = vmatprep.subr.mxu0 0.0
    %3023 = vmatpush1.msra.mxu0 %v1972
    %3024 = vmatprep.subr.mxu0 0.0
    %3025 = vmatpush1.msra.mxu0 %v1973
    %3026 = vmatprep.subr.mxu0 0.0
    %3027 = vmatpush1.msra.mxu0 %v1974
    %3028 = vmatprep.subr.mxu0 0.0
    %3029 = vmatpush1.msra.mxu0 0.0
    %3030 = vmatprep.subr.mxu0 0.0
    %3031 = vmatpush1.msra.mxu0 0.0
    %3032 = vmatprep.subr.mxu0 0.0
    %3033 = vmatpush1.msra.mxu0 0.0
    %3034 = vmatprep.subr.mxu0 0.0
    %3035 = vmatpush1.msra.mxu0 0.0
    %3036 = vmatprep.subr.mxu0 0.0
    %3037 = vmatpush1.msra.mxu0 0.0
    %3038 = vmatprep.subr.mxu0 0.0
    %3039 = vmatpush1.msra.mxu0 0.0
    %3040 = vmatprep.subr.mxu0 0.0
    %3041 = vmatpush1.msra.mxu0 0.0
    %3042 = vmatprep.subr.mxu0 0.0
    %3043 = vmatpush1.msra.mxu0 0.0
    %3044 = vmatprep.subr.mxu0 0.0
    %3045 = vmatpush1.msra.mxu0 0.0
    %3046 = vmatprep.subr.mxu0 0.0
    %3047 = vmatpush1.msra.mxu0 0.0
    %3048 = vmatprep.subr.mxu0 0.0
    %3049 = vmatpush1.msra.mxu0 0.0
    %3050 = vmatprep.subr.mxu0 0.0
    %3051 = vmatpush1.msra.mxu0 0.0
    %3052 = vmatprep.subr.mxu0 0.0
    %3053 = vmatpush1.msra.mxu0 0.0
    %3054 = vmatprep.subr.mxu0 0.0
    %3055 = vmatpush1.msra.mxu0 0.0
    %3056 = vmatprep.subr.mxu0 0.0
    %3057 = vmatpush1.msra.mxu0 0.0
    %3058 = vmatprep.subr.mxu0 0.0
    %3059 = vmatpush1.msra.mxu0 0.0
    %3060 = vmatprep.subr.mxu0 0.0
    %3061 = vmatpush1.msra.mxu0 0.0
    %3062 = vmatprep.subr.mxu0 0.0
    %3063 = vmatpush1.msra.mxu0 0.0
    %3064 = vmatprep.subr.mxu0 0.0
    %3065 = vmatpush1.msra.mxu0 0.0
    %3066 = vmatprep.subr.mxu0 0.0
    %3067 = vmatpush1.msra.mxu0 0.0
    %3068 = vmatprep.subr.mxu0 0.0
    %3069 = vmatpush1.msra.mxu0 0.0
    %3070 = vmatprep.subr.mxu0 0.0
    %3071 = vmatpush1.msra.mxu0 0.0
    %3072 = vmatprep.subr.mxu0 0.0
    %3073 = vmatpush1.msra.mxu0 0.0
    %3074 = vmatprep.subr.mxu0 0.0
    %3075 = vmatpush1.msra.mxu0 0.0
    %3076 = vmatprep.mubr.f32.mxu0 0.0
    %3077 = vmatmul.mubr.f32.gmra.mrb[0].mxu0 %v3010
    %v3078 = vpop.f32.mrb[0].mxu0
    %v3079 = vadd.f32 %v46, %v3078
    %v3080 = vpop.f32.mrb[0].mxu0
    %3081 = vdwg.mxu0
    %3082 = vrot.lane.b32.xlu0 %v2988, 96
    %v3083 = vpop.permute.xlu0 %3082
    %v3085 = vadd.f32 %v2988, %v3083
    %v3086 = vadd.f32 %v3008, %v3079
    %v3087 = vxor.u32 %v3086, 2147483648
    %v3088 = vmul.f32 %v3087, 1.442695
    %v3089 = vpow.pop %v3088
    %v3090 = vadd.f32 %v3089, 1.0
    %v3091 = vrcp.pop %v3090
    %v3092 = vmul.f32 1.0, %v3091
    %3094 = vrot.lane.b32.xlu0 %v3079, 64
    %v3095 = vpop.permute.xlu0 %3094
    %v3097 = vmul.f32 %v3092, %v3095
    %3099 = vrot.lane.b32.xlu0 %v3097, 64
    %v3100 = vpop.permute.xlu0 %3099
    %v3102 = vadd.f32 %v3008, %v3100
    %v3103 = vtanh.pop %v3102
    %v3104 = vsub.f32 1.0, %v3092
    %3106 = vrot.lane.b32.xlu0 %v3103, 96
    %v3107 = vpop.permute.xlu0 %3106
    %v3109 = vmul.f32 %v3104, %v3107
    %3111 = vrot.lane.b32.xlu0 %v3085, 32
    %v3112 = vpop.permute.xlu0 %3111
    %v3114 = vmul.f32 %v3092, %v3112
    %v3115 = vadd.f32 %v3109, %v3114
    %v3116 = vmul.f32 %v3115, %v1965
    %v3117 = vmul.f32 %v3115, %v1966
    %3119 = vrot.lane.b32.xlu0 %v3116, 96
    %v3120 = vpop.permute.xlu0 %3119
    %v3122 = vsel %vm241, %v3120, %v3117
    %v3124 = vrot.slane %v1943, 4
    %3125 = vrot.lane.b32.xlu0 %v2445, 32
    %v3126 = vpop.permute.xlu0 %3125
    %3127 = vrot.lane.b32.xlu0 %v3124, 32
    %v3128 = vpop.permute.xlu0 %3127
    %v3129 = vsel %vm241, %v3126, %v3128
    %v3131 = vrot.slane %v1955, 3
    %3132 = vrot.lane.b32.xlu0 %v2447, 32
    %v3133 = vpop.permute.xlu0 %3132
    %3134 = vrot.lane.b32.xlu0 %v3131, 32
    %v3135 = vpop.permute.xlu0 %3134
    %v3136 = vsel %vm241, %v3133, %v3135
    %v3138 = vsel %vm147, %v2449, %v1959
    %v3139 = vsel %vm45, %v3138, %v3129
    %v3140 = vsel %vm2000, %v3139, %v3136
    %v3142 = vsel %vm246, %v3122, 0
    %3144 = vmatprep.subr.mxu0 0.0
    %3145 = vmatpush1.msra.mxu0 %v1967
    %3146 = vmatprep.subr.mxu0 0.0
    %3147 = vmatpush1.msra.mxu0 %v1968
    %3148 = vmatprep.subr.mxu0 0.0
    %3149 = vmatpush1.msra.mxu0 %v1969
    %3150 = vmatprep.subr.mxu0 0.0
    %3151 = vmatpush1.msra.mxu0 %v1970
    %3152 = vmatprep.subr.mxu0 0.0
    %3153 = vmatpush1.msra.mxu0 %v1971
    %3154 = vmatprep.subr.mxu0 0.0
    %3155 = vmatpush1.msra.mxu0 %v1972
    %3156 = vmatprep.subr.mxu0 0.0
    %3157 = vmatpush1.msra.mxu0 %v1973
    %3158 = vmatprep.subr.mxu0 0.0
    %3159 = vmatpush1.msra.mxu0 %v1974
    %3160 = vmatprep.subr.mxu0 0.0
    %3161 = vmatpush1.msra.mxu0 0.0
    %3162 = vmatprep.subr.mxu0 0.0
    %3163 = vmatpush1.msra.mxu0 0.0
    %3164 = vmatprep.subr.mxu0 0.0
    %3165 = vmatpush1.msra.mxu0 0.0
    %3166 = vmatprep.subr.mxu0 0.0
    %3167 = vmatpush1.msra.mxu0 0.0
    %3168 = vmatprep.subr.mxu0 0.0
    %3169 = vmatpush1.msra.mxu0 0.0
    %3170 = vmatprep.subr.mxu0 0.0
    %3171 = vmatpush1.msra.mxu0 0.0
    %3172 = vmatprep.subr.mxu0 0.0
    %3173 = vmatpush1.msra.mxu0 0.0
    %3174 = vmatprep.subr.mxu0 0.0
    %3175 = vmatpush1.msra.mxu0 0.0
    %3176 = vmatprep.subr.mxu0 0.0
    %3177 = vmatpush1.msra.mxu0 0.0
    %3178 = vmatprep.subr.mxu0 0.0
    %3179 = vmatpush1.msra.mxu0 0.0
    %3180 = vmatprep.subr.mxu0 0.0
    %3181 = vmatpush1.msra.mxu0 0.0
    %3182 = vmatprep.subr.mxu0 0.0
    %3183 = vmatpush1.msra.mxu0 0.0
    %3184 = vmatprep.subr.mxu0 0.0
    %3185 = vmatpush1.msra.mxu0 0.0
    %3186 = vmatprep.subr.mxu0 0.0
    %3187 = vmatpush1.msra.mxu0 0.0
    %3188 = vmatprep.subr.mxu0 0.0
    %3189 = vmatpush1.msra.mxu0 0.0
    %3190 = vmatprep.subr.mxu0 0.0
    %3191 = vmatpush1.msra.mxu0 0.0
    %3192 = vmatprep.subr.mxu0 0.0
    %3193 = vmatpush1.msra.mxu0 0.0
    %3194 = vmatprep.subr.mxu0 0.0
    %3195 = vmatpush1.msra.mxu0 0.0
    %3196 = vmatprep.subr.mxu0 0.0
    %3197 = vmatpush1.msra.mxu0 0.0
    %3198 = vmatprep.subr.mxu0 0.0
    %3199 = vmatpush1.msra.mxu0 0.0
    %3200 = vmatprep.subr.mxu0 0.0
    %3201 = vmatpush1.msra.mxu0 0.0
    %3202 = vmatprep.subr.mxu0 0.0
    %3203 = vmatpush1.msra.mxu0 0.0
    %3204 = vmatprep.subr.mxu0 0.0
    %3205 = vmatpush1.msra.mxu0 0.0
    %3206 = vmatprep.subr.mxu0 0.0
    %3207 = vmatpush1.msra.mxu0 0.0
    %3208 = vmatprep.mubr.f32.mxu0 0.0
    %3209 = vmatmul.mubr.f32.gmra.mrb[0].mxu0 %v3142
    %v3210 = vpop.f32.mrb[0].mxu0
    %v3211 = vadd.f32 %v46, %v3210
    %v3212 = vpop.f32.mrb[0].mxu0
    %3213 = vdwg.mxu0
    %3214 = vrot.lane.b32.xlu0 %v3122, 96
    %v3215 = vpop.permute.xlu0 %3214
    %v3217 = vadd.f32 %v3122, %v3215
    %v3218 = vadd.f32 %v3140, %v3211
    %v3219 = vxor.u32 %v3218, 2147483648
    %v3220 = vmul.f32 %v3219, 1.442695
    %v3221 = vpow.pop %v3220
    %v3222 = vadd.f32 %v3221, 1.0
    %v3223 = vrcp.pop %v3222
    %v3224 = vmul.f32 1.0, %v3223
    %3226 = vrot.lane.b32.xlu0 %v3211, 64
    %v3227 = vpop.permute.xlu0 %3226
    %v3229 = vmul.f32 %v3224, %v3227
    %3231 = vrot.lane.b32.xlu0 %v3229, 64
    %v3232 = vpop.permute.xlu0 %3231
    %v3234 = vadd.f32 %v3140, %v3232
    %v3235 = vtanh.pop %v3234
    %v3236 = vsub.f32 1.0, %v3224
    %3238 = vrot.lane.b32.xlu0 %v3235, 96
    %v3239 = vpop.permute.xlu0 %3238
    %v3241 = vmul.f32 %v3236, %v3239
    %3243 = vrot.lane.b32.xlu0 %v3217, 32
    %v3244 = vpop.permute.xlu0 %3243
    %v3246 = vmul.f32 %v3224, %v3244
    %v3247 = vadd.f32 %v3241, %v3246
    %v3248 = vmul.f32 %v3247, %v1965
    %v3249 = vmul.f32 %v3247, %v1966
    %3251 = vrot.lane.b32.xlu0 %v3248, 96
    %v3252 = vpop.permute.xlu0 %3251
    %v3254 = vsel %vm241, %v3252, %v3249
    %v3257 = vrot.slane %v1943, 3
    %3258 = vrot.lane.b32.xlu0 %v2308, 32
    %v3259 = vpop.permute.xlu0 %3258
    %3260 = vrot.lane.b32.xlu0 %v3257, 32
    %v3261 = vpop.permute.xlu0 %3260
    %v3262 = vsel %vm241, %v3259, %v3261
    %v3264 = vrot.slane %v1955, 2
    %3265 = vrot.lane.b32.xlu0 %v2310, 32
    %v3266 = vpop.permute.xlu0 %3265
    %3267 = vrot.lane.b32.xlu0 %v3264, 32
    %v3268 = vpop.permute.xlu0 %3267
    %v3269 = vsel %vm241, %v3266, %v3268
    %v3271 = vsel %vm147, %v2312, %v2320
    %v3272 = vsel %vm45, %v3271, %v3262
    %v3273 = vsel %vm2000, %v3272, %v3269
    %v3275 = vsel %vm246, %v3254, 0
    %3277 = vmatprep.subr.mxu0 0.0
    %3278 = vmatpush1.msra.mxu0 %v1967
    %3279 = vmatprep.subr.mxu0 0.0
    %3280 = vmatpush1.msra.mxu0 %v1968
    %3281 = vmatprep.subr.mxu0 0.0
    %3282 = vmatpush1.msra.mxu0 %v1969
    %3283 = vmatprep.subr.mxu0 0.0
    %3284 = vmatpush1.msra.mxu0 %v1970
    %3285 = vmatprep.subr.mxu0 0.0
    %3286 = vmatpush1.msra.mxu0 %v1971
    %3287 = vmatprep.subr.mxu0 0.0
    %3288 = vmatpush1.msra.mxu0 %v1972
    %3289 = vmatprep.subr.mxu0 0.0
    %3290 = vmatpush1.msra.mxu0 %v1973
    %3291 = vmatprep.subr.mxu0 0.0
    %3292 = vmatpush1.msra.mxu0 %v1974
    %3293 = vmatprep.subr.mxu0 0.0
    %3294 = vmatpush1.msra.mxu0 0.0
    %3295 = vmatprep.subr.mxu0 0.0
    %3296 = vmatpush1.msra.mxu0 0.0
    %3297 = vmatprep.subr.mxu0 0.0
    %3298 = vmatpush1.msra.mxu0 0.0
    %3299 = vmatprep.subr.mxu0 0.0
    %3300 = vmatpush1.msra.mxu0 0.0
    %3301 = vmatprep.subr.mxu0 0.0
    %3302 = vmatpush1.msra.mxu0 0.0
    %3303 = vmatprep.subr.mxu0 0.0
    %3304 = vmatpush1.msra.mxu0 0.0
    %3305 = vmatprep.subr.mxu0 0.0
    %3306 = vmatpush1.msra.mxu0 0.0
    %3307 = vmatprep.subr.mxu0 0.0
    %3308 = vmatpush1.msra.mxu0 0.0
    %3309 = vmatprep.subr.mxu0 0.0
    %3310 = vmatpush1.msra.mxu0 0.0
    %3311 = vmatprep.subr.mxu0 0.0
    %3312 = vmatpush1.msra.mxu0 0.0
    %3313 = vmatprep.subr.mxu0 0.0
    %3314 = vmatpush1.msra.mxu0 0.0
    %3315 = vmatprep.subr.mxu0 0.0
    %3316 = vmatpush1.msra.mxu0 0.0
    %3317 = vmatprep.subr.mxu0 0.0
    %3318 = vmatpush1.msra.mxu0 0.0
    %3319 = vmatprep.subr.mxu0 0.0
    %3320 = vmatpush1.msra.mxu0 0.0
    %3321 = vmatprep.subr.mxu0 0.0
    %3322 = vmatpush1.msra.mxu0 0.0
    %3323 = vmatprep.subr.mxu0 0.0
    %3324 = vmatpush1.msra.mxu0 0.0
    %3325 = vmatprep.subr.mxu0 0.0
    %3326 = vmatpush1.msra.mxu0 0.0
    %3327 = vmatprep.subr.mxu0 0.0
    %3328 = vmatpush1.msra.mxu0 0.0
    %3329 = vmatprep.subr.mxu0 0.0
    %3330 = vmatpush1.msra.mxu0 0.0
    %3331 = vmatprep.subr.mxu0 0.0
    %3332 = vmatpush1.msra.mxu0 0.0
    %3333 = vmatprep.subr.mxu0 0.0
    %3334 = vmatpush1.msra.mxu0 0.0
    %3335 = vmatprep.subr.mxu0 0.0
    %3336 = vmatpush1.msra.mxu0 0.0
    %3337 = vmatprep.subr.mxu0 0.0
    %3338 = vmatpush1.msra.mxu0 0.0
    %3339 = vmatprep.subr.mxu0 0.0
    %3340 = vmatpush1.msra.mxu0 0.0
    %3341 = vmatprep.mubr.f32.mxu0 0.0
    %3342 = vmatmul.mubr.f32.gmra.mrb[0].mxu0 %v3275
    %v3343 = vpop.f32.mrb[0].mxu0
    %v3344 = vadd.f32 %v46, %v3343
    %v3345 = vpop.f32.mrb[0].mxu0
    %3346 = vdwg.mxu0
    %3347 = vrot.lane.b32.xlu0 %v3254, 96
    %v3348 = vpop.permute.xlu0 %3347
    %v3350 = vadd.f32 %v3254, %v3348
    %v3351 = vadd.f32 %v3273, %v3344
    %v3352 = vxor.u32 %v3351, 2147483648
    %v3353 = vmul.f32 %v3352, 1.442695
    %v3354 = vpow.pop %v3353
    %v3355 = vadd.f32 %v3354, 1.0
    %v3356 = vrcp.pop %v3355
    %v3357 = vmul.f32 1.0, %v3356
    %3359 = vrot.lane.b32.xlu0 %v3344, 64
    %v3360 = vpop.permute.xlu0 %3359
    %v3362 = vmul.f32 %v3357, %v3360
    %3364 = vrot.lane.b32.xlu0 %v3362, 64
    %v3365 = vpop.permute.xlu0 %3364
    %v3367 = vadd.f32 %v3273, %v3365
    %v3368 = vtanh.pop %v3367
    %v3369 = vsub.f32 1.0, %v3357
    %3371 = vrot.lane.b32.xlu0 %v3368, 96
    %v3372 = vpop.permute.xlu0 %3371
    %v3374 = vmul.f32 %v3369, %v3372
    %3376 = vrot.lane.b32.xlu0 %v3350, 32
    %v3377 = vpop.permute.xlu0 %3376
    %v3379 = vmul.f32 %v3357, %v3377
    %v3380 = vadd.f32 %v3374, %v3379
    %v3381 = vmul.f32 %v3380, %v1965
    %v3382 = vmul.f32 %v3380, %v1966
    %3384 = vrot.lane.b32.xlu0 %v3381, 96
    %v3385 = vpop.permute.xlu0 %3384
    %v3387 = vsel %vm241, %v3385, %v3382
    %v3390 = vrot.slane %v1943, 2
    %3391 = vrot.lane.b32.xlu0 %v2171, 32
    %v3392 = vpop.permute.xlu0 %3391
    %3393 = vrot.lane.b32.xlu0 %v3390, 32
    %v3394 = vpop.permute.xlu0 %3393
    %v3395 = vsel %vm241, %v3392, %v3394
    %v3397 = vrot.slane %v1955, 1
    %3398 = vrot.lane.b32.xlu0 %v2173, 32
    %v3399 = vpop.permute.xlu0 %3398
    %3400 = vrot.lane.b32.xlu0 %v3397, 32
    %v3401 = vpop.permute.xlu0 %3400
    %v3402 = vsel %vm241, %v3399, %v3401
    %v3404 = vsel %vm147, %v2175, %v2183
    %v3405 = vsel %vm45, %v3404, %v3395
    %v3406 = vsel %vm2000, %v3405, %v3402
    %v3408 = vsel %vm246, %v3387, 0
    %3410 = vmatprep.subr.mxu0 0.0
    %3411 = vmatpush1.msra.mxu0 %v1967
    %3412 = vmatprep.subr.mxu0 0.0
    %3413 = vmatpush1.msra.mxu0 %v1968
    %3414 = vmatprep.subr.mxu0 0.0
    %3415 = vmatpush1.msra.mxu0 %v1969
    %3416 = vmatprep.subr.mxu0 0.0
    %3417 = vmatpush1.msra.mxu0 %v1970
    %3418 = vmatprep.subr.mxu0 0.0
    %3419 = vmatpush1.msra.mxu0 %v1971
    %3420 = vmatprep.subr.mxu0 0.0
    %3421 = vmatpush1.msra.mxu0 %v1972
    %3422 = vmatprep.subr.mxu0 0.0
    %3423 = vmatpush1.msra.mxu0 %v1973
    %3424 = vmatprep.subr.mxu0 0.0
    %3425 = vmatpush1.msra.mxu0 %v1974
    %3426 = vmatprep.subr.mxu0 0.0
    %3427 = vmatpush1.msra.mxu0 0.0
    %3428 = vmatprep.subr.mxu0 0.0
    %3429 = vmatpush1.msra.mxu0 0.0
    %3430 = vmatprep.subr.mxu0 0.0
    %3431 = vmatpush1.msra.mxu0 0.0
    %3432 = vmatprep.subr.mxu0 0.0
    %3433 = vmatpush1.msra.mxu0 0.0
    %3434 = vmatprep.subr.mxu0 0.0
    %3435 = vmatpush1.msra.mxu0 0.0
    %3436 = vmatprep.subr.mxu0 0.0
    %3437 = vmatpush1.msra.mxu0 0.0
    %3438 = vmatprep.subr.mxu0 0.0
    %3439 = vmatpush1.msra.mxu0 0.0
    %3440 = vmatprep.subr.mxu0 0.0
    %3441 = vmatpush1.msra.mxu0 0.0
    %3442 = vmatprep.subr.mxu0 0.0
    %3443 = vmatpush1.msra.mxu0 0.0
    %3444 = vmatprep.subr.mxu0 0.0
    %3445 = vmatpush1.msra.mxu0 0.0
    %3446 = vmatprep.subr.mxu0 0.0
    %3447 = vmatpush1.msra.mxu0 0.0
    %3448 = vmatprep.subr.mxu0 0.0
    %3449 = vmatpush1.msra.mxu0 0.0
    %3450 = vmatprep.subr.mxu0 0.0
    %3451 = vmatpush1.msra.mxu0 0.0
    %3452 = vmatprep.subr.mxu0 0.0
    %3453 = vmatpush1.msra.mxu0 0.0
    %3454 = vmatprep.subr.mxu0 0.0
    %3455 = vmatpush1.msra.mxu0 0.0
    %3456 = vmatprep.subr.mxu0 0.0
    %3457 = vmatpush1.msra.mxu0 0.0
    %3458 = vmatprep.subr.mxu0 0.0
    %3459 = vmatpush1.msra.mxu0 0.0
    %3460 = vmatprep.subr.mxu0 0.0
    %3461 = vmatpush1.msra.mxu0 0.0
    %3462 = vmatprep.subr.mxu0 0.0
    %3463 = vmatpush1.msra.mxu0 0.0
    %3464 = vmatprep.subr.mxu0 0.0
    %3465 = vmatpush1.msra.mxu0 0.0
    %3466 = vmatprep.subr.mxu0 0.0
    %3467 = vmatpush1.msra.mxu0 0.0
    %3468 = vmatprep.subr.mxu0 0.0
    %3469 = vmatpush1.msra.mxu0 0.0
    %3470 = vmatprep.subr.mxu0 0.0
    %3471 = vmatpush1.msra.mxu0 0.0
    %3472 = vmatprep.subr.mxu0 0.0
    %3473 = vmatpush1.msra.mxu0 0.0
    %3474 = vmatprep.mubr.f32.mxu0 0.0
    %3475 = vmatmul.mubr.f32.gmra.mrb[0].mxu0 %v3408
    %v3476 = vpop.f32.mrb[0].mxu0
    %v3477 = vadd.f32 %v46, %v3476
    %v3478 = vpop.f32.mrb[0].mxu0
    %3479 = vdwg.mxu0
    %3480 = vrot.lane.b32.xlu0 %v3387, 96
    %v3481 = vpop.permute.xlu0 %3480
    %v3483 = vadd.f32 %v3387, %v3481
    %v3484 = vadd.f32 %v3406, %v3477
    %v3485 = vxor.u32 %v3484, 2147483648
    %v3486 = vmul.f32 %v3485, 1.442695
    %v3487 = vpow.pop %v3486
    %v3488 = vadd.f32 %v3487, 1.0
    %v3489 = vrcp.pop %v3488
    %v3490 = vmul.f32 1.0, %v3489
    %3492 = vrot.lane.b32.xlu0 %v3477, 64
    %v3493 = vpop.permute.xlu0 %3492
    %v3495 = vmul.f32 %v3490, %v3493
    %3497 = vrot.lane.b32.xlu0 %v3495, 64
    %v3498 = vpop.permute.xlu0 %3497
    %v3500 = vadd.f32 %v3406, %v3498
    %v3501 = vtanh.pop %v3500
    %v3502 = vsub.f32 1.0, %v3490
    %3504 = vrot.lane.b32.xlu0 %v3501, 96
    %v3505 = vpop.permute.xlu0 %3504
    %v3507 = vmul.f32 %v3502, %v3505
    %3509 = vrot.lane.b32.xlu0 %v3483, 32
    %v3510 = vpop.permute.xlu0 %3509
    %v3512 = vmul.f32 %v3490, %v3510
    %v3513 = vadd.f32 %v3507, %v3512
    %v3514 = vmul.f32 %v3513, %v1965
    %v3515 = vmul.f32 %v3513, %v1966
    %3517 = vrot.lane.b32.xlu0 %v3514, 96
    %v3518 = vpop.permute.xlu0 %3517
    %v3520 = vsel %vm241, %v3518, %v3515
    %v3523 = vrot.slane %v1943, 1
    %3524 = vrot.lane.b32.xlu0 %v2036, 32
    %v3525 = vpop.permute.xlu0 %3524
    %3526 = vrot.lane.b32.xlu0 %v3523, 32
    %v3527 = vpop.permute.xlu0 %3526
    %v3528 = vsel %vm241, %v3525, %v3527
    %3530 = vrot.lane.b32.xlu0 %v1953, 32
    %v3531 = vpop.permute.xlu0 %3530
    %3532 = vrot.lane.b32.xlu0 %v1955, 32
    %v3533 = vpop.permute.xlu0 %3532
    %v3534 = vsel %vm241, %v3531, %v3533
    %v3536 = vsel %vm147, %v2038, %v2046
    %v3537 = vsel %vm45, %v3536, %v3528
    %v3538 = vsel %vm2000, %v3537, %v3534
    %v3540 = vsel %vm246, %v3520, 0
    %3542 = vmatprep.subr.mxu0 0.0
    %3543 = vmatpush1.msra.mxu0 %v1967
    %3544 = vmatprep.subr.mxu0 0.0
    %3545 = vmatpush1.msra.mxu0 %v1968
    %3546 = vmatprep.subr.mxu0 0.0
    %3547 = vmatpush1.msra.mxu0 %v1969
    %3548 = vmatprep.subr.mxu0 0.0
    %3549 = vmatpush1.msra.mxu0 %v1970
    %3550 = vmatprep.subr.mxu0 0.0
    %3551 = vmatpush1.msra.mxu0 %v1971
    %3552 = vmatprep.subr.mxu0 0.0
    %3553 = vmatpush1.msra.mxu0 %v1972
    %3554 = vmatprep.subr.mxu0 0.0
    %3555 = vmatpush1.msra.mxu0 %v1973
    %3556 = vmatprep.subr.mxu0 0.0
    %3557 = vmatpush1.msra.mxu0 %v1974
    %3558 = vmatprep.subr.mxu0 0.0
    %3559 = vmatpush1.msra.mxu0 0.0
    %3560 = vmatprep.subr.mxu0 0.0
    %3561 = vmatpush1.msra.mxu0 0.0
    %3562 = vmatprep.subr.mxu0 0.0
    %3563 = vmatpush1.msra.mxu0 0.0
    %3564 = vmatprep.subr.mxu0 0.0
    %3565 = vmatpush1.msra.mxu0 0.0
    %3566 = vmatprep.subr.mxu0 0.0
    %3567 = vmatpush1.msra.mxu0 0.0
    %3568 = vmatprep.subr.mxu0 0.0
    %3569 = vmatpush1.msra.mxu0 0.0
    %3570 = vmatprep.subr.mxu0 0.0
    %3571 = vmatpush1.msra.mxu0 0.0
    %3572 = vmatprep.subr.mxu0 0.0
    %3573 = vmatpush1.msra.mxu0 0.0
    %3574 = vmatprep.subr.mxu0 0.0
    %3575 = vmatpush1.msra.mxu0 0.0
    %3576 = vmatprep.subr.mxu0 0.0
    %3577 = vmatpush1.msra.mxu0 0.0
    %3578 = vmatprep.subr.mxu0 0.0
    %3579 = vmatpush1.msra.mxu0 0.0
    %3580 = vmatprep.subr.mxu0 0.0
    %3581 = vmatpush1.msra.mxu0 0.0
    %3582 = vmatprep.subr.mxu0 0.0
    %3583 = vmatpush1.msra.mxu0 0.0
    %3584 = vmatprep.subr.mxu0 0.0
    %3585 = vmatpush1.msra.mxu0 0.0
    %3586 = vmatprep.subr.mxu0 0.0
    %3587 = vmatpush1.msra.mxu0 0.0
    %3588 = vmatprep.subr.mxu0 0.0
    %3589 = vmatpush1.msra.mxu0 0.0
    %3590 = vmatprep.subr.mxu0 0.0
    %3591 = vmatpush1.msra.mxu0 0.0
    %3592 = vmatprep.subr.mxu0 0.0
    %3593 = vmatpush1.msra.mxu0 0.0
    %3594 = vmatprep.subr.mxu0 0.0
    %3595 = vmatpush1.msra.mxu0 0.0
    %3596 = vmatprep.subr.mxu0 0.0
    %3597 = vmatpush1.msra.mxu0 0.0
    %3598 = vmatprep.subr.mxu0 0.0
    %3599 = vmatpush1.msra.mxu0 0.0
    %3600 = vmatprep.subr.mxu0 0.0
    %3601 = vmatpush1.msra.mxu0 0.0
    %3602 = vmatprep.subr.mxu0 0.0
    %3603 = vmatpush1.msra.mxu0 0.0
    %3604 = vmatprep.subr.mxu0 0.0
    %3605 = vmatpush1.msra.mxu0 0.0
    %3606 = vmatprep.mubr.f32.mxu0 0.0
    %3607 = vmatmul.mubr.f32.gmra.mrb[0].mxu0 %v3540
    %v3608 = vpop.f32.mrb[0].mxu0
    %v3609 = vadd.f32 %v46, %v3608
    %v3610 = vpop.f32.mrb[0].mxu0
    %3611 = vdwg.mxu0
    %3612 = vrot.lane.b32.xlu0 %v3520, 96
    %v3613 = vpop.permute.xlu0 %3612
    %v3615 = vadd.f32 %v3520, %v3613
    %v3616 = vadd.f32 %v3538, %v3609
    %v3617 = vxor.u32 %v3616, 2147483648
    %v3618 = vmul.f32 %v3617, 1.442695
    %v3619 = vpow.pop %v3618
    %v3620 = vadd.f32 %v3619, 1.0
    %v3621 = vrcp.pop %v3620
    %v3622 = vmul.f32 1.0, %v3621
    %3624 = vrot.lane.b32.xlu0 %v3609, 64
    %v3625 = vpop.permute.xlu0 %3624
    %v3627 = vmul.f32 %v3622, %v3625
    %3629 = vrot.lane.b32.xlu0 %v3627, 64
    %v3630 = vpop.permute.xlu0 %3629
    %v3632 = vadd.f32 %v3538, %v3630
    %v3633 = vtanh.pop %v3632
    %v3634 = vsub.f32 1.0, %v3622
    %3636 = vrot.lane.b32.xlu0 %v3633, 96
    %v3637 = vpop.permute.xlu0 %3636
    %v3639 = vmul.f32 %v3634, %v3637
    %3641 = vrot.lane.b32.xlu0 %v3615, 32
    %v3642 = vpop.permute.xlu0 %3641
    %v3644 = vmul.f32 %v3622, %v3642
    %v3645 = vadd.f32 %v3639, %v3644
    %v3646 = vmul.f32 %v3645, %v1965
    %v3647 = vmul.f32 %v3645, %v1966
    %3649 = vrot.lane.b32.xlu0 %v3646, 96
    %v3650 = vpop.permute.xlu0 %3649
    %v3652 = vsel %vm241, %v3650, %v3647
    %3655 = vrot.lane.b32.xlu0 %v1941, 32
    %v3656 = vpop.permute.xlu0 %3655
    %3657 = vrot.lane.b32.xlu0 %v1943, 32
    %v3658 = vpop.permute.xlu0 %3657
    %v3659 = vsel %vm241, %v3656, %v3658
    %v3661 = vrot.slane %v1955, 7
    %3662 = vrot.lane.b32.xlu0 %v1976, 32
    %v3663 = vpop.permute.xlu0 %3662
    %3664 = vrot.lane.b32.xlu0 %v3661, 32
    %v3665 = vpop.permute.xlu0 %3664
    %v3666 = vsel %vm241, %v3663, %v3665
    %v3668 = vsel %vm147, %v1980, %v1990
    %v3669 = vsel %vm45, %v3668, %v3659
    %v3670 = vsel %vm2000, %v3669, %v3666
    %v3672 = vsel %vm246, %v3652, 0
    %3674 = vmatprep.subr.mxu0 0.0
    %3675 = vmatpush1.msra.mxu0 %v1967
    %3676 = vmatprep.subr.mxu0 0.0
    %3677 = vmatpush1.msra.mxu0 %v1968
    %3678 = vmatprep.subr.mxu0 0.0
    %3679 = vmatpush1.msra.mxu0 %v1969
    %3680 = vmatprep.subr.mxu0 0.0
    %3681 = vmatpush1.msra.mxu0 %v1970
    %3682 = vmatprep.subr.mxu0 0.0
    %3683 = vmatpush1.msra.mxu0 %v1971
    %3684 = vmatprep.subr.mxu0 0.0
    %3685 = vmatpush1.msra.mxu0 %v1972
    %3686 = vmatprep.subr.mxu0 0.0
    %3687 = vmatpush1.msra.mxu0 %v1973
    %3688 = vmatprep.subr.mxu0 0.0
    %3689 = vmatpush1.msra.mxu0 %v1974
    %3690 = vmatprep.subr.mxu0 0.0
    %3691 = vmatpush1.msra.mxu0 0.0
    %3692 = vmatprep.subr.mxu0 0.0
    %3693 = vmatpush1.msra.mxu0 0.0
    %3694 = vmatprep.subr.mxu0 0.0
    %3695 = vmatpush1.msra.mxu0 0.0
    %3696 = vmatprep.subr.mxu0 0.0
    %3697 = vmatpush1.msra.mxu0 0.0
    %3698 = vmatprep.subr.mxu0 0.0
    %3699 = vmatpush1.msra.mxu0 0.0
    %3700 = vmatprep.subr.mxu0 0.0
    %3701 = vmatpush1.msra.mxu0 0.0
    %3702 = vmatprep.subr.mxu0 0.0
    %3703 = vmatpush1.msra.mxu0 0.0
    %3704 = vmatprep.subr.mxu0 0.0
    %3705 = vmatpush1.msra.mxu0 0.0
    %3706 = vmatprep.subr.mxu0 0.0
    %3707 = vmatpush1.msra.mxu0 0.0
    %3708 = vmatprep.subr.mxu0 0.0
    %3709 = vmatpush1.msra.mxu0 0.0
    %3710 = vmatprep.subr.mxu0 0.0
    %3711 = vmatpush1.msra.mxu0 0.0
    %3712 = vmatprep.subr.mxu0 0.0
    %3713 = vmatpush1.msra.mxu0 0.0
    %3714 = vmatprep.subr.mxu0 0.0
    %3715 = vmatpush1.msra.mxu0 0.0
    %3716 = vmatprep.subr.mxu0 0.0
    %3717 = vmatpush1.msra.mxu0 0.0
    %3718 = vmatprep.subr.mxu0 0.0
    %3719 = vmatpush1.msra.mxu0 0.0
    %3720 = vmatprep.subr.mxu0 0.0
    %3721 = vmatpush1.msra.mxu0 0.0
    %3722 = vmatprep.subr.mxu0 0.0
    %3723 = vmatpush1.msra.mxu0 0.0
    %3724 = vmatprep.subr.mxu0 0.0
    %3725 = vmatpush1.msra.mxu0 0.0
    %3726 = vmatprep.subr.mxu0 0.0
    %3727 = vmatpush1.msra.mxu0 0.0
    %3728 = vmatprep.subr.mxu0 0.0
    %3729 = vmatpush1.msra.mxu0 0.0
    %3730 = vmatprep.subr.mxu0 0.0
    %3731 = vmatpush1.msra.mxu0 0.0
    %3732 = vmatprep.subr.mxu0 0.0
    %3733 = vmatpush1.msra.mxu0 0.0
    %3734 = vmatprep.subr.mxu0 0.0
    %3735 = vmatpush1.msra.mxu0 0.0
    %3736 = vmatprep.subr.mxu0 0.0
    %3737 = vmatpush1.msra.mxu0 0.0
    %3738 = vmatprep.mubr.f32.mxu0 0.0
    %3739 = vmatmul.mubr.f32.gmra.mrb[0].mxu0 %v3672
    %v3740 = vpop.f32.mrb[0].mxu0
    %v3741 = vadd.f32 %v46, %v3740
    %v3742 = vpop.f32.mrb[0].mxu0
    %3743 = vdwg.mxu0
    %3744 = vrot.lane.b32.xlu0 %v3652, 96
    %v3745 = vpop.permute.xlu0 %3744
    %v3747 = vadd.f32 %v3652, %v3745
    %v3748 = vadd.f32 %v3670, %v3741
    %v3749 = vxor.u32 %v3748, 2147483648
    %v3750 = vmul.f32 %v3749, 1.442695
    %v3751 = vpow.pop %v3750
    %v3752 = vadd.f32 %v3751, 1.0
    %v3753 = vrcp.pop %v3752
    %v3754 = vmul.f32 1.0, %v3753
    %3756 = vrot.lane.b32.xlu0 %v3741, 64
    %v3757 = vpop.permute.xlu0 %3756
    %v3759 = vmul.f32 %v3754, %v3757
    %3761 = vrot.lane.b32.xlu0 %v3759, 64
    %v3762 = vpop.permute.xlu0 %3761
    %v3764 = vadd.f32 %v3670, %v3762
    %v3765 = vtanh.pop %v3764
    %v3766 = vsub.f32 1.0, %v3754
    %3768 = vrot.lane.b32.xlu0 %v3765, 96
    %v3769 = vpop.permute.xlu0 %3768
    %v3771 = vmul.f32 %v3766, %v3769
    %3773 = vrot.lane.b32.xlu0 %v3747, 32
    %v3774 = vpop.permute.xlu0 %3773
    %v3776 = vmul.f32 %v3754, %v3774
    %v3777 = vadd.f32 %v3771, %v3776
    %v3778 = vmul.f32 %v3777, %v1965
    %v3779 = vmul.f32 %v3777, %v1966
    %3781 = vrot.lane.b32.xlu0 %v3778, 96
    %v3782 = vpop.permute.xlu0 %3781
    %v3784 = vsel %vm241, %v3782, %v3779
    %v3787 = vrot.slane %v1943, 7
    %3788 = vrot.lane.b32.xlu0 %v2852, 32
    %v3789 = vpop.permute.xlu0 %3788
    %3790 = vrot.lane.b32.xlu0 %v3787, 32
    %v3791 = vpop.permute.xlu0 %3790
    %v3792 = vsel %vm241, %v3789, %v3791
    %v3794 = vrot.slane %v1955, 6
    %3795 = vrot.lane.b32.xlu0 %v2854, 32
    %v3796 = vpop.permute.xlu0 %3795
    %3797 = vrot.lane.b32.xlu0 %v3794, 32
    %v3798 = vpop.permute.xlu0 %3797
    %v3799 = vsel %vm241, %v3796, %v3798
    %v3801 = vsel %vm147, %v2856, %v2864
    %v3802 = vsel %vm45, %v3801, %v3792
    %v3803 = vsel %vm2000, %v3802, %v3799
    %v3805 = vsel %vm246, %v3784, 0
    %3807 = vmatprep.subr.mxu0 0.0
    %3808 = vmatpush1.msra.mxu0 %v1967
    %3809 = vmatprep.subr.mxu0 0.0
    %3810 = vmatpush1.msra.mxu0 %v1968
    %3811 = vmatprep.subr.mxu0 0.0
    %3812 = vmatpush1.msra.mxu0 %v1969
    %3813 = vmatprep.subr.mxu0 0.0
    %3814 = vmatpush1.msra.mxu0 %v1970
    %3815 = vmatprep.subr.mxu0 0.0
    %3816 = vmatpush1.msra.mxu0 %v1971
    %3817 = vmatprep.subr.mxu0 0.0
    %3818 = vmatpush1.msra.mxu0 %v1972
    %3819 = vmatprep.subr.mxu0 0.0
    %3820 = vmatpush1.msra.mxu0 %v1973
    %3821 = vmatprep.subr.mxu0 0.0
    %3822 = vmatpush1.msra.mxu0 %v1974
    %3823 = vmatprep.subr.mxu0 0.0
    %3824 = vmatpush1.msra.mxu0 0.0
    %3825 = vmatprep.subr.mxu0 0.0
    %3826 = vmatpush1.msra.mxu0 0.0
    %3827 = vmatprep.subr.mxu0 0.0
    %3828 = vmatpush1.msra.mxu0 0.0
    %3829 = vmatprep.subr.mxu0 0.0
    %3830 = vmatpush1.msra.mxu0 0.0
    %3831 = vmatprep.subr.mxu0 0.0
    %3832 = vmatpush1.msra.mxu0 0.0
    %3833 = vmatprep.subr.mxu0 0.0
    %3834 = vmatpush1.msra.mxu0 0.0
    %3835 = vmatprep.subr.mxu0 0.0
    %3836 = vmatpush1.msra.mxu0 0.0
    %3837 = vmatprep.subr.mxu0 0.0
    %3838 = vmatpush1.msra.mxu0 0.0
    %3839 = vmatprep.subr.mxu0 0.0
    %3840 = vmatpush1.msra.mxu0 0.0
    %3841 = vmatprep.subr.mxu0 0.0
    %3842 = vmatpush1.msra.mxu0 0.0
    %3843 = vmatprep.subr.mxu0 0.0
    %3844 = vmatpush1.msra.mxu0 0.0
    %3845 = vmatprep.subr.mxu0 0.0
    %3846 = vmatpush1.msra.mxu0 0.0
    %3847 = vmatprep.subr.mxu0 0.0
    %3848 = vmatpush1.msra.mxu0 0.0
    %3849 = vmatprep.subr.mxu0 0.0
    %3850 = vmatpush1.msra.mxu0 0.0
    %3851 = vmatprep.subr.mxu0 0.0
    %3852 = vmatpush1.msra.mxu0 0.0
    %3853 = vmatprep.subr.mxu0 0.0
    %3854 = vmatpush1.msra.mxu0 0.0
    %3855 = vmatprep.subr.mxu0 0.0
    %3856 = vmatpush1.msra.mxu0 0.0
    %3857 = vmatprep.subr.mxu0 0.0
    %3858 = vmatpush1.msra.mxu0 0.0
    %3859 = vmatprep.subr.mxu0 0.0
    %3860 = vmatpush1.msra.mxu0 0.0
    %3861 = vmatprep.subr.mxu0 0.0
    %3862 = vmatpush1.msra.mxu0 0.0
    %3863 = vmatprep.subr.mxu0 0.0
    %3864 = vmatpush1.msra.mxu0 0.0
    %3865 = vmatprep.subr.mxu0 0.0
    %3866 = vmatpush1.msra.mxu0 0.0
    %3867 = vmatprep.subr.mxu0 0.0
    %3868 = vmatpush1.msra.mxu0 0.0
    %3869 = vmatprep.subr.mxu0 0.0
    %3870 = vmatpush1.msra.mxu0 0.0
    %3871 = vmatprep.mubr.f32.mxu0 0.0
    %3872 = vmatmul.mubr.f32.gmra.mrb[0].mxu0 %v3805
    %v3873 = vpop.f32.mrb[0].mxu0
    %v3874 = vadd.f32 %v46, %v3873
    %v3875 = vpop.f32.mrb[0].mxu0
    %3876 = vdwg.mxu0
    %3877 = vrot.lane.b32.xlu0 %v3784, 96
    %v3878 = vpop.permute.xlu0 %3877
    %v3880 = vadd.f32 %v3784, %v3878
    %v3881 = vadd.f32 %v3803, %v3874
    %v3882 = vxor.u32 %v3881, 2147483648
    %v3883 = vmul.f32 %v3882, 1.442695
    %v3884 = vpow.pop %v3883
    %v3885 = vadd.f32 %v3884, 1.0
    %v3886 = vrcp.pop %v3885
    %v3887 = vmul.f32 1.0, %v3886
    %3889 = vrot.lane.b32.xlu0 %v3874, 64
    %v3890 = vpop.permute.xlu0 %3889
    %v3892 = vmul.f32 %v3887, %v3890
    %3894 = vrot.lane.b32.xlu0 %v3892, 64
    %v3895 = vpop.permute.xlu0 %3894
    %v3897 = vadd.f32 %v3803, %v3895
    %v3898 = vtanh.pop %v3897
    %v3899 = vsub.f32 1.0, %v3887
    %3901 = vrot.lane.b32.xlu0 %v3898, 96
    %v3902 = vpop.permute.xlu0 %3901
    %v3904 = vmul.f32 %v3899, %v3902
    %3906 = vrot.lane.b32.xlu0 %v3880, 32
    %v3907 = vpop.permute.xlu0 %3906
    %v3909 = vmul.f32 %v3887, %v3907
    %v3910 = vadd.f32 %v3904, %v3909
    %v3911 = vmul.f32 %v3910, %v1965
    %v3912 = vmul.f32 %v3910, %v1966
    %3914 = vrot.lane.b32.xlu0 %v3911, 96
    %v3915 = vpop.permute.xlu0 %3914
    %v3917 = vsel %vm241, %v3915, %v3912
    %v3920 = vrot.slane %v1943, 6
    %3921 = vrot.lane.b32.xlu0 %v2715, 32
    %v3922 = vpop.permute.xlu0 %3921
    %3923 = vrot.lane.b32.xlu0 %v3920, 32
    %v3924 = vpop.permute.xlu0 %3923
    %v3925 = vsel %vm241, %v3922, %v3924
    %v3927 = vrot.slane %v1955, 5
    %3928 = vrot.lane.b32.xlu0 %v2717, 32
    %v3929 = vpop.permute.xlu0 %3928
    %3930 = vrot.lane.b32.xlu0 %v3927, 32
    %v3931 = vpop.permute.xlu0 %3930
    %v3932 = vsel %vm241, %v3929, %v3931
    %v3934 = vsel %vm147, %v2719, %v2727
    %v3935 = vsel %vm45, %v3934, %v3925
    %v3936 = vsel %vm2000, %v3935, %v3932
    %v3938 = vsel %vm246, %v3917, 0
    %3940 = vmatprep.subr.mxu0 0.0
    %3941 = vmatpush1.msra.mxu0 %v1967
    %3942 = vmatprep.subr.mxu0 0.0
    %3943 = vmatpush1.msra.mxu0 %v1968
    %3944 = vmatprep.subr.mxu0 0.0
    %3945 = vmatpush1.msra.mxu0 %v1969
    %3946 = vmatprep.subr.mxu0 0.0
    %3947 = vmatpush1.msra.mxu0 %v1970
    %3948 = vmatprep.subr.mxu0 0.0
    %3949 = vmatpush1.msra.mxu0 %v1971
    %3950 = vmatprep.subr.mxu0 0.0
    %3951 = vmatpush1.msra.mxu0 %v1972
    %3952 = vmatprep.subr.mxu0 0.0
    %3953 = vmatpush1.msra.mxu0 %v1973
    %3954 = vmatprep.subr.mxu0 0.0
    %3955 = vmatpush1.msra.mxu0 %v1974
    %3956 = vmatprep.subr.mxu0 0.0
    %3957 = vmatpush1.msra.mxu0 0.0
    %3958 = vmatprep.subr.mxu0 0.0
    %3959 = vmatpush1.msra.mxu0 0.0
    %3960 = vmatprep.subr.mxu0 0.0
    %3961 = vmatpush1.msra.mxu0 0.0
    %3962 = vmatprep.subr.mxu0 0.0
    %3963 = vmatpush1.msra.mxu0 0.0
    %3964 = vmatprep.subr.mxu0 0.0
    %3965 = vmatpush1.msra.mxu0 0.0
    %3966 = vmatprep.subr.mxu0 0.0
    %3967 = vmatpush1.msra.mxu0 0.0
    %3968 = vmatprep.subr.mxu0 0.0
    %3969 = vmatpush1.msra.mxu0 0.0
    %3970 = vmatprep.subr.mxu0 0.0
    %3971 = vmatpush1.msra.mxu0 0.0
    %3972 = vmatprep.subr.mxu0 0.0
    %3973 = vmatpush1.msra.mxu0 0.0
    %3974 = vmatprep.subr.mxu0 0.0
    %3975 = vmatpush1.msra.mxu0 0.0
    %3976 = vmatprep.subr.mxu0 0.0
    %3977 = vmatpush1.msra.mxu0 0.0
    %3978 = vmatprep.subr.mxu0 0.0
    %3979 = vmatpush1.msra.mxu0 0.0
    %3980 = vmatprep.subr.mxu0 0.0
    %3981 = vmatpush1.msra.mxu0 0.0
    %3982 = vmatprep.subr.mxu0 0.0
    %3983 = vmatpush1.msra.mxu0 0.0
    %3984 = vmatprep.subr.mxu0 0.0
    %3985 = vmatpush1.msra.mxu0 0.0
    %3986 = vmatprep.subr.mxu0 0.0
    %3987 = vmatpush1.msra.mxu0 0.0
    %3988 = vmatprep.subr.mxu0 0.0
    %3989 = vmatpush1.msra.mxu0 0.0
    %3990 = vmatprep.subr.mxu0 0.0
    %3991 = vmatpush1.msra.mxu0 0.0
    %3992 = vmatprep.subr.mxu0 0.0
    %3993 = vmatpush1.msra.mxu0 0.0
    %3994 = vmatprep.subr.mxu0 0.0
    %3995 = vmatpush1.msra.mxu0 0.0
    %3996 = vmatprep.subr.mxu0 0.0
    %3997 = vmatpush1.msra.mxu0 0.0
    %3998 = vmatprep.subr.mxu0 0.0
    %3999 = vmatpush1.msra.mxu0 0.0
    %4000 = vmatprep.subr.mxu0 0.0
    %4001 = vmatpush1.msra.mxu0 0.0
    %4002 = vmatprep.subr.mxu0 0.0
    %4003 = vmatpush1.msra.mxu0 0.0
    %4004 = vmatprep.mubr.f32.mxu0 0.0
    %4005 = vmatmul.mubr.f32.gmra.mrb[0].mxu0 %v3938
    %v4006 = vpop.f32.mrb[0].mxu0
    %v4007 = vadd.f32 %v46, %v4006
    %v4008 = vpop.f32.mrb[0].mxu0
    %4009 = vdwg.mxu0
    %4010 = vrot.lane.b32.xlu0 %v3917, 96
    %v4011 = vpop.permute.xlu0 %4010
    %v4013 = vadd.f32 %v3917, %v4011
    %v4014 = vadd.f32 %v3936, %v4007
    %v4015 = vxor.u32 %v4014, 2147483648
    %v4016 = vmul.f32 %v4015, 1.442695
    %v4017 = vpow.pop %v4016
    %v4018 = vadd.f32 %v4017, 1.0
    %v4019 = vrcp.pop %v4018
    %v4020 = vmul.f32 1.0, %v4019
    %4022 = vrot.lane.b32.xlu0 %v4007, 64
    %v4023 = vpop.permute.xlu0 %4022
    %v4025 = vmul.f32 %v4020, %v4023
    %4027 = vrot.lane.b32.xlu0 %v4025, 64
    %v4028 = vpop.permute.xlu0 %4027
    %v4030 = vadd.f32 %v3936, %v4028
    %v4031 = vtanh.pop %v4030
    %v4032 = vsub.f32 1.0, %v4020
    %4034 = vrot.lane.b32.xlu0 %v4031, 96
    %v4035 = vpop.permute.xlu0 %4034
    %v4037 = vmul.f32 %v4032, %v4035
    %4039 = vrot.lane.b32.xlu0 %v4013, 32
    %v4040 = vpop.permute.xlu0 %4039
    %v4042 = vmul.f32 %v4020, %v4040
    %v4043 = vadd.f32 %v4037, %v4042
    %v4045 = vrot.slane %v2163, 7
    %v4048 = vrot.slane %v2300, 6
    %v4051 = vrot.slane %v2437, 5
    %v4054 = vrot.slane %v2572, 4
    %v4057 = vrot.slane %v2707, 3
    %v4060 = vrot.slane %v2844, 2
    %v4063 = vrot.slane %v2981, 1
    %v4066 = vrot.slane %v3247, 7
    %v4069 = vrot.slane %v3380, 6
    %v4072 = vrot.slane %v3513, 5
    %v4075 = vrot.slane %v3645, 4
    %v4078 = vrot.slane %v3777, 3
    %v4081 = vrot.slane %v3910, 2
    %v4084 = vrot.slane %v4043, 1
    %v4086 = vsel %vm147, %v2027, %v4045
    %v4087 = vsel %vm45, %v4086, %v4048
    %v4088 = vsel %vm2000, %v4087, %v4051
    %vm4089 = vcmask 1043456
    %v4090 = vsel %vm4089, %v4088, %v4054
    %vm4091 = vcmask 1044480
    %v4092 = vsel %vm4091, %v4090, %v4057
    %vm4093 = vcmask 1045504
    %v4094 = vsel %vm4093, %v4092, %v4060
    %v4095 = vsel %vm171, %v4094, %v4063
    %v4096 = vsel %vm147, %v3115, %v4066
    %v4097 = vsel %vm45, %v4096, %v4069
    %v4098 = vsel %vm2000, %v4097, %v4072
    %v4099 = vsel %vm4089, %v4098, %v4075
    %v4100 = vsel %vm4091, %v4099, %v4078
    %v4101 = vsel %vm4093, %v4100, %v4081
    %v4102 = vsel %vm171, %v4101, %v4084
    %v4103 = vrot.slane %v4043, 2
    %v4105 = vrot.slane %v3910, 1
    %v4107 = vrot.slane %v3645, 7
    %v4109 = vrot.slane %v3513, 6
    %v4111 = vrot.slane %v3380, 5
    %v4113 = vrot.slane %v3247, 4
    %v4116 = vrot.slane %v3115, 3
    %v4118 = vrot.slane %v2981, 2
    %v4120 = vrot.slane %v2844, 1
    %v4122 = vrot.slane %v2572, 7
    %v4124 = vrot.slane %v2437, 6
    %v4126 = vrot.slane %v2300, 5
    %v4128 = vrot.slane %v2163, 4
    %v4131 = vrot.slane %v2027, 3
    %v4133 = vsel %vm147, %v4103, %v4105
    %v4134 = vsel %vm45, %v4133, %v3777
    %v4135 = vsel %vm2000, %v4134, %v4107
    %v4136 = vsel %vm4089, %v4135, %v4109
    %v4137 = vsel %vm4091, %v4136, %v4111
    %v4138 = vsel %vm4093, %v4137, %v4113
    %v4139 = vsel %vm171, %v4138, %v4116
    %v4140 = vsel %vm147, %v4118, %v4120
    %v4141 = vsel %vm45, %v4140, %v2707
    %v4142 = vsel %vm2000, %v4141, %v4122
    %v4143 = vsel %vm4089, %v4142, %v4124
    %v4144 = vsel %vm4091, %v4143, %v4126
    %v4145 = vsel %vm4093, %v4144, %v4128
    %v4146 = vsel %vm171, %v4145, %v4131
    %4149 = vrot.lane.b32.xlu0 %v4095, 96
    %v4150 = vpop.permute.xlu0 %4149
    %4151 = vrot.lane.b32.xlu0 %v4102, 96
    %v4152 = vpop.permute.xlu0 %4151
    %v4155 = vsel %vm241, %v4150, %v4139
    %v4156 = vsel %vm241, %v4152, %v4146
    %v4157 = vrot.slane %v2027, 1
    %v4159 = vrot.slane %v2300, 7
    %v4161 = vrot.slane %v2572, 5
    %v4163 = vrot.slane %v2707, 4
    %v4165 = vrot.slane %v2844, 3
    %v4167 = vrot.slane %v3115, 1
    %v4169 = vrot.slane %v3380, 7
    %v4171 = vrot.slane %v3645, 5
    %v4173 = vrot.slane %v3777, 4
    %v4175 = vrot.slane %v3910, 3
    %v4177 = vsel %vm147, %v4157, %v2163
    %v4178 = vsel %vm45, %v4177, %v4159
    %v4179 = vsel %vm2000, %v4178, %v4124
    %v4180 = vsel %vm4089, %v4179, %v4161
    %v4181 = vsel %vm4091, %v4180, %v4163
    %v4182 = vsel %vm4093, %v4181, %v4165
    %v4183 = vsel %vm171, %v4182, %v4118
    %v4184 = vsel %vm147, %v4167, %v3247
    %v4185 = vsel %vm45, %v4184, %v4169
    %v4186 = vsel %vm2000, %v4185, %v4109
    %v4187 = vsel %vm4089, %v4186, %v4171
    %v4188 = vsel %vm4091, %v4187, %v4173
    %v4189 = vsel %vm4093, %v4188, %v4175
    %v4190 = vsel %vm171, %v4189, %v4103
    %v4191 = vrot.slane %v4043, 3
    %v4193 = vrot.slane %v3777, 1
    %v4195 = vrot.slane %v3513, 7
    %v4197 = vrot.slane %v3247, 5
    %v4199 = vrot.slane %v3115, 4
    %v4201 = vrot.slane %v2981, 3
    %v4203 = vrot.slane %v2707, 1
    %v4205 = vrot.slane %v2437, 7
    %v4207 = vrot.slane %v2163, 5
    %v4209 = vrot.slane %v2027, 4
    %v4211 = vsel %vm147, %v4191, %v4081
    %v4212 = vsel %vm45, %v4211, %v4193
    %v4213 = vsel %vm2000, %v4212, %v3645
    %v4214 = vsel %vm4089, %v4213, %v4195
    %v4215 = vsel %vm4091, %v4214, %v4069
    %v4216 = vsel %vm4093, %v4215, %v4197
    %v4217 = vsel %vm171, %v4216, %v4199
    %v4218 = vsel %vm147, %v4201, %v4060
    %v4219 = vsel %vm45, %v4218, %v4203
    %v4220 = vsel %vm2000, %v4219, %v2572
    %v4221 = vsel %vm4089, %v4220, %v4205
    %v4222 = vsel %vm4091, %v4221, %v4048
    %v4223 = vsel %vm4093, %v4222, %v4207
    %v4224 = vsel %vm171, %v4223, %v4209
    %4227 = vrot.lane.b32.xlu0 %v4183, 96
    %v4228 = vpop.permute.xlu0 %4227
    %4229 = vrot.lane.b32.xlu0 %v4190, 96
    %v4230 = vpop.permute.xlu0 %4229
    %v4233 = vsel %vm241, %v4228, %v4217
    %v4234 = vsel %vm241, %v4230, %v4224
    %4235 = vst.msk [vmem:[#allocation2] sm:$0xff] %vm246, %v4155
    %4236 = vst.msk [vmem:[#allocation2 + $0x8] sm:$0xff] %vm246, %v4156
    %4237 = vst.msk [vmem:[#allocation2 + $0x10] sm:$0xff] %vm246, %v4233
    %4238 = vst.msk [vmem:[#allocation2 + $0x18] sm:$0xff] %vm246, %v4234
    // Predicated region
    $region38: #{cbhg_forward.1} parent=1 // pred_check
      _
    $region39: #{cbhg_forward.1} parent=1 // pred_check_branch
      %4240 = sbr.rel (0) target = $region41
    $region40: #{cbhg_forward.1} parent=1 // pred_region
      %s4242 = ssub.s32 512, 512
      %4243 = vsyncadd [#allocation3], %s4242
      %s4244 = sshll.u32 [#allocation2], 4
      %s4245 = int_to_ptr.vmem [resolvable:$true] %s4244
      %4250 = dma.vmem_to_hbm [thread:$0]  %s4245, 512, %s9, [#allocation3], 128, 128, 8
    $region41: #{cbhg_forward.1} parent=1 // pred_fallthru
      _
    // Predicated region
    $region42: #{cbhg_forward.1} parent=1 // pred_check
      _
    $region43: #{cbhg_forward.1} parent=1 // pred_check_branch
      %4252 = sbr.rel (0) target = $region45
    $region44: #{cbhg_forward.1} parent=1 // pred_region
      %4253 = dma.done [#allocation3], 512
    $region45: #{cbhg_forward.1} parent=1 // pred_fallthru
      _
    %4254 = vsyncpa [#allocation3], 1

</llo_original>
